<compile_context>
chip_gen: v7x
topology: tpu7x:2x2x1
jax: 0.10.0
libtpu: 0.0.40
codegen_flags: <defaults>
</compile_context>

<pallas_src>
import functools
import math

import jax
import jax.numpy as jnp
from jax import lax
from jax.experimental import pallas as pl
from jax.experimental.pallas import tpu as pltpu

_LN_EPS = 1e-5  # torch.nn.LayerNorm default
_F32 = jnp.float32
_BF16 = jnp.bfloat16


def _pad_to_128(n: int) -> int:
    return ((n + 127) // 128) * 128


def _nbytes(a) -> int:
    return int(a.size) * a.dtype.itemsize


def _vmem_limit(nbytes: int) -> int:
    # Explicit scoped-VMEM budget: 4x the static footprint with a 16 MiB floor,
    # capped at 48 MiB so the request is valid on v5e/v6e (128 MiB) and v7x (64 MiB).
    return int(min(48 * 1024 * 1024, max(16 * 1024 * 1024, 4 * int(nbytes))))


# --------------------------- in-kernel helpers ---------------------------

def _layer_norm(z, gamma, beta, eps):
    mu = jnp.mean(z, axis=-1, keepdims=True)
    var = jnp.mean((z - mu) ** 2, axis=-1, keepdims=True)
    return (z - mu) * lax.rsqrt(var + eps) * gamma + beta


def _multi_head_attention(q_all, k_all, v_all, out_scr, nhead):
    """q_all: (Sq, D) f32 (scale already folded into Wq); k_all/v_all: (Sk, D) f32.
    Each head's output is stored directly at its lane offset of `out_scr` (no concat)."""
    d_model = q_all.shape[-1]
    d_head = d_model // nhead
    for h in range(nhead):
        sl = slice(h * d_head, (h + 1) * d_head)
        qh = q_all[:, sl].astype(_BF16)
        kh = k_all[:, sl].astype(_BF16)
        vh = v_all[:, sl].astype(_BF16)
        s = lax.dot_general(qh, kh, (((1,), (1,)), ((), ())),
                            preferred_element_type=_F32)              # (Sq, Sk)
        m = jnp.max(s, axis=-1, keepdims=True)
        p = jnp.exp(s - m)
        p = p * pl.reciprocal(jnp.sum(p, axis=-1, keepdims=True), approx=True)
        out_scr[:, sl] = jnp.dot(p.astype(_BF16), vh, preferred_element_type=_F32)
    return out_scr[...]


# ----------------------------- fused kernels -----------------------------

def _encoder_layer_kernel(x_ref, wqkv_ref, bqkv_ref, wo_ref, w1_ref, b1_ref, w2_ref,
                          vec_ref, o_ref, attn_scr, *, nhead, eps):
    """Per-batch fused encoder layer: LN2(z + FFN(z)),  z = LN1(x + MHA(x)).
    vec rows: 0=bo, 1=ln1_g, 2=ln1_b, 3=b2, 4=ln2_g, 5=ln2_b."""
    x_bf = x_ref[0]                                    # (S, D) bf16
    x = x_bf.astype(_F32)                              # residual in f32
    vec = vec_ref[...]                                 # (6, D) f32
    d_model = x.shape[-1]

    # fused QKV projection (scale folded into the Wq / bq columns at init)
    qkv = jnp.dot(x_bf, wqkv_ref[...], preferred_element_type=_F32) + bqkv_ref[...]
    attn = _multi_head_attention(qkv[:, :d_model], qkv[:, d_model:2 * d_model],
                                 qkv[:, 2 * d_model:], attn_scr, nhead)
    attn = jnp.dot(attn.astype(_BF16), wo_ref[...], preferred_element_type=_F32) + vec[0:1]
    z = _layer_norm(x + attn, vec[1:2], vec[2:3], eps)

    h1 = jnp.dot(z.astype(_BF16), w1_ref[...], preferred_element_type=_F32) + b1_ref[...]
    h1 = jnp.maximum(h1, 0.0)
    ff = jnp.dot(h1.astype(_BF16), w2_ref[...], preferred_element_type=_F32) + vec[3:4]
    y = _layer_norm(z + ff, vec[4:5], vec[5:6], eps)
    o_ref[0] = y.astype(o_ref.dtype)


def _decoder_layer_kernel(y_ref, mem_ref,
                          swqkv_ref, sbqkv_ref, swo_ref,
                          cwq_ref, cwkv_ref, cbkv_ref, cwo_ref,
                          w1_ref, b1_ref, w2_ref, vec_ref,
                          o_ref, attn_scr, *, nhead, eps):
    """Per-batch fused decoder layer: self-attn+LN1, cross-attn+LN2, FFN+LN3.
    vec rows: 0=self bo, 1=ln1_g, 2=ln1_b, 3=cross bq (pre-scaled), 4=cross bo,
              5=ln2_g, 6=ln2_b, 7=b2, 8=ln3_g, 9=ln3_b."""
    y_bf = y_ref[0]                                    # (Sd, D) bf16
    y = y_bf.astype(_F32)
    mem_bf = mem_ref[0]                                # (Se, D) bf16 encoder memory
    vec = vec_ref[...]                                 # (10, D) f32
    d_model = y.shape[-1]

    # --- decoder self-attention ---
    # TODO(synk): causal mask / positional encodings unspecified by the reference; omitted.
    qkv = jnp.dot(y_bf, swqkv_ref[...], preferred_element_type=_F32) + sbqkv_ref[...]
    attn = _multi_head_attention(qkv[:, :d_model], qkv[:, d_model:2 * d_model],
                                 qkv[:, 2 * d_model:], attn_scr, nhead)
    attn = jnp.dot(attn.astype(_BF16), swo_ref[...], preferred_element_type=_F32) + vec[0:1]
    y1 = _layer_norm(y + attn, vec[1:2], vec[2:3], eps)

    # --- cross-attention (queries from decoder state, K/V from encoder memory) ---
    q = jnp.dot(y1.astype(_BF16), cwq_ref[...], preferred_element_type=_F32) + vec[3:4]
    kv = jnp.dot(mem_bf, cwkv_ref[...], preferred_element_type=_F32) + cbkv_ref[...]
    attn = _multi_head_attention(q, kv[:, :d_model], kv[:, d_model:], attn_scr, nhead)
    attn = jnp.dot(attn.astype(_BF16), cwo_ref[...], preferred_element_type=_F32) + vec[4:5]
    y2 = _layer_norm(y1 + attn, vec[5:6], vec[6:7], eps)

    # --- FFN ---
    h1 = jnp.dot(y2.astype(_BF16), w1_ref[...], preferred_element_type=_F32) + b1_ref[...]
    h1 = jnp.maximum(h1, 0.0)
    ff = jnp.dot(h1.astype(_BF16), w2_ref[...], preferred_element_type=_F32) + vec[7:8]
    out = _layer_norm(y2 + ff, vec[8:9], vec[9:10], eps)
    o_ref[0] = out.astype(o_ref.dtype)


def _head_softmax_kernel(x_ref, w_ref, b_ref, o_ref, *, num_classes):
    """Row-tile fused: softmax(x @ W + b); class dim lane-padded, padded cols masked."""
    logits = jnp.dot(x_ref[...], w_ref[...], preferred_element_type=_F32) + b_ref[...]
    col = lax.broadcasted_iota(jnp.int32, logits.shape, 1)
    logits = jnp.where(col < num_classes, logits, -jnp.inf)
    m = jnp.max(logits, axis=-1, keepdims=True)
    e = jnp.exp(logits - m)
    o_ref[...] = e * pl.reciprocal(jnp.sum(e, axis=-1, keepdims=True), approx=True)


# ----------------------------- wrappers -----------------------------

def encoder_layer(x, p, nhead):
    """x: [B, S, D] bf16 -> [B, S, D] bf16 (fully fused encoder layer, grid over batch)."""
    B, S, D = x.shape
    F = p["w1"].shape[1]
    wkeys = ("wqkv", "bqkv", "wo", "w1", "b1", "w2", "vec")
    weight_bytes = sum(_nbytes(p[k]) for k in wkeys)
    act_bytes = 4 * S * D * 2 + S * D * 4 + S * F * 4 + S * 3 * D * 4 + 2 * S * D * 4
    flops = B * (2 * S * D * 3 * D + 4 * S * S * D + 2 * S * D * D + 4 * S * D * F)
    transc = B * (nhead * S * S + 4 * S)

    wspec = lambda shape: pl.BlockSpec(shape, lambda b: (0, 0))
    return pl.pallas_call(
        functools.partial(_encoder_layer_kernel, nhead=nhead, eps=_LN_EPS),
        out_shape=jax.ShapeDtypeStruct((B, S, D), _BF16),
        grid=(B,),
        in_specs=[
            pl.BlockSpec((1, S, D), lambda b: (b, 0, 0)),     # x
            wspec((D, 3 * D)), wspec((1, 3 * D)),             # wqkv, bqkv
            wspec((D, D)),                                    # wo
            wspec((D, F)), wspec((1, F)), wspec((F, D)),      # w1, b1, w2
            wspec((6, D)),                                    # packed bo/ln1/b2/ln2
        ],
        out_specs=pl.BlockSpec((1, S, D), lambda b: (b, 0, 0)),
        scratch_shapes=[pltpu.VMEM((S, D), jnp.float32)],
        compiler_params=pltpu.CompilerParams(
            dimension_semantics=("parallel",),
            vmem_limit_bytes=_vmem_limit(weight_bytes + act_bytes)),
        cost_estimate=pl.CostEstimate(flops=int(flops), transcendentals=int(transc),
                                      bytes_accessed=int(4 * B * S * D + weight_bytes)),
    )(x, p["wqkv"], p["bqkv"], p["wo"], p["w1"], p["b1"], p["w2"], p["vec"])


def decoder_layer(y, mem, p, nhead):
    """y: [B, Sd, D] bf16, mem: [B, Se, D] bf16 -> [B, Sd, D] bf16 (fused decoder layer)."""
    B, Sd, D = y.shape
    Se = mem.shape[1]
    F = p["w1"].shape[1]
    wkeys = ("swqkv", "sbqkv", "swo", "cwq", "cwkv", "cbkv", "cwo", "w1", "b1", "w2", "vec")
    weight_bytes = sum(_nbytes(p[k]) for k in wkeys)
    act_bytes = (4 * Sd * D * 2 + 2 * Se * D * 2 + Sd * D * 4 + Sd * F * 4
                 + Sd * 3 * D * 4 + Se * 2 * D * 4 + 2 * Sd * D * 4)
    flops = B * (2 * Sd * D * 3 * D + 4 * Sd * Sd * D + 2 * Sd * D * D
                 + 2 * Sd * D * D + 2 * Se * D * 2 * D + 4 * Sd * Se * D + 2 * Sd * D * D
                 + 4 * Sd * D * F)
    transc = B * (nhead * (Sd * Sd + Sd * Se) + 6 * Sd)

    wspec = lambda shape: pl.BlockSpec(shape, lambda b: (0, 0))
    return pl.pallas_call(
        functools.partial(_decoder_layer_kernel, nhead=nhead, eps=_LN_EPS),
        out_shape=jax.ShapeDtypeStruct((B, Sd, D), _BF16),
        grid=(B,),
        in_specs=[
            pl.BlockSpec((1, Sd, D), lambda b: (b, 0, 0)),    # y
            pl.BlockSpec((1, Se, D), lambda b: (b, 0, 0)),    # encoder memory
            wspec((D, 3 * D)), wspec((1, 3 * D)), wspec((D, D)),     # self attn
            wspec((D, D)), wspec((D, 2 * D)), wspec((1, 2 * D)), wspec((D, D)),  # cross attn
            wspec((D, F)), wspec((1, F)), wspec((F, D)),      # FFN
            wspec((10, D)),                                   # packed biases / LN params
        ],
        out_specs=pl.BlockSpec((1, Sd, D), lambda b: (b, 0, 0)),
        scratch_shapes=[pltpu.VMEM((Sd, D), jnp.float32)],
        compiler_params=pltpu.CompilerParams(
            dimension_semantics=("parallel",),
            vmem_limit_bytes=_vmem_limit(weight_bytes + act_bytes)),
        cost_estimate=pl.CostEstimate(flops=int(flops), transcendentals=int(transc),
                                      bytes_accessed=int(2 * B * (2 * Sd + Se) * D + weight_bytes)),
    )(y, mem, p["swqkv"], p["sbqkv"], p["swo"],
      p["cwq"], p["cwkv"], p["cbkv"], p["cwo"],
      p["w1"], p["b1"], p["w2"], p["vec"])


def output_head(y, w_pad, b_pad, num_classes):
    """y: [B, S, D] bf16 -> probabilities [B, S, num_classes] f32; class dim padded to 128."""
    B, S, D = y.shape
    M = B * S
    Cp = w_pad.shape[1]
    x2 = y.reshape(M, D)
    tm = M if M <= 512 else 512
    weight_bytes = _nbytes(w_pad) + _nbytes(b_pad)
    footprint = weight_bytes + 2 * (tm * D * 2 + tm * Cp * 4) + tm * Cp * 4
    out = pl.pallas_call(
        functools.partial(_head_softmax_kernel, num_classes=num_classes),
        out_shape=jax.ShapeDtypeStruct((M, Cp), _F32),
        grid=(pl.cdiv(M, tm),),
        in_specs=[
            pl.BlockSpec((tm, D), lambda i: (i, 0)),
            pl.BlockSpec((D, Cp), lambda i: (0, 0)),
            pl.BlockSpec((1, Cp), lambda i: (0, 0)),
        ],
        out_specs=pl.BlockSpec((tm, Cp), lambda i: (i, 0)),
        compiler_params=pltpu.CompilerParams(
            dimension_semantics=("parallel",),
            vmem_limit_bytes=_vmem_limit(footprint)),
        cost_estimate=pl.CostEstimate(flops=int(2 * M * D * Cp), transcendentals=int(M * Cp),
                                      bytes_accessed=int(2 * M * D + 4 * M * Cp + weight_bytes)),
    )(x2, w_pad, b_pad)
    return out[:, :num_classes].reshape(B, S, num_classes)


# ----------------------------- model -----------------------------

def top_former_forward(params, x, u, *, nhead, num_classes):
    z = x.astype(_BF16)
    for lp in params["encoder"]:
        z = encoder_layer(z, lp, nhead)
    y = u.astype(_BF16)
    for lp in params["decoder"]:
        y = decoder_layer(y, z, lp, nhead)
    return output_head(y, params["out_w"], params["out_b"], num_classes)


# ----------------------------- parameter init -----------------------------

def _init_encoder_layer(key, d, d_ff, nhead, wscale=0.02):
    sc = 1.0 / math.sqrt(d // nhead)      # attention scale folded into Wq / bq
    k = jax.random.split(key, 8)
    wq = jax.random.normal(k[0], (d, d), _F32) * wscale * sc
    wkv = jax.random.normal(k[1], (d, 2 * d), _F32) * wscale
    wqkv = jnp.concatenate([wq, wkv], axis=1).astype(_BF16)
    bqkv = (jax.random.normal(k[2], (1, 3 * d), _F32) * wscale).at[:, :d].multiply(sc)
    wo = (jax.random.normal(k[3], (d, d), _F32) * wscale).astype(_BF16)
    w1 = (jax.random.normal(k[4], (d, d_ff), _F32) * wscale).astype(_BF16)
    b1 = jax.random.normal(k[5], (1, d_ff), _F32) * wscale
    w2 = (jax.random.normal(k[6], (d_ff, d), _F32) * wscale).astype(_BF16)
    bvec = jax.random.normal(k[7], (2, d), _F32) * wscale        # bo, b2
    ones = jnp.ones((d,), _F32)
    zeros = jnp.zeros((d,), _F32)
    vec = jnp.stack([bvec[0], ones, zeros, bvec[1], ones, zeros])
    return dict(wqkv=wqkv, bqkv=bqkv, wo=wo, w1=w1, b1=b1, w2=w2, vec=vec)


def _init_decoder_layer(key, d, d_ff, nhead, wscale=0.02):
    sc = 1.0 / math.sqrt(d // nhead)
    k = jax.random.split(key, 12)
    swq = jax.random.normal(k[0], (d, d), _F32) * wscale * sc
    swkv = jax.random.normal(k[1], (d, 2 * d), _F32) * wscale
    swqkv = jnp.concatenate([swq, swkv], axis=1).astype(_BF16)
    sbqkv = (jax.random.normal(k[2], (1, 3 * d), _F32) * wscale).at[:, :d].multiply(sc)
    swo = (jax.random.normal(k[3], (d, d), _F32) * wscale).astype(_BF16)
    cwq = (jax.random.normal(k[4], (d, d), _F32) * wscale * sc).astype(_BF16)
    cwkv = (jax.random.normal(k[5], (d, 2 * d), _F32) * wscale).astype(_BF16)
    cbkv = jax.random.normal(k[6], (1, 2 * d), _F32) * wscale
    cwo = (jax.random.normal(k[7], (d, d), _F32) * wscale).astype(_BF16)
    w1 = (jax.random.normal(k[8], (d, d_ff), _F32) * wscale).astype(_BF16)
    b1 = jax.random.normal(k[9], (1, d_ff), _F32) * wscale
    w2 = (jax.random.normal(k[10], (d_ff, d), _F32) * wscale).astype(_BF16)
    bvec = jax.random.normal(k[11], (4, d), _F32) * wscale       # s_bo, c_bq, c_bo, b2
    ones = jnp.ones((d,), _F32)
    zeros = jnp.zeros((d,), _F32)
    vec = jnp.stack([bvec[0], ones, zeros,
                     bvec[1] * sc, bvec[2], ones, zeros,
                     bvec[3], ones, zeros])
    return dict(swqkv=swqkv, sbqkv=sbqkv, swo=swo, cwq=cwq, cwkv=cwkv, cbkv=cbkv, cwo=cwo,
                w1=w1, b1=b1, w2=w2, vec=vec)


def init_params(key, num_layers, d_model, nhead, num_classes, d_ff):
    params = {"encoder": [], "decoder": []}
    for _ in range(num_layers):
        key, sub = jax.random.split(key)
        params["encoder"].append(_init_encoder_layer(sub, d_model, d_ff, nhead))
    for _ in range(num_layers):
        key, sub = jax.random.split(key)
        params["decoder"].append(_init_decoder_layer(sub, d_model, d_ff, nhead))
    key, kw, kb = jax.random.split(key, 3)
    cp = _pad_to_128(num_classes)
    ow = jax.random.normal(kw, (d_model, num_classes), _F32) * 0.05
    params["out_w"] = jnp.zeros((d_model, cp), _F32).at[:, :num_classes].set(ow).astype(_BF16)
    ob = jax.random.normal(kb, (1, num_classes), _F32) * 0.02
    params["out_b"] = jnp.zeros((1, cp), _F32).at[:, :num_classes].set(ob)
    return params


# ----------------------------- pure-JAX reference (same math, f32) -----------------------------

def _ref_ln(z, g, b):
    mu = jnp.mean(z, -1, keepdims=True)
    var = jnp.mean((z - mu) ** 2, -1, keepdims=True)
    return (z - mu) / jnp.sqrt(var + _LN_EPS) * g + b


def _ref_mha(q, k, v, nhead):
    d = q.shape[-1]
    dh = d // nhead
    outs = []
    for h in range(nhead):
        sl = slice(h * dh, (h + 1) * dh)
        s = jnp.einsum("bqd,bkd->bqk", q[..., sl], k[..., sl])
        p = jax.nn.softmax(s, axis=-1)
        outs.append(jnp.einsum("bqk,bkd->bqd", p, v[..., sl]))
    return jnp.concatenate(outs, -1)


def ref_forward(params, x, u, *, nhead, num_classes):
    f = lambda a: a.astype(_F32)
    z = x
    for p in params["encoder"]:
        vec = p["vec"]
        d = z.shape[-1]
        qkv = z @ f(p["wqkv"]) + p["bqkv"]
        a = _ref_mha(qkv[..., :d], qkv[..., d:2 * d], qkv[..., 2 * d:], nhead) @ f(p["wo"]) + vec[0]
        z1 = _ref_ln(z + a, vec[1], vec[2])
        h = jax.nn.relu(z1 @ f(p["w1"]) + p["b1"])
        z = _ref_ln(z1 + h @ f(p["w2"]) + vec[3], vec[4], vec[5])
    y = u
    for p in params["decoder"]:
        vec = p["vec"]
        d = y.shape[-1]
        qkv = y @ f(p["swqkv"]) + p["sbqkv"]
        a = _ref_mha(qkv[..., :d], qkv[..., d:2 * d], qkv[..., 2 * d:], nhead) @ f(p["swo"]) + vec[0]
        y1 = _ref_ln(y + a, vec[1], vec[2])
        q = y1 @ f(p["cwq"]) + vec[3]
        kv = z @ f(p["cwkv"]) + p["cbkv"]
        a = _ref_mha(q, kv[..., :d], kv[..., d:], nhead) @ f(p["cwo"]) + vec[4]
        y2 = _ref_ln(y1 + a, vec[5], vec[6])
        h = jax.nn.relu(y2 @ f(p["w1"]) + p["b1"])
        y = _ref_ln(y2 + h @ f(p["w2"]) + vec[7], vec[8], vec[9])
    logits = y @ f(params["out_w"])[:, :num_classes] + params["out_b"][:, :num_classes]
    return jax.nn.softmax(logits, -1)


# ----------------------------- main -----------------------------

if __name__ == "__main__":
    num_layers = 2
    d_model = 32
    nhead = 4
    num_classes = 10
    d_ff = 2 * d_model
    B, S_enc, S_dec = 2, 8, 8

    key = jax.random.PRNGKey(0)
    kp, kx, ku = jax.random.split(key, 3)
    params = init_params(kp, num_layers, d_model, nhead, num_classes, d_ff)

    x = jax.random.normal(kx, (B, S_enc, d_model), _F32)   # encoder input
    u = jax.random.normal(ku, (B, S_dec, d_model), _F32)   # decoder input

    fwd = jax.jit(functools.partial(top_former_forward, nhead=nhead, num_classes=num_classes))
    p = jax.block_until_ready(fwd(params, x, u))

    assert p.shape == (B, S_dec, num_classes)
    assert bool(jnp.all(jnp.isfinite(p)))
    # softmax rows sum to 1 (approx reciprocal -> loose tolerance)
    assert bool(jnp.allclose(jnp.sum(p, axis=-1), 1.0, atol=5e-3))
    # compare against the pure-JAX f32 reference (kernel uses bf16 weights/activations)
    x_r = x.astype(_BF16).astype(_F32)
    u_r = u.astype(_BF16).astype(_F32)
    p_ref = ref_forward(params, x_r, u_r, nhead=nhead, num_classes=num_classes)
    assert bool(jnp.allclose(p, p_ref, atol=5e-2))
    print("KERNEL_OK")
</pallas_src>

<mosaic_0001>
module attributes {stable_mosaic.version = 11 : i64} {
  func.func @_encoder_layer_kernel(%arg0: i32, %arg1: memref<1x8x32xbf16, #tpu.memory_space<vmem>>, %arg2: memref<32x96xbf16, #tpu.memory_space<vmem>>, %arg3: memref<1x96xf32, #tpu.memory_space<vmem>>, %arg4: memref<32x32xbf16, #tpu.memory_space<vmem>>, %arg5: memref<32x64xbf16, #tpu.memory_space<vmem>>, %arg6: memref<1x64xf32, #tpu.memory_space<vmem>>, %arg7: memref<64x32xbf16, #tpu.memory_space<vmem>>, %arg8: memref<6x32xf32, #tpu.memory_space<vmem>>, %arg9: memref<1x8x32xbf16, #tpu.memory_space<vmem>>, %arg10: memref<8x32xf32, #tpu.memory_space<vmem>>) attributes {dimension_semantics = [#tpu.dimension_semantics<parallel>], iteration_bounds = array<i64: 2>, scalar_prefetch = 0 : i64, scratch_operands = 1 : i64, tpu.core_type = #tpu.core_type<tc>, window_params = [{transform_indices = @transform_0, window_bounds = array<i64: 1, 8, 32>}, {pipeline_mode = #tpu.pipeline_mode<synchronous>, transform_indices = @transform_1, window_bounds = array<i64: 32, 96>}, {pipeline_mode = #tpu.pipeline_mode<synchronous>, transform_indices = @transform_2, window_bounds = array<i64: 1, 96>}, {pipeline_mode = #tpu.pipeline_mode<synchronous>, transform_indices = @transform_3, window_bounds = array<i64: 32, 32>}, {pipeline_mode = #tpu.pipeline_mode<synchronous>, transform_indices = @transform_4, window_bounds = array<i64: 32, 64>}, {pipeline_mode = #tpu.pipeline_mode<synchronous>, transform_indices = @transform_5, window_bounds = array<i64: 1, 64>}, {pipeline_mode = #tpu.pipeline_mode<synchronous>, transform_indices = @transform_6, window_bounds = array<i64: 64, 32>}, {pipeline_mode = #tpu.pipeline_mode<synchronous>, transform_indices = @transform_7, window_bounds = array<i64: 6, 32>}, {transform_indices = @transform_8, window_bounds = array<i64: 1, 8, 32>}]} {
    %c0 = arith.constant 0 : index
    %c0_0 = arith.constant 0 : index
    %c0_1 = arith.constant 0 : index
    %0 = vector.load %arg1[%c0, %c0_0, %c0_1] : memref<1x8x32xbf16, #tpu.memory_space<vmem>>, vector<1x8x32xbf16>
    %1 = vector.shape_cast %0 : vector<1x8x32xbf16> to vector<8x32xbf16>
    %2 = arith.extf %1 : vector<8x32xbf16> to vector<8x32xf32>
    %c0_2 = arith.constant 0 : index
    %c0_3 = arith.constant 0 : index
    %3 = vector.load %arg8[%c0_2, %c0_3] : memref<6x32xf32, #tpu.memory_space<vmem>>, vector<6x32xf32>
    %c0_4 = arith.constant 0 : index
    %c0_5 = arith.constant 0 : index
    %4 = vector.load %arg2[%c0_4, %c0_5] : memref<32x96xbf16, #tpu.memory_space<vmem>>, vector<32x96xbf16>
    %cst = arith.constant dense<0.000000e+00> : vector<8x96xf32>
    %5 = tpu.matmul %1, %4, %cst {dimension_numbers = #tpu.dot_dimension_numbers<[1], [0], [0], [1], [0, 0, 1, 1], [], []>} : vector<8x32xbf16>, vector<32x96xbf16>, vector<8x96xf32> -> vector<8x96xf32>
    %c0_6 = arith.constant 0 : index
    %c0_7 = arith.constant 0 : index
    %6 = vector.load %arg3[%c0_6, %c0_7] : memref<1x96xf32, #tpu.memory_space<vmem>>, vector<1x96xf32>
    %7 = vector.broadcast %6 : vector<1x96xf32> to vector<8x96xf32>
    %8 = arith.addf %5, %7 : vector<8x96xf32>
    %9 = vector.extract_strided_slice %8 {offsets = [0, 0], sizes = [8, 32], strides = [1, 1]} : vector<8x96xf32> to vector<8x32xf32>
    %10 = vector.extract_strided_slice %8 {offsets = [0, 32], sizes = [8, 32], strides = [1, 1]} : vector<8x96xf32> to vector<8x32xf32>
    %11 = vector.extract_strided_slice %8 {offsets = [0, 64], sizes = [8, 32], strides = [1, 1]} : vector<8x96xf32> to vector<8x32xf32>
    %12 = vector.extract_strided_slice %9 {offsets = [0, 0], sizes = [8, 8], strides = [1, 1]} : vector<8x32xf32> to vector<8x8xf32>
    %13 = arith.truncf %12 : vector<8x8xf32> to vector<8x8xbf16>
    %14 = vector.extract_strided_slice %10 {offsets = [0, 0], sizes = [8, 8], strides = [1, 1]} : vector<8x32xf32> to vector<8x8xf32>
    %15 = arith.truncf %14 : vector<8x8xf32> to vector<8x8xbf16>
    %16 = vector.extract_strided_slice %11 {offsets = [0, 0], sizes = [8, 8], strides = [1, 1]} : vector<8x32xf32> to vector<8x8xf32>
    %17 = arith.truncf %16 : vector<8x8xf32> to vector<8x8xbf16>
    %cst_8 = arith.constant dense<0.000000e+00> : vector<8x8xf32>
    %18 = tpu.matmul %13, %15, %cst_8 {dimension_numbers = #tpu.dot_dimension_numbers<[1], [1], [0], [0], [0, 0, 1, 0], [], []>} : vector<8x8xbf16>, vector<8x8xbf16>, vector<8x8xf32> -> vector<8x8xf32>
    %cst_9 = arith.constant dense<0xFF800000> : vector<8xf32>
    %19 = vector.multi_reduction <maximumf>, %18, %cst_9 [1] : vector<8x8xf32> to vector<8xf32>
    %20 = vector.shape_cast %19 : vector<8xf32> to vector<8x1xf32>
    %21 = vector.broadcast %20 : vector<8x1xf32> to vector<8x8xf32>
    %22 = arith.subf %18, %21 : vector<8x8xf32>
    %23 = math.exp %22 : vector<8x8xf32>
    %cst_10 = arith.constant dense<0.000000e+00> : vector<8xf32>
    %24 = vector.multi_reduction <add>, %23, %cst_10 [1] : vector<8x8xf32> to vector<8xf32>
    %25 = vector.shape_cast %24 : vector<8xf32> to vector<8x1xf32>
    %26 = tpu.reciprocal %25 {approx = true} : vector<8x1xf32> -> vector<8x1xf32>
    %27 = vector.broadcast %26 : vector<8x1xf32> to vector<8x8xf32>
    %28 = arith.mulf %23, %27 : vector<8x8xf32>
    %29 = arith.truncf %28 : vector<8x8xf32> to vector<8x8xbf16>
    %cst_11 = arith.constant dense<0.000000e+00> : vector<8x8xf32>
    %30 = tpu.matmul %29, %17, %cst_11 {dimension_numbers = #tpu.dot_dimension_numbers<[1], [0], [0], [1], [0, 0, 1, 1], [], []>} : vector<8x8xbf16>, vector<8x8xbf16>, vector<8x8xf32> -> vector<8x8xf32>
    %c0_12 = arith.constant 0 : index
    %c0_13 = arith.constant 0 : index
    %31 = vector.load %arg10[%c0_12, %c0_13] : memref<8x32xf32, #tpu.memory_space<vmem>>, vector<8x8xf32>
    tpu.vector_store %arg10[%c0_12, %c0_13], %30 {strides = array<i32>} : memref<8x32xf32, #tpu.memory_space<vmem>>, vector<8x8xf32>,
    %32 = vector.extract_strided_slice %9 {offsets = [0, 8], sizes = [8, 8], strides = [1, 1]} : vector<8x32xf32> to vector<8x8xf32>
    %33 = arith.truncf %32 : vector<8x8xf32> to vector<8x8xbf16>
    %34 = vector.extract_strided_slice %10 {offsets = [0, 8], sizes = [8, 8], strides = [1, 1]} : vector<8x32xf32> to vector<8x8xf32>
    %35 = arith.truncf %34 : vector<8x8xf32> to vector<8x8xbf16>
    %36 = vector.extract_strided_slice %11 {offsets = [0, 8], sizes = [8, 8], strides = [1, 1]} : vector<8x32xf32> to vector<8x8xf32>
    %37 = arith.truncf %36 : vector<8x8xf32> to vector<8x8xbf16>
    %cst_14 = arith.constant dense<0.000000e+00> : vector<8x8xf32>
    %38 = tpu.matmul %33, %35, %cst_14 {dimension_numbers = #tpu.dot_dimension_numbers<[1], [1], [0], [0], [0, 0, 1, 0], [], []>} : vector<8x8xbf16>, vector<8x8xbf16>, vector<8x8xf32> -> vector<8x8xf32>
    %cst_15 = arith.constant dense<0xFF800000> : vector<8xf32>
    %39 = vector.multi_reduction <maximumf>, %38, %cst_15 [1] : vector<8x8xf32> to vector<8xf32>
    %40 = vector.shape_cast %39 : vector<8xf32> to vector<8x1xf32>
    %41 = vector.broadcast %40 : vector<8x1xf32> to vector<8x8xf32>
    %42 = arith.subf %38, %41 : vector<8x8xf32>
    %43 = math.exp %42 : vector<8x8xf32>
    %cst_16 = arith.constant dense<0.000000e+00> : vector<8xf32>
    %44 = vector.multi_reduction <add>, %43, %cst_16 [1] : vector<8x8xf32> to vector<8xf32>
    %45 = vector.shape_cast %44 : vector<8xf32> to vector<8x1xf32>
    %46 = tpu.reciprocal %45 {approx = true} : vector<8x1xf32> -> vector<8x1xf32>
    %47 = vector.broadcast %46 : vector<8x1xf32> to vector<8x8xf32>
    %48 = arith.mulf %43, %47 : vector<8x8xf32>
    %49 = arith.truncf %48 : vector<8x8xf32> to vector<8x8xbf16>
    %cst_17 = arith.constant dense<0.000000e+00> : vector<8x8xf32>
    %50 = tpu.matmul %49, %37, %cst_17 {dimension_numbers = #tpu.dot_dimension_numbers<[1], [0], [0], [1], [0, 0, 1, 1], [], []>} : vector<8x8xbf16>, vector<8x8xbf16>, vector<8x8xf32> -> vector<8x8xf32>
    %c0_18 = arith.constant 0 : index
    %c8 = arith.constant 8 : index
    %51 = vector.load %arg10[%c0_18, %c8] : memref<8x32xf32, #tpu.memory_space<vmem>>, vector<8x8xf32>
    tpu.vector_store %arg10[%c0_18, %c8], %50 {strides = array<i32>} : memref<8x32xf32, #tpu.memory_space<vmem>>, vector<8x8xf32>,
    %52 = vector.extract_strided_slice %9 {offsets = [0, 16], sizes = [8, 8], strides = [1, 1]} : vector<8x32xf32> to vector<8x8xf32>
    %53 = arith.truncf %52 : vector<8x8xf32> to vector<8x8xbf16>
    %54 = vector.extract_strided_slice %10 {offsets = [0, 16], sizes = [8, 8], strides = [1, 1]} : vector<8x32xf32> to vector<8x8xf32>
    %55 = arith.truncf %54 : vector<8x8xf32> to vector<8x8xbf16>
    %56 = vector.extract_strided_slice %11 {offsets = [0, 16], sizes = [8, 8], strides = [1, 1]} : vector<8x32xf32> to vector<8x8xf32>
    %57 = arith.truncf %56 : vector<8x8xf32> to vector<8x8xbf16>
    %cst_19 = arith.constant dense<0.000000e+00> : vector<8x8xf32>
    %58 = tpu.matmul %53, %55, %cst_19 {dimension_numbers = #tpu.dot_dimension_numbers<[1], [1], [0], [0], [0, 0, 1, 0], [], []>} : vector<8x8xbf16>, vector<8x8xbf16>, vector<8x8xf32> -> vector<8x8xf32>
    %cst_20 = arith.constant dense<0xFF800000> : vector<8xf32>
    %59 = vector.multi_reduction <maximumf>, %58, %cst_20 [1] : vector<8x8xf32> to vector<8xf32>
    %60 = vector.shape_cast %59 : vector<8xf32> to vector<8x1xf32>
    %61 = vector.broadcast %60 : vector<8x1xf32> to vector<8x8xf32>
    %62 = arith.subf %58, %61 : vector<8x8xf32>
    %63 = math.exp %62 : vector<8x8xf32>
    %cst_21 = arith.constant dense<0.000000e+00> : vector<8xf32>
    %64 = vector.multi_reduction <add>, %63, %cst_21 [1] : vector<8x8xf32> to vector<8xf32>
    %65 = vector.shape_cast %64 : vector<8xf32> to vector<8x1xf32>
    %66 = tpu.reciprocal %65 {approx = true} : vector<8x1xf32> -> vector<8x1xf32>
    %67 = vector.broadcast %66 : vector<8x1xf32> to vector<8x8xf32>
    %68 = arith.mulf %63, %67 : vector<8x8xf32>
    %69 = arith.truncf %68 : vector<8x8xf32> to vector<8x8xbf16>
    %cst_22 = arith.constant dense<0.000000e+00> : vector<8x8xf32>
    %70 = tpu.matmul %69, %57, %cst_22 {dimension_numbers = #tpu.dot_dimension_numbers<[1], [0], [0], [1], [0, 0, 1, 1], [], []>} : vector<8x8xbf16>, vector<8x8xbf16>, vector<8x8xf32> -> vector<8x8xf32>
    %c0_23 = arith.constant 0 : index
    %c16 = arith.constant 16 : index
    %71 = vector.load %arg10[%c0_23, %c16] : memref<8x32xf32, #tpu.memory_space<vmem>>, vector<8x8xf32>
    tpu.vector_store %arg10[%c0_23, %c16], %70 {strides = array<i32>} : memref<8x32xf32, #tpu.memory_space<vmem>>, vector<8x8xf32>,
    %72 = vector.extract_strided_slice %9 {offsets = [0, 24], sizes = [8, 8], strides = [1, 1]} : vector<8x32xf32> to vector<8x8xf32>
    %73 = arith.truncf %72 : vector<8x8xf32> to vector<8x8xbf16>
    %74 = vector.extract_strided_slice %10 {offsets = [0, 24], sizes = [8, 8], strides = [1, 1]} : vector<8x32xf32> to vector<8x8xf32>
    %75 = arith.truncf %74 : vector<8x8xf32> to vector<8x8xbf16>
    %76 = vector.extract_strided_slice %11 {offsets = [0, 24], sizes = [8, 8], strides = [1, 1]} : vector<8x32xf32> to vector<8x8xf32>
    %77 = arith.truncf %76 : vector<8x8xf32> to vector<8x8xbf16>
    %cst_24 = arith.constant dense<0.000000e+00> : vector<8x8xf32>
    %78 = tpu.matmul %73, %75, %cst_24 {dimension_numbers = #tpu.dot_dimension_numbers<[1], [1], [0], [0], [0, 0, 1, 0], [], []>} : vector<8x8xbf16>, vector<8x8xbf16>, vector<8x8xf32> -> vector<8x8xf32>
    %cst_25 = arith.constant dense<0xFF800000> : vector<8xf32>
    %79 = vector.multi_reduction <maximumf>, %78, %cst_25 [1] : vector<8x8xf32> to vector<8xf32>
    %80 = vector.shape_cast %79 : vector<8xf32> to vector<8x1xf32>
    %81 = vector.broadcast %80 : vector<8x1xf32> to vector<8x8xf32>
    %82 = arith.subf %78, %81 : vector<8x8xf32>
    %83 = math.exp %82 : vector<8x8xf32>
    %cst_26 = arith.constant dense<0.000000e+00> : vector<8xf32>
    %84 = vector.multi_reduction <add>, %83, %cst_26 [1] : vector<8x8xf32> to vector<8xf32>
    %85 = vector.shape_cast %84 : vector<8xf32> to vector<8x1xf32>
    %86 = tpu.reciprocal %85 {approx = true} : vector<8x1xf32> -> vector<8x1xf32>
    %87 = vector.broadcast %86 : vector<8x1xf32> to vector<8x8xf32>
    %88 = arith.mulf %83, %87 : vector<8x8xf32>
    %89 = arith.truncf %88 : vector<8x8xf32> to vector<8x8xbf16>
    %cst_27 = arith.constant dense<0.000000e+00> : vector<8x8xf32>
    %90 = tpu.matmul %89, %77, %cst_27 {dimension_numbers = #tpu.dot_dimension_numbers<[1], [0], [0], [1], [0, 0, 1, 1], [], []>} : vector<8x8xbf16>, vector<8x8xbf16>, vector<8x8xf32> -> vector<8x8xf32>
    %c0_28 = arith.constant 0 : index
    %c24 = arith.constant 24 : index
    %91 = vector.load %arg10[%c0_28, %c24] : memref<8x32xf32, #tpu.memory_space<vmem>>, vector<8x8xf32>
    tpu.vector_store %arg10[%c0_28, %c24], %90 {strides = array<i32>} : memref<8x32xf32, #tpu.memory_space<vmem>>, vector<8x8xf32>,
    %c0_29 = arith.constant 0 : index
    %c0_30 = arith.constant 0 : index
    %92 = vector.load %arg10[%c0_29, %c0_30] : memref<8x32xf32, #tpu.memory_space<vmem>>, vector<8x32xf32>
    %93 = arith.truncf %92 : vector<8x32xf32> to vector<8x32xbf16>
    %c0_31 = arith.constant 0 : index
    %c0_32 = arith.constant 0 : index
    %94 = vector.load %arg4[%c0_31, %c0_32] : memref<32x32xbf16, #tpu.memory_space<vmem>>, vector<32x32xbf16>
    %cst_33 = arith.constant dense<0.000000e+00> : vector<8x32xf32>
    %95 = tpu.matmul %93, %94, %cst_33 {dimension_numbers = #tpu.dot_dimension_numbers<[1], [0], [0], [1], [0, 0, 1, 1], [], []>} : vector<8x32xbf16>, vector<32x32xbf16>, vector<8x32xf32> -> vector<8x32xf32>
    %96 = vector.extract_strided_slice %3 {offsets = [0, 0], sizes = [1, 32], strides = [1, 1]} : vector<6x32xf32> to vector<1x32xf32>
    %97 = vector.broadcast %96 : vector<1x32xf32> to vector<8x32xf32>
    %98 = arith.addf %95, %97 : vector<8x32xf32>
    %99 = arith.addf %2, %98 : vector<8x32xf32>
    %100 = vector.extract_strided_slice %3 {offsets = [1, 0], sizes = [1, 32], strides = [1, 1]} : vector<6x32xf32> to vector<1x32xf32>
    %101 = vector.extract_strided_slice %3 {offsets = [2, 0], sizes = [1, 32], strides = [1, 1]} : vector<6x32xf32> to vector<1x32xf32>
    %cst_34 = arith.constant dense<0.000000e+00> : vector<8xf32>
    %102 = vector.multi_reduction <add>, %99, %cst_34 [1] : vector<8x32xf32> to vector<8xf32>
    %103 = vector.shape_cast %102 : vector<8xf32> to vector<8x1xf32>
    %cst_35 = arith.constant 3.200000e+01 : f32
    %104 = vector.broadcast %cst_35 : f32 to vector<8x1xf32>
    %105 = arith.divf %103, %104 : vector<8x1xf32>
    %106 = vector.broadcast %105 : vector<8x1xf32> to vector<8x32xf32>
    %107 = arith.subf %99, %106 : vector<8x32xf32>
    %108 = arith.mulf %107, %107 : vector<8x32xf32>
    %cst_36 = arith.constant dense<0.000000e+00> : vector<8xf32>
    %109 = vector.multi_reduction <add>, %108, %cst_36 [1] : vector<8x32xf32> to vector<8xf32>
    %110 = vector.shape_cast %109 : vector<8xf32> to vector<8x1xf32>
    %cst_37 = arith.constant 3.200000e+01 : f32
    %111 = vector.broadcast %cst_37 : f32 to vector<8x1xf32>
    %112 = arith.divf %110, %111 : vector<8x1xf32>
    %113 = vector.broadcast %105 : vector<8x1xf32> to vector<8x32xf32>
    %114 = arith.subf %99, %113 : vector<8x32xf32>
    %cst_38 = arith.constant 9.99999974E-6 : f32
    %115 = vector.broadcast %cst_38 : f32 to vector<8x1xf32>
    %116 = arith.addf %112, %115 : vector<8x1xf32>
    %117 = math.rsqrt %116 : vector<8x1xf32>
    %118 = vector.broadcast %117 : vector<8x1xf32> to vector<8x32xf32>
    %119 = arith.mulf %114, %118 : vector<8x32xf32>
    %120 = vector.broadcast %100 : vector<1x32xf32> to vector<8x32xf32>
    %121 = arith.mulf %119, %120 : vector<8x32xf32>
    %122 = vector.broadcast %101 : vector<1x32xf32> to vector<8x32xf32>
    %123 = arith.addf %121, %122 : vector<8x32xf32>
    %124 = arith.truncf %123 : vector<8x32xf32> to vector<8x32xbf16>
    %c0_39 = arith.constant 0 : index
    %c0_40 = arith.constant 0 : index
    %125 = vector.load %arg5[%c0_39, %c0_40] : memref<32x64xbf16, #tpu.memory_space<vmem>>, vector<32x64xbf16>
    %cst_41 = arith.constant dense<0.000000e+00> : vector<8x64xf32>
    %126 = tpu.matmul %124, %125, %cst_41 {dimension_numbers = #tpu.dot_dimension_numbers<[1], [0], [0], [1], [0, 0, 1, 1], [], []>} : vector<8x32xbf16>, vector<32x64xbf16>, vector<8x64xf32> -> vector<8x64xf32>
    %c0_42 = arith.constant 0 : index
    %c0_43 = arith.constant 0 : index
    %127 = vector.load %arg6[%c0_42, %c0_43] : memref<1x64xf32, #tpu.memory_space<vmem>>, vector<1x64xf32>
    %128 = vector.broadcast %127 : vector<1x64xf32> to vector<8x64xf32>
    %129 = arith.addf %126, %128 : vector<8x64xf32>
    %cst_44 = arith.constant 0.000000e+00 : f32
    %130 = vector.broadcast %cst_44 : f32 to vector<8x64xf32>
    %131 = arith.maximumf %129, %130 : vector<8x64xf32>
    %132 = arith.truncf %131 : vector<8x64xf32> to vector<8x64xbf16>
    %c0_45 = arith.constant 0 : index
    %c0_46 = arith.constant 0 : index
    %133 = vector.load %arg7[%c0_45, %c0_46] : memref<64x32xbf16, #tpu.memory_space<vmem>>, vector<64x32xbf16>
    %cst_47 = arith.constant dense<0.000000e+00> : vector<8x32xf32>
    %134 = tpu.matmul %132, %133, %cst_47 {dimension_numbers = #tpu.dot_dimension_numbers<[1], [0], [0], [1], [0, 0, 1, 1], [], []>} : vector<8x64xbf16>, vector<64x32xbf16>, vector<8x32xf32> -> vector<8x32xf32>
    %135 = vector.extract_strided_slice %3 {offsets = [3, 0], sizes = [1, 32], strides = [1, 1]} : vector<6x32xf32> to vector<1x32xf32>
    %136 = vector.broadcast %135 : vector<1x32xf32> to vector<8x32xf32>
    %137 = arith.addf %134, %136 : vector<8x32xf32>
    %138 = arith.addf %123, %137 : vector<8x32xf32>
    %139 = vector.extract_strided_slice %3 {offsets = [4, 0], sizes = [1, 32], strides = [1, 1]} : vector<6x32xf32> to vector<1x32xf32>
    %140 = vector.extract_strided_slice %3 {offsets = [5, 0], sizes = [1, 32], strides = [1, 1]} : vector<6x32xf32> to vector<1x32xf32>
    %cst_48 = arith.constant dense<0.000000e+00> : vector<8xf32>
    %141 = vector.multi_reduction <add>, %138, %cst_48 [1] : vector<8x32xf32> to vector<8xf32>
    %142 = vector.shape_cast %141 : vector<8xf32> to vector<8x1xf32>
    %cst_49 = arith.constant 3.200000e+01 : f32
    %143 = vector.broadcast %cst_49 : f32 to vector<8x1xf32>
    %144 = arith.divf %142, %143 : vector<8x1xf32>
    %145 = vector.broadcast %144 : vector<8x1xf32> to vector<8x32xf32>
    %146 = arith.subf %138, %145 : vector<8x32xf32>
    %147 = arith.mulf %146, %146 : vector<8x32xf32>
    %cst_50 = arith.constant dense<0.000000e+00> : vector<8xf32>
    %148 = vector.multi_reduction <add>, %147, %cst_50 [1] : vector<8x32xf32> to vector<8xf32>
    %149 = vector.shape_cast %148 : vector<8xf32> to vector<8x1xf32>
    %cst_51 = arith.constant 3.200000e+01 : f32
    %150 = vector.broadcast %cst_51 : f32 to vector<8x1xf32>
    %151 = arith.divf %149, %150 : vector<8x1xf32>
    %152 = vector.broadcast %144 : vector<8x1xf32> to vector<8x32xf32>
    %153 = arith.subf %138, %152 : vector<8x32xf32>
    %cst_52 = arith.constant 9.99999974E-6 : f32
    %154 = vector.broadcast %cst_52 : f32 to vector<8x1xf32>
    %155 = arith.addf %151, %154 : vector<8x1xf32>
    %156 = math.rsqrt %155 : vector<8x1xf32>
    %157 = vector.broadcast %156 : vector<8x1xf32> to vector<8x32xf32>
    %158 = arith.mulf %153, %157 : vector<8x32xf32>
    %159 = vector.broadcast %139 : vector<1x32xf32> to vector<8x32xf32>
    %160 = arith.mulf %158, %159 : vector<8x32xf32>
    %161 = vector.broadcast %140 : vector<1x32xf32> to vector<8x32xf32>
    %162 = arith.addf %160, %161 : vector<8x32xf32>
    %163 = arith.truncf %162 : vector<8x32xf32> to vector<8x32xbf16>
    %c0_53 = arith.constant 0 : index
    %c0_54 = arith.constant 0 : index
    %c0_55 = arith.constant 0 : index
    %164 = vector.load %arg9[%c0_53, %c0_54, %c0_55] : memref<1x8x32xbf16, #tpu.memory_space<vmem>>, vector<1x8x32xbf16>
    %165 = vector.shape_cast %164 : vector<1x8x32xbf16> to vector<8x32xbf16>
    %166 = vector.shape_cast %163 : vector<8x32xbf16> to vector<1x8x32xbf16>
    tpu.vector_store %arg9[%c0_53, %c0_54, %c0_55], %166 {strides = array<i32>} : memref<1x8x32xbf16, #tpu.memory_space<vmem>>, vector<1x8x32xbf16>,
    return
  }
  func.func @transform_0(%arg0: i32) -> (i32, i32, i32) {
    %c0_i32 = arith.constant 0 : i32
    %c0_i32_0 = arith.constant 0 : i32
    %c0_i32_1 = arith.constant 0 : i32
    return %arg0, %c0_i32, %c0_i32_0 : i32, i32, i32
  }
  func.func @transform_1(%arg0: i32) -> (i32, i32) {
    %c0_i32 = arith.constant 0 : i32
    %c0_i32_0 = arith.constant 0 : i32
    %c0_i32_1 = arith.constant 0 : i32
    return %c0_i32, %c0_i32_0 : i32, i32
  }
  func.func @transform_2(%arg0: i32) -> (i32, i32) {
    %c0_i32 = arith.constant 0 : i32
    %c0_i32_0 = arith.constant 0 : i32
    %c0_i32_1 = arith.constant 0 : i32
    return %c0_i32, %c0_i32_0 : i32, i32
  }
  func.func @transform_3(%arg0: i32) -> (i32, i32) {
    %c0_i32 = arith.constant 0 : i32
    %c0_i32_0 = arith.constant 0 : i32
    %c0_i32_1 = arith.constant 0 : i32
    return %c0_i32, %c0_i32_0 : i32, i32
  }
  func.func @transform_4(%arg0: i32) -> (i32, i32) {
    %c0_i32 = arith.constant 0 : i32
    %c0_i32_0 = arith.constant 0 : i32
    %c0_i32_1 = arith.constant 0 : i32
    return %c0_i32, %c0_i32_0 : i32, i32
  }
  func.func @transform_5(%arg0: i32) -> (i32, i32) {
    %c0_i32 = arith.constant 0 : i32
    %c0_i32_0 = arith.constant 0 : i32
    %c0_i32_1 = arith.constant 0 : i32
    return %c0_i32, %c0_i32_0 : i32, i32
  }
  func.func @transform_6(%arg0: i32) -> (i32, i32) {
    %c0_i32 = arith.constant 0 : i32
    %c0_i32_0 = arith.constant 0 : i32
    %c0_i32_1 = arith.constant 0 : i32
    return %c0_i32, %c0_i32_0 : i32, i32
  }
  func.func @transform_7(%arg0: i32) -> (i32, i32) {
    %c0_i32 = arith.constant 0 : i32
    %c0_i32_0 = arith.constant 0 : i32
    %c0_i32_1 = arith.constant 0 : i32
    return %c0_i32, %c0_i32_0 : i32, i32
  }
  func.func @transform_8(%arg0: i32) -> (i32, i32, i32) {
    %c0_i32 = arith.constant 0 : i32
    %c0_i32_0 = arith.constant 0 : i32
    %c0_i32_1 = arith.constant 0 : i32
    return %arg0, %c0_i32, %c0_i32_0 : i32, i32, i32
  }
}

module attributes {stable_mosaic.version = 11 : i64} {
  func.func @_decoder_layer_kernel(%arg0: i32, %arg1: memref<1x8x32xbf16, #tpu.memory_space<vmem>>, %arg2: memref<1x8x32xbf16, #tpu.memory_space<vmem>>, %arg3: memref<32x96xbf16, #tpu.memory_space<vmem>>, %arg4: memref<1x96xf32, #tpu.memory_space<vmem>>, %arg5: memref<32x32xbf16, #tpu.memory_space<vmem>>, %arg6: memref<32x32xbf16, #tpu.memory_space<vmem>>, %arg7: memref<32x64xbf16, #tpu.memory_space<vmem>>, %arg8: memref<1x64xf32, #tpu.memory_space<vmem>>, %arg9: memref<32x32xbf16, #tpu.memory_space<vmem>>, %arg10: memref<32x64xbf16, #tpu.memory_space<vmem>>, %arg11: memref<1x64xf32, #tpu.memory_space<vmem>>, %arg12: memref<64x32xbf16, #tpu.memory_space<vmem>>, %arg13: memref<10x32xf32, #tpu.memory_space<vmem>>, %arg14: memref<1x8x32xbf16, #tpu.memory_space<vmem>>, %arg15: memref<8x32xf32, #tpu.memory_space<vmem>>) attributes {dimension_semantics = [#tpu.dimension_semantics<parallel>], iteration_bounds = array<i64: 2>, scalar_prefetch = 0 : i64, scratch_operands = 1 : i64, tpu.core_type = #tpu.core_type<tc>, window_params = [{transform_indices = @transform_0, window_bounds = array<i64: 1, 8, 32>}, {transform_indices = @transform_1, window_bounds = array<i64: 1, 8, 32>}, {pipeline_mode = #tpu.pipeline_mode<synchronous>, transform_indices = @transform_2, window_bounds = array<i64: 32, 96>}, {pipeline_mode = #tpu.pipeline_mode<synchronous>, transform_indices = @transform_3, window_bounds = array<i64: 1, 96>}, {pipeline_mode = #tpu.pipeline_mode<synchronous>, transform_indices = @transform_4, window_bounds = array<i64: 32, 32>}, {pipeline_mode = #tpu.pipeline_mode<synchronous>, transform_indices = @transform_5, window_bounds = array<i64: 32, 32>}, {pipeline_mode = #tpu.pipeline_mode<synchronous>, transform_indices = @transform_6, window_bounds = array<i64: 32, 64>}, {pipeline_mode = #tpu.pipeline_mode<synchronous>, transform_indices = @transform_7, window_bounds = array<i64: 1, 64>}, {pipeline_mode = #tpu.pipeline_mode<synchronous>, transform_indices = @transform_8, window_bounds = array<i64: 32, 32>}, {pipeline_mode = #tpu.pipeline_mode<synchronous>, transform_indices = @transform_9, window_bounds = array<i64: 32, 64>}, {pipeline_mode = #tpu.pipeline_mode<synchronous>, transform_indices = @transform_10, window_bounds = array<i64: 1, 64>}, {pipeline_mode = #tpu.pipeline_mode<synchronous>, transform_indices = @transform_11, window_bounds = array<i64: 64, 32>}, {pipeline_mode = #tpu.pipeline_mode<synchronous>, transform_indices = @transform_12, window_bounds = array<i64: 10, 32>}, {transform_indices = @transform_13, window_bounds = array<i64: 1, 8, 32>}]} {
    %c0 = arith.constant 0 : index
    %c0_0 = arith.constant 0 : index
    %c0_1 = arith.constant 0 : index
    %0 = vector.load %arg1[%c0, %c0_0, %c0_1] : memref<1x8x32xbf16, #tpu.memory_space<vmem>>, vector<1x8x32xbf16>
    %1 = vector.shape_cast %0 : vector<1x8x32xbf16> to vector<8x32xbf16>
    %2 = arith.extf %1 : vector<8x32xbf16> to vector<8x32xf32>
    %c0_2 = arith.constant 0 : index
    %c0_3 = arith.constant 0 : index
    %c0_4 = arith.constant 0 : index
    %3 = vector.load %arg2[%c0_2, %c0_3, %c0_4] : memref<1x8x32xbf16, #tpu.memory_space<vmem>>, vector<1x8x32xbf16>
    %4 = vector.shape_cast %3 : vector<1x8x32xbf16> to vector<8x32xbf16>
    %c0_5 = arith.constant 0 : index
    %c0_6 = arith.constant 0 : index
    %5 = vector.load %arg13[%c0_5, %c0_6] : memref<10x32xf32, #tpu.memory_space<vmem>>, vector<10x32xf32>
    %c0_7 = arith.constant 0 : index
    %c0_8 = arith.constant 0 : index
    %6 = vector.load %arg3[%c0_7, %c0_8] : memref<32x96xbf16, #tpu.memory_space<vmem>>, vector<32x96xbf16>
    %cst = arith.constant dense<0.000000e+00> : vector<8x96xf32>
    %7 = tpu.matmul %1, %6, %cst {dimension_numbers = #tpu.dot_dimension_numbers<[1], [0], [0], [1], [0, 0, 1, 1], [], []>} : vector<8x32xbf16>, vector<32x96xbf16>, vector<8x96xf32> -> vector<8x96xf32>
    %c0_9 = arith.constant 0 : index
    %c0_10 = arith.constant 0 : index
    %8 = vector.load %arg4[%c0_9, %c0_10] : memref<1x96xf32, #tpu.memory_space<vmem>>, vector<1x96xf32>
    %9 = vector.broadcast %8 : vector<1x96xf32> to vector<8x96xf32>
    %10 = arith.addf %7, %9 : vector<8x96xf32>
    %11 = vector.extract_strided_slice %10 {offsets = [0, 0], sizes = [8, 32], strides = [1, 1]} : vector<8x96xf32> to vector<8x32xf32>
    %12 = vector.extract_strided_slice %10 {offsets = [0, 32], sizes = [8, 32], strides = [1, 1]} : vector<8x96xf32> to vector<8x32xf32>
    %13 = vector.extract_strided_slice %10 {offsets = [0, 64], sizes = [8, 32], strides = [1, 1]} : vector<8x96xf32> to vector<8x32xf32>
    %14 = vector.extract_strided_slice %11 {offsets = [0, 0], sizes = [8, 8], strides = [1, 1]} : vector<8x32xf32> to vector<8x8xf32>
    %15 = arith.truncf %14 : vector<8x8xf32> to vector<8x8xbf16>
    %16 = vector.extract_strided_slice %12 {offsets = [0, 0], sizes = [8, 8], strides = [1, 1]} : vector<8x32xf32> to vector<8x8xf32>
    %17 = arith.truncf %16 : vector<8x8xf32> to vector<8x8xbf16>
    %18 = vector.extract_strided_slice %13 {offsets = [0, 0], sizes = [8, 8], strides = [1, 1]} : vector<8x32xf32> to vector<8x8xf32>
    %19 = arith.truncf %18 : vector<8x8xf32> to vector<8x8xbf16>
    %cst_11 = arith.constant dense<0.000000e+00> : vector<8x8xf32>
    %20 = tpu.matmul %15, %17, %cst_11 {dimension_numbers = #tpu.dot_dimension_numbers<[1], [1], [0], [0], [0, 0, 1, 0], [], []>} : vector<8x8xbf16>, vector<8x8xbf16>, vector<8x8xf32> -> vector<8x8xf32>
    %cst_12 = arith.constant dense<0xFF800000> : vector<8xf32>
    %21 = vector.multi_reduction <maximumf>, %20, %cst_12 [1] : vector<8x8xf32> to vector<8xf32>
    %22 = vector.shape_cast %21 : vector<8xf32> to vector<8x1xf32>
    %23 = vector.broadcast %22 : vector<8x1xf32> to vector<8x8xf32>
    %24 = arith.subf %20, %23 : vector<8x8xf32>
    %25 = math.exp %24 : vector<8x8xf32>
    %cst_13 = arith.constant dense<0.000000e+00> : vector<8xf32>
    %26 = vector.multi_reduction <add>, %25, %cst_13 [1] : vector<8x8xf32> to vector<8xf32>
    %27 = vector.shape_cast %26 : vector<8xf32> to vector<8x1xf32>
    %28 = tpu.reciprocal %27 {approx = true} : vector<8x1xf32> -> vector<8x1xf32>
    %29 = vector.broadcast %28 : vector<8x1xf32> to vector<8x8xf32>
    %30 = arith.mulf %25, %29 : vector<8x8xf32>
    %31 = arith.truncf %30 : vector<8x8xf32> to vector<8x8xbf16>
    %cst_14 = arith.constant dense<0.000000e+00> : vector<8x8xf32>
    %32 = tpu.matmul %31, %19, %cst_14 {dimension_numbers = #tpu.dot_dimension_numbers<[1], [0], [0], [1], [0, 0, 1, 1], [], []>} : vector<8x8xbf16>, vector<8x8xbf16>, vector<8x8xf32> -> vector<8x8xf32>
    %c0_15 = arith.constant 0 : index
    %c0_16 = arith.constant 0 : index
    %33 = vector.load %arg15[%c0_15, %c0_16] : memref<8x32xf32, #tpu.memory_space<vmem>>, vector<8x8xf32>
    tpu.vector_store %arg15[%c0_15, %c0_16], %32 {strides = array<i32>} : memref<8x32xf32, #tpu.memory_space<vmem>>, vector<8x8xf32>,
    %34 = vector.extract_strided_slice %11 {offsets = [0, 8], sizes = [8, 8], strides = [1, 1]} : vector<8x32xf32> to vector<8x8xf32>
    %35 = arith.truncf %34 : vector<8x8xf32> to vector<8x8xbf16>
    %36 = vector.extract_strided_slice %12 {offsets = [0, 8], sizes = [8, 8], strides = [1, 1]} : vector<8x32xf32> to vector<8x8xf32>
    %37 = arith.truncf %36 : vector<8x8xf32> to vector<8x8xbf16>
    %38 = vector.extract_strided_slice %13 {offsets = [0, 8], sizes = [8, 8], strides = [1, 1]} : vector<8x32xf32> to vector<8x8xf32>
    %39 = arith.truncf %38 : vector<8x8xf32> to vector<8x8xbf16>
    %cst_17 = arith.constant dense<0.000000e+00> : vector<8x8xf32>
    %40 = tpu.matmul %35, %37, %cst_17 {dimension_numbers = #tpu.dot_dimension_numbers<[1], [1], [0], [0], [0, 0, 1, 0], [], []>} : vector<8x8xbf16>, vector<8x8xbf16>, vector<8x8xf32> -> vector<8x8xf32>
    %cst_18 = arith.constant dense<0xFF800000> : vector<8xf32>
    %41 = vector.multi_reduction <maximumf>, %40, %cst_18 [1] : vector<8x8xf32> to vector<8xf32>
    %42 = vector.shape_cast %41 : vector<8xf32> to vector<8x1xf32>
    %43 = vector.broadcast %42 : vector<8x1xf32> to vector<8x8xf32>
    %44 = arith.subf %40, %43 : vector<8x8xf32>
    %45 = math.exp %44 : vector<8x8xf32>
    %cst_19 = arith.constant dense<0.000000e+00> : vector<8xf32>
    %46 = vector.multi_reduction <add>, %45, %cst_19 [1] : vector<8x8xf32> to vector<8xf32>
    %47 = vector.shape_cast %46 : vector<8xf32> to vector<8x1xf32>
    %48 = tpu.reciprocal %47 {approx = true} : vector<8x1xf32> -> vector<8x1xf32>
    %49 = vector.broadcast %48 : vector<8x1xf32> to vector<8x8xf32>
    %50 = arith.mulf %45, %49 : vector<8x8xf32>
    %51 = arith.truncf %50 : vector<8x8xf32> to vector<8x8xbf16>
    %cst_20 = arith.constant dense<0.000000e+00> : vector<8x8xf32>
    %52 = tpu.matmul %51, %39, %cst_20 {dimension_numbers = #tpu.dot_dimension_numbers<[1], [0], [0], [1], [0, 0, 1, 1], [], []>} : vector<8x8xbf16>, vector<8x8xbf16>, vector<8x8xf32> -> vector<8x8xf32>
    %c0_21 = arith.constant 0 : index
    %c8 = arith.constant 8 : index
    %53 = vector.load %arg15[%c0_21, %c8] : memref<8x32xf32, #tpu.memory_space<vmem>>, vector<8x8xf32>
    tpu.vector_store %arg15[%c0_21, %c8], %52 {strides = array<i32>} : memref<8x32xf32, #tpu.memory_space<vmem>>, vector<8x8xf32>,
    %54 = vector.extract_strided_slice %11 {offsets = [0, 16], sizes = [8, 8], strides = [1, 1]} : vector<8x32xf32> to vector<8x8xf32>
    %55 = arith.truncf %54 : vector<8x8xf32> to vector<8x8xbf16>
    %56 = vector.extract_strided_slice %12 {offsets = [0, 16], sizes = [8, 8], strides = [1, 1]} : vector<8x32xf32> to vector<8x8xf32>
    %57 = arith.truncf %56 : vector<8x8xf32> to vector<8x8xbf16>
    %58 = vector.extract_strided_slice %13 {offsets = [0, 16], sizes = [8, 8], strides = [1, 1]} : vector<8x32xf32> to vector<8x8xf32>
    %59 = arith.truncf %58 : vector<8x8xf32> to vector<8x8xbf16>
    %cst_22 = arith.constant dense<0.000000e+00> : vector<8x8xf32>
    %60 = tpu.matmul %55, %57, %cst_22 {dimension_numbers = #tpu.dot_dimension_numbers<[1], [1], [0], [0], [0, 0, 1, 0], [], []>} : vector<8x8xbf16>, vector<8x8xbf16>, vector<8x8xf32> -> vector<8x8xf32>
    %cst_23 = arith.constant dense<0xFF800000> : vector<8xf32>
    %61 = vector.multi_reduction <maximumf>, %60, %cst_23 [1] : vector<8x8xf32> to vector<8xf32>
    %62 = vector.shape_cast %61 : vector<8xf32> to vector<8x1xf32>
    %63 = vector.broadcast %62 : vector<8x1xf32> to vector<8x8xf32>
    %64 = arith.subf %60, %63 : vector<8x8xf32>
    %65 = math.exp %64 : vector<8x8xf32>
    %cst_24 = arith.constant dense<0.000000e+00> : vector<8xf32>
    %66 = vector.multi_reduction <add>, %65, %cst_24 [1] : vector<8x8xf32> to vector<8xf32>
    %67 = vector.shape_cast %66 : vector<8xf32> to vector<8x1xf32>
    %68 = tpu.reciprocal %67 {approx = true} : vector<8x1xf32> -> vector<8x1xf32>
    %69 = vector.broadcast %68 : vector<8x1xf32> to vector<8x8xf32>
    %70 = arith.mulf %65, %69 : vector<8x8xf32>
    %71 = arith.truncf %70 : vector<8x8xf32> to vector<8x8xbf16>
    %cst_25 = arith.constant dense<0.000000e+00> : vector<8x8xf32>
    %72 = tpu.matmul %71, %59, %cst_25 {dimension_numbers = #tpu.dot_dimension_numbers<[1], [0], [0], [1], [0, 0, 1, 1], [], []>} : vector<8x8xbf16>, vector<8x8xbf16>, vector<8x8xf32> -> vector<8x8xf32>
    %c0_26 = arith.constant 0 : index
    %c16 = arith.constant 16 : index
    %73 = vector.load %arg15[%c0_26, %c16] : memref<8x32xf32, #tpu.memory_space<vmem>>, vector<8x8xf32>
    tpu.vector_store %arg15[%c0_26, %c16], %72 {strides = array<i32>} : memref<8x32xf32, #tpu.memory_space<vmem>>, vector<8x8xf32>,
    %74 = vector.extract_strided_slice %11 {offsets = [0, 24], sizes = [8, 8], strides = [1, 1]} : vector<8x32xf32> to vector<8x8xf32>
    %75 = arith.truncf %74 : vector<8x8xf32> to vector<8x8xbf16>
    %76 = vector.extract_strided_slice %12 {offsets = [0, 24], sizes = [8, 8], strides = [1, 1]} : vector<8x32xf32> to vector<8x8xf32>
    %77 = arith.truncf %76 : vector<8x8xf32> to vector<8x8xbf16>
    %78 = vector.extract_strided_slice %13 {offsets = [0, 24], sizes = [8, 8], strides = [1, 1]} : vector<8x32xf32> to vector<8x8xf32>
    %79 = arith.truncf %78 : vector<8x8xf32> to vector<8x8xbf16>
    %cst_27 = arith.constant dense<0.000000e+00> : vector<8x8xf32>
    %80 = tpu.matmul %75, %77, %cst_27 {dimension_numbers = #tpu.dot_dimension_numbers<[1], [1], [0], [0], [0, 0, 1, 0], [], []>} : vector<8x8xbf16>, vector<8x8xbf16>, vector<8x8xf32> -> vector<8x8xf32>
    %cst_28 = arith.constant dense<0xFF800000> : vector<8xf32>
    %81 = vector.multi_reduction <maximumf>, %80, %cst_28 [1] : vector<8x8xf32> to vector<8xf32>
    %82 = vector.shape_cast %81 : vector<8xf32> to vector<8x1xf32>
    %83 = vector.broadcast %82 : vector<8x1xf32> to vector<8x8xf32>
    %84 = arith.subf %80, %83 : vector<8x8xf32>
    %85 = math.exp %84 : vector<8x8xf32>
    %cst_29 = arith.constant dense<0.000000e+00> : vector<8xf32>
    %86 = vector.multi_reduction <add>, %85, %cst_29 [1] : vector<8x8xf32> to vector<8xf32>
    %87 = vector.shape_cast %86 : vector<8xf32> to vector<8x1xf32>
    %88 = tpu.reciprocal %87 {approx = true} : vector<8x1xf32> -> vector<8x1xf32>
    %89 = vector.broadcast %88 : vector<8x1xf32> to vector<8x8xf32>
    %90 = arith.mulf %85, %89 : vector<8x8xf32>
    %91 = arith.truncf %90 : vector<8x8xf32> to vector<8x8xbf16>
    %cst_30 = arith.constant dense<0.000000e+00> : vector<8x8xf32>
    %92 = tpu.matmul %91, %79, %cst_30 {dimension_numbers = #tpu.dot_dimension_numbers<[1], [0], [0], [1], [0, 0, 1, 1], [], []>} : vector<8x8xbf16>, vector<8x8xbf16>, vector<8x8xf32> -> vector<8x8xf32>
    %c0_31 = arith.constant 0 : index
    %c24 = arith.constant 24 : index
    %93 = vector.load %arg15[%c0_31, %c24] : memref<8x32xf32, #tpu.memory_space<vmem>>, vector<8x8xf32>
    tpu.vector_store %arg15[%c0_31, %c24], %92 {strides = array<i32>} : memref<8x32xf32, #tpu.memory_space<vmem>>, vector<8x8xf32>,
    %c0_32 = arith.constant 0 : index
    %c0_33 = arith.constant 0 : index
    %94 = vector.load %arg15[%c0_32, %c0_33] : memref<8x32xf32, #tpu.memory_space<vmem>>, vector<8x32xf32>
    %95 = arith.truncf %94 : vector<8x32xf32> to vector<8x32xbf16>
    %c0_34 = arith.constant 0 : index
    %c0_35 = arith.constant 0 : index
    %96 = vector.load %arg5[%c0_34, %c0_35] : memref<32x32xbf16, #tpu.memory_space<vmem>>, vector<32x32xbf16>
    %cst_36 = arith.constant dense<0.000000e+00> : vector<8x32xf32>
    %97 = tpu.matmul %95, %96, %cst_36 {dimension_numbers = #tpu.dot_dimension_numbers<[1], [0], [0], [1], [0, 0, 1, 1], [], []>} : vector<8x32xbf16>, vector<32x32xbf16>, vector<8x32xf32> -> vector<8x32xf32>
    %98 = vector.extract_strided_slice %5 {offsets = [0, 0], sizes = [1, 32], strides = [1, 1]} : vector<10x32xf32> to vector<1x32xf32>
    %99 = vector.broadcast %98 : vector<1x32xf32> to vector<8x32xf32>
    %100 = arith.addf %97, %99 : vector<8x32xf32>
    %101 = arith.addf %2, %100 : vector<8x32xf32>
    %102 = vector.extract_strided_slice %5 {offsets = [1, 0], sizes = [1, 32], strides = [1, 1]} : vector<10x32xf32> to vector<1x32xf32>
    %103 = vector.extract_strided_slice %5 {offsets = [2, 0], sizes = [1, 32], strides = [1, 1]} : vector<10x32xf32> to vector<1x32xf32>
    %cst_37 = arith.constant dense<0.000000e+00> : vector<8xf32>
    %104 = vector.multi_reduction <add>, %101, %cst_37 [1] : vector<8x32xf32> to vector<8xf32>
    %105 = vector.shape_cast %104 : vector<8xf32> to vector<8x1xf32>
    %cst_38 = arith.constant 3.200000e+01 : f32
    %106 = vector.broadcast %cst_38 : f32 to vector<8x1xf32>
    %107 = arith.divf %105, %106 : vector<8x1xf32>
    %108 = vector.broadcast %107 : vector<8x1xf32> to vector<8x32xf32>
    %109 = arith.subf %101, %108 : vector<8x32xf32>
    %110 = arith.mulf %109, %109 : vector<8x32xf32>
    %cst_39 = arith.constant dense<0.000000e+00> : vector<8xf32>
    %111 = vector.multi_reduction <add>, %110, %cst_39 [1] : vector<8x32xf32> to vector<8xf32>
    %112 = vector.shape_cast %111 : vector<8xf32> to vector<8x1xf32>
    %cst_40 = arith.constant 3.200000e+01 : f32
    %113 = vector.broadcast %cst_40 : f32 to vector<8x1xf32>
    %114 = arith.divf %112, %113 : vector<8x1xf32>
    %115 = vector.broadcast %107 : vector<8x1xf32> to vector<8x32xf32>
    %116 = arith.subf %101, %115 : vector<8x32xf32>
    %cst_41 = arith.constant 9.99999974E-6 : f32
    %117 = vector.broadcast %cst_41 : f32 to vector<8x1xf32>
    %118 = arith.addf %114, %117 : vector<8x1xf32>
    %119 = math.rsqrt %118 : vector<8x1xf32>
    %120 = vector.broadcast %119 : vector<8x1xf32> to vector<8x32xf32>
    %121 = arith.mulf %116, %120 : vector<8x32xf32>
    %122 = vector.broadcast %102 : vector<1x32xf32> to vector<8x32xf32>
    %123 = arith.mulf %121, %122 : vector<8x32xf32>
    %124 = vector.broadcast %103 : vector<1x32xf32> to vector<8x32xf32>
    %125 = arith.addf %123, %124 : vector<8x32xf32>
    %126 = arith.truncf %125 : vector<8x32xf32> to vector<8x32xbf16>
    %c0_42 = arith.constant 0 : index
    %c0_43 = arith.constant 0 : index
    %127 = vector.load %arg6[%c0_42, %c0_43] : memref<32x32xbf16, #tpu.memory_space<vmem>>, vector<32x32xbf16>
    %cst_44 = arith.constant dense<0.000000e+00> : vector<8x32xf32>
    %128 = tpu.matmul %126, %127, %cst_44 {dimension_numbers = #tpu.dot_dimension_numbers<[1], [0], [0], [1], [0, 0, 1, 1], [], []>} : vector<8x32xbf16>, vector<32x32xbf16>, vector<8x32xf32> -> vector<8x32xf32>
    %129 = vector.extract_strided_slice %5 {offsets = [3, 0], sizes = [1, 32], strides = [1, 1]} : vector<10x32xf32> to vector<1x32xf32>
    %130 = vector.broadcast %129 : vector<1x32xf32> to vector<8x32xf32>
    %131 = arith.addf %128, %130 : vector<8x32xf32>
    %c0_45 = arith.constant 0 : index
    %c0_46 = arith.constant 0 : index
    %132 = vector.load %arg7[%c0_45, %c0_46] : memref<32x64xbf16, #tpu.memory_space<vmem>>, vector<32x64xbf16>
    %cst_47 = arith.constant dense<0.000000e+00> : vector<8x64xf32>
    %133 = tpu.matmul %4, %132, %cst_47 {dimension_numbers = #tpu.dot_dimension_numbers<[1], [0], [0], [1], [0, 0, 1, 1], [], []>} : vector<8x32xbf16>, vector<32x64xbf16>, vector<8x64xf32> -> vector<8x64xf32>
    %c0_48 = arith.constant 0 : index
    %c0_49 = arith.constant 0 : index
    %134 = vector.load %arg8[%c0_48, %c0_49] : memref<1x64xf32, #tpu.memory_space<vmem>>, vector<1x64xf32>
    %135 = vector.broadcast %134 : vector<1x64xf32> to vector<8x64xf32>
    %136 = arith.addf %133, %135 : vector<8x64xf32>
    %137 = vector.extract_strided_slice %136 {offsets = [0, 0], sizes = [8, 32], strides = [1, 1]} : vector<8x64xf32> to vector<8x32xf32>
    %138 = vector.extract_strided_slice %136 {offsets = [0, 32], sizes = [8, 32], strides = [1, 1]} : vector<8x64xf32> to vector<8x32xf32>
    %139 = vector.extract_strided_slice %131 {offsets = [0, 0], sizes = [8, 8], strides = [1, 1]} : vector<8x32xf32> to vector<8x8xf32>
    %140 = arith.truncf %139 : vector<8x8xf32> to vector<8x8xbf16>
    %141 = vector.extract_strided_slice %137 {offsets = [0, 0], sizes = [8, 8], strides = [1, 1]} : vector<8x32xf32> to vector<8x8xf32>
    %142 = arith.truncf %141 : vector<8x8xf32> to vector<8x8xbf16>
    %143 = vector.extract_strided_slice %138 {offsets = [0, 0], sizes = [8, 8], strides = [1, 1]} : vector<8x32xf32> to vector<8x8xf32>
    %144 = arith.truncf %143 : vector<8x8xf32> to vector<8x8xbf16>
    %cst_50 = arith.constant dense<0.000000e+00> : vector<8x8xf32>
    %145 = tpu.matmul %140, %142, %cst_50 {dimension_numbers = #tpu.dot_dimension_numbers<[1], [1], [0], [0], [0, 0, 1, 0], [], []>} : vector<8x8xbf16>, vector<8x8xbf16>, vector<8x8xf32> -> vector<8x8xf32>
    %cst_51 = arith.constant dense<0xFF800000> : vector<8xf32>
    %146 = vector.multi_reduction <maximumf>, %145, %cst_51 [1] : vector<8x8xf32> to vector<8xf32>
    %147 = vector.shape_cast %146 : vector<8xf32> to vector<8x1xf32>
    %148 = vector.broadcast %147 : vector<8x1xf32> to vector<8x8xf32>
    %149 = arith.subf %145, %148 : vector<8x8xf32>
    %150 = math.exp %149 : vector<8x8xf32>
    %cst_52 = arith.constant dense<0.000000e+00> : vector<8xf32>
    %151 = vector.multi_reduction <add>, %150, %cst_52 [1] : vector<8x8xf32> to vector<8xf32>
    %152 = vector.shape_cast %151 : vector<8xf32> to vector<8x1xf32>
    %153 = tpu.reciprocal %152 {approx = true} : vector<8x1xf32> -> vector<8x1xf32>
    %154 = vector.broadcast %153 : vector<8x1xf32> to vector<8x8xf32>
    %155 = arith.mulf %150, %154 : vector<8x8xf32>
    %156 = arith.truncf %155 : vector<8x8xf32> to vector<8x8xbf16>
    %cst_53 = arith.constant dense<0.000000e+00> : vector<8x8xf32>
    %157 = tpu.matmul %156, %144, %cst_53 {dimension_numbers = #tpu.dot_dimension_numbers<[1], [0], [0], [1], [0, 0, 1, 1], [], []>} : vector<8x8xbf16>, vector<8x8xbf16>, vector<8x8xf32> -> vector<8x8xf32>
    %c0_54 = arith.constant 0 : index
    %c0_55 = arith.constant 0 : index
    %158 = vector.load %arg15[%c0_54, %c0_55] : memref<8x32xf32, #tpu.memory_space<vmem>>, vector<8x8xf32>
    tpu.vector_store %arg15[%c0_54, %c0_55], %157 {strides = array<i32>} : memref<8x32xf32, #tpu.memory_space<vmem>>, vector<8x8xf32>,
    %159 = vector.extract_strided_slice %131 {offsets = [0, 8], sizes = [8, 8], strides = [1, 1]} : vector<8x32xf32> to vector<8x8xf32>
    %160 = arith.truncf %159 : vector<8x8xf32> to vector<8x8xbf16>
    %161 = vector.extract_strided_slice %137 {offsets = [0, 8], sizes = [8, 8], strides = [1, 1]} : vector<8x32xf32> to vector<8x8xf32>
    %162 = arith.truncf %161 : vector<8x8xf32> to vector<8x8xbf16>
    %163 = vector.extract_strided_slice %138 {offsets = [0, 8], sizes = [8, 8], strides = [1, 1]} : vector<8x32xf32> to vector<8x8xf32>
    %164 = arith.truncf %163 : vector<8x8xf32> to vector<8x8xbf16>
    %cst_56 = arith.constant dense<0.000000e+00> : vector<8x8xf32>
    %165 = tpu.matmul %160, %162, %cst_56 {dimension_numbers = #tpu.dot_dimension_numbers<[1], [1], [0], [0], [0, 0, 1, 0], [], []>} : vector<8x8xbf16>, vector<8x8xbf16>, vector<8x8xf32> -> vector<8x8xf32>
    %cst_57 = arith.constant dense<0xFF800000> : vector<8xf32>
    %166 = vector.multi_reduction <maximumf>, %165, %cst_57 [1] : vector<8x8xf32> to vector<8xf32>
    %167 = vector.shape_cast %166 : vector<8xf32> to vector<8x1xf32>
    %168 = vector.broadcast %167 : vector<8x1xf32> to vector<8x8xf32>
    %169 = arith.subf %165, %168 : vector<8x8xf32>
    %170 = math.exp %169 : vector<8x8xf32>
    %cst_58 = arith.constant dense<0.000000e+00> : vector<8xf32>
    %171 = vector.multi_reduction <add>, %170, %cst_58 [1] : vector<8x8xf32> to vector<8xf32>
    %172 = vector.shape_cast %171 : vector<8xf32> to vector<8x1xf32>
    %173 = tpu.reciprocal %172 {approx = true} : vector<8x1xf32> -> vector<8x1xf32>
    %174 = vector.broadcast %173 : vector<8x1xf32> to vector<8x8xf32>
    %175 = arith.mulf %170, %174 : vector<8x8xf32>
    %176 = arith.truncf %175 : vector<8x8xf32> to vector<8x8xbf16>
    %cst_59 = arith.constant dense<0.000000e+00> : vector<8x8xf32>
    %177 = tpu.matmul %176, %164, %cst_59 {dimension_numbers = #tpu.dot_dimension_numbers<[1], [0], [0], [1], [0, 0, 1, 1], [], []>} : vector<8x8xbf16>, vector<8x8xbf16>, vector<8x8xf32> -> vector<8x8xf32>
    %c0_60 = arith.constant 0 : index
    %c8_61 = arith.constant 8 : index
    %178 = vector.load %arg15[%c0_60, %c8_61] : memref<8x32xf32, #tpu.memory_space<vmem>>, vector<8x8xf32>
    tpu.vector_store %arg15[%c0_60, %c8_61], %177 {strides = array<i32>} : memref<8x32xf32, #tpu.memory_space<vmem>>, vector<8x8xf32>,
    %179 = vector.extract_strided_slice %131 {offsets = [0, 16], sizes = [8, 8], strides = [1, 1]} : vector<8x32xf32> to vector<8x8xf32>
    %180 = arith.truncf %179 : vector<8x8xf32> to vector<8x8xbf16>
    %181 = vector.extract_strided_slice %137 {offsets = [0, 16], sizes = [8, 8], strides = [1, 1]} : vector<8x32xf32> to vector<8x8xf32>
    %182 = arith.truncf %181 : vector<8x8xf32> to vector<8x8xbf16>
    %183 = vector.extract_strided_slice %138 {offsets = [0, 16], sizes = [8, 8], strides = [1, 1]} : vector<8x32xf32> to vector<8x8xf32>
    %184 = arith.truncf %183 : vector<8x8xf32> to vector<8x8xbf16>
    %cst_62 = arith.constant dense<0.000000e+00> : vector<8x8xf32>
    %185 = tpu.matmul %180, %182, %cst_62 {dimension_numbers = #tpu.dot_dimension_numbers<[1], [1], [0], [0], [0, 0, 1, 0], [], []>} : vector<8x8xbf16>, vector<8x8xbf16>, vector<8x8xf32> -> vector<8x8xf32>
    %cst_63 = arith.constant dense<0xFF800000> : vector<8xf32>
    %186 = vector.multi_reduction <maximumf>, %185, %cst_63 [1] : vector<8x8xf32> to vector<8xf32>
    %187 = vector.shape_cast %186 : vector<8xf32> to vector<8x1xf32>
    %188 = vector.broadcast %187 : vector<8x1xf32> to vector<8x8xf32>
    %189 = arith.subf %185, %188 : vector<8x8xf32>
    %190 = math.exp %189 : vector<8x8xf32>
    %cst_64 = arith.constant dense<0.000000e+00> : vector<8xf32>
    %191 = vector.multi_reduction <add>, %190, %cst_64 [1] : vector<8x8xf32> to vector<8xf32>
    %192 = vector.shape_cast %191 : vector<8xf32> to vector<8x1xf32>
    %193 = tpu.reciprocal %192 {approx = true} : vector<8x1xf32> -> vector<8x1xf32>
    %194 = vector.broadcast %193 : vector<8x1xf32> to vector<8x8xf32>
    %195 = arith.mulf %190, %194 : vector<8x8xf32>
    %196 = arith.truncf %195 : vector<8x8xf32> to vector<8x8xbf16>
    %cst_65 = arith.constant dense<0.000000e+00> : vector<8x8xf32>
    %197 = tpu.matmul %196, %184, %cst_65 {dimension_numbers = #tpu.dot_dimension_numbers<[1], [0], [0], [1], [0, 0, 1, 1], [], []>} : vector<8x8xbf16>, vector<8x8xbf16>, vector<8x8xf32> -> vector<8x8xf32>
    %c0_66 = arith.constant 0 : index
    %c16_67 = arith.constant 16 : index
    %198 = vector.load %arg15[%c0_66, %c16_67] : memref<8x32xf32, #tpu.memory_space<vmem>>, vector<8x8xf32>
    tpu.vector_store %arg15[%c0_66, %c16_67], %197 {strides = array<i32>} : memref<8x32xf32, #tpu.memory_space<vmem>>, vector<8x8xf32>,
    %199 = vector.extract_strided_slice %131 {offsets = [0, 24], sizes = [8, 8], strides = [1, 1]} : vector<8x32xf32> to vector<8x8xf32>
    %200 = arith.truncf %199 : vector<8x8xf32> to vector<8x8xbf16>
    %201 = vector.extract_strided_slice %137 {offsets = [0, 24], sizes = [8, 8], strides = [1, 1]} : vector<8x32xf32> to vector<8x8xf32>
    %202 = arith.truncf %201 : vector<8x8xf32> to vector<8x8xbf16>
    %203 = vector.extract_strided_slice %138 {offsets = [0, 24], sizes = [8, 8], strides = [1, 1]} : vector<8x32xf32> to vector<8x8xf32>
    %204 = arith.truncf %203 : vector<8x8xf32> to vector<8x8xbf16>
    %cst_68 = arith.constant dense<0.000000e+00> : vector<8x8xf32>
    %205 = tpu.matmul %200, %202, %cst_68 {dimension_numbers = #tpu.dot_dimension_numbers<[1], [1], [0], [0], [0, 0, 1, 0], [], []>} : vector<8x8xbf16>, vector<8x8xbf16>, vector<8x8xf32> -> vector<8x8xf32>
    %cst_69 = arith.constant dense<0xFF800000> : vector<8xf32>
    %206 = vector.multi_reduction <maximumf>, %205, %cst_69 [1] : vector<8x8xf32> to vector<8xf32>
    %207 = vector.shape_cast %206 : vector<8xf32> to vector<8x1xf32>
    %208 = vector.broadcast %207 : vector<8x1xf32> to vector<8x8xf32>
    %209 = arith.subf %205, %208 : vector<8x8xf32>
    %210 = math.exp %209 : vector<8x8xf32>
    %cst_70 = arith.constant dense<0.000000e+00> : vector<8xf32>
    %211 = vector.multi_reduction <add>, %210, %cst_70 [1] : vector<8x8xf32> to vector<8xf32>
    %212 = vector.shape_cast %211 : vector<8xf32> to vector<8x1xf32>
    %213 = tpu.reciprocal %212 {approx = true} : vector<8x1xf32> -> vector<8x1xf32>
    %214 = vector.broadcast %213 : vector<8x1xf32> to vector<8x8xf32>
    %215 = arith.mulf %210, %214 : vector<8x8xf32>
    %216 = arith.truncf %215 : vector<8x8xf32> to vector<8x8xbf16>
    %cst_71 = arith.constant dense<0.000000e+00> : vector<8x8xf32>
    %217 = tpu.matmul %216, %204, %cst_71 {dimension_numbers = #tpu.dot_dimension_numbers<[1], [0], [0], [1], [0, 0, 1, 1], [], []>} : vector<8x8xbf16>, vector<8x8xbf16>, vector<8x8xf32> -> vector<8x8xf32>
    %c0_72 = arith.constant 0 : index
    %c24_73 = arith.constant 24 : index
    %218 = vector.load %arg15[%c0_72, %c24_73] : memref<8x32xf32, #tpu.memory_space<vmem>>, vector<8x8xf32>
    tpu.vector_store %arg15[%c0_72, %c24_73], %217 {strides = array<i32>} : memref<8x32xf32, #tpu.memory_space<vmem>>, vector<8x8xf32>,
    %c0_74 = arith.constant 0 : index
    %c0_75 = arith.constant 0 : index
    %219 = vector.load %arg15[%c0_74, %c0_75] : memref<8x32xf32, #tpu.memory_space<vmem>>, vector<8x32xf32>
    %220 = arith.truncf %219 : vector<8x32xf32> to vector<8x32xbf16>
    %c0_76 = arith.constant 0 : index
    %c0_77 = arith.constant 0 : index
    %221 = vector.load %arg9[%c0_76, %c0_77] : memref<32x32xbf16, #tpu.memory_space<vmem>>, vector<32x32xbf16>
    %cst_78 = arith.constant dense<0.000000e+00> : vector<8x32xf32>
    %222 = tpu.matmul %220, %221, %cst_78 {dimension_numbers = #tpu.dot_dimension_numbers<[1], [0], [0], [1], [0, 0, 1, 1], [], []>} : vector<8x32xbf16>, vector<32x32xbf16>, vector<8x32xf32> -> vector<8x32xf32>
    %223 = vector.extract_strided_slice %5 {offsets = [4, 0], sizes = [1, 32], strides = [1, 1]} : vector<10x32xf32> to vector<1x32xf32>
    %224 = vector.broadcast %223 : vector<1x32xf32> to vector<8x32xf32>
    %225 = arith.addf %222, %224 : vector<8x32xf32>
    %226 = arith.addf %125, %225 : vector<8x32xf32>
    %227 = vector.extract_strided_slice %5 {offsets = [5, 0], sizes = [1, 32], strides = [1, 1]} : vector<10x32xf32> to vector<1x32xf32>
    %228 = vector.extract_strided_slice %5 {offsets = [6, 0], sizes = [1, 32], strides = [1, 1]} : vector<10x32xf32> to vector<1x32xf32>
    %cst_79 = arith.constant dense<0.000000e+00> : vector<8xf32>
    %229 = vector.multi_reduction <add>, %226, %cst_79 [1] : vector<8x32xf32> to vector<8xf32>
    %230 = vector.shape_cast %229 : vector<8xf32> to vector<8x1xf32>
    %cst_80 = arith.constant 3.200000e+01 : f32
    %231 = vector.broadcast %cst_80 : f32 to vector<8x1xf32>
    %232 = arith.divf %230, %231 : vector<8x1xf32>
    %233 = vector.broadcast %232 : vector<8x1xf32> to vector<8x32xf32>
    %234 = arith.subf %226, %233 : vector<8x32xf32>
    %235 = arith.mulf %234, %234 : vector<8x32xf32>
    %cst_81 = arith.constant dense<0.000000e+00> : vector<8xf32>
    %236 = vector.multi_reduction <add>, %235, %cst_81 [1] : vector<8x32xf32> to vector<8xf32>
    %237 = vector.shape_cast %236 : vector<8xf32> to vector<8x1xf32>
    %cst_82 = arith.constant 3.200000e+01 : f32
    %238 = vector.broadcast %cst_82 : f32 to vector<8x1xf32>
    %239 = arith.divf %237, %238 : vector<8x1xf32>
    %240 = vector.broadcast %232 : vector<8x1xf32> to vector<8x32xf32>
    %241 = arith.subf %226, %240 : vector<8x32xf32>
    %cst_83 = arith.constant 9.99999974E-6 : f32
    %242 = vector.broadcast %cst_83 : f32 to vector<8x1xf32>
    %243 = arith.addf %239, %242 : vector<8x1xf32>
    %244 = math.rsqrt %243 : vector<8x1xf32>
    %245 = vector.broadcast %244 : vector<8x1xf32> to vector<8x32xf32>
    %246 = arith.mulf %241, %245 : vector<8x32xf32>
    %247 = vector.broadcast %227 : vector<1x32xf32> to vector<8x32xf32>
    %248 = arith.mulf %246, %247 : vector<8x32xf32>
    %249 = vector.broadcast %228 : vector<1x32xf32> to vector<8x32xf32>
    %250 = arith.addf %248, %249 : vector<8x32xf32>
    %251 = arith.truncf %250 : vector<8x32xf32> to vector<8x32xbf16>
    %c0_84 = arith.constant 0 : index
    %c0_85 = arith.constant 0 : index
    %252 = vector.load %arg10[%c0_84, %c0_85] : memref<32x64xbf16, #tpu.memory_space<vmem>>, vector<32x64xbf16>
    %cst_86 = arith.constant dense<0.000000e+00> : vector<8x64xf32>
    %253 = tpu.matmul %251, %252, %cst_86 {dimension_numbers = #tpu.dot_dimension_numbers<[1], [0], [0], [1], [0, 0, 1, 1], [], []>} : vector<8x32xbf16>, vector<32x64xbf16>, vector<8x64xf32> -> vector<8x64xf32>
    %c0_87 = arith.constant 0 : index
    %c0_88 = arith.constant 0 : index
    %254 = vector.load %arg11[%c0_87, %c0_88] : memref<1x64xf32, #tpu.memory_space<vmem>>, vector<1x64xf32>
    %255 = vector.broadcast %254 : vector<1x64xf32> to vector<8x64xf32>
    %256 = arith.addf %253, %255 : vector<8x64xf32>
    %cst_89 = arith.constant 0.000000e+00 : f32
    %257 = vector.broadcast %cst_89 : f32 to vector<8x64xf32>
    %258 = arith.maximumf %256, %257 : vector<8x64xf32>
    %259 = arith.truncf %258 : vector<8x64xf32> to vector<8x64xbf16>
    %c0_90 = arith.constant 0 : index
    %c0_91 = arith.constant 0 : index
    %260 = vector.load %arg12[%c0_90, %c0_91] : memref<64x32xbf16, #tpu.memory_space<vmem>>, vector<64x32xbf16>
    %cst_92 = arith.constant dense<0.000000e+00> : vector<8x32xf32>
    %261 = tpu.matmul %259, %260, %cst_92 {dimension_numbers = #tpu.dot_dimension_numbers<[1], [0], [0], [1], [0, 0, 1, 1], [], []>} : vector<8x64xbf16>, vector<64x32xbf16>, vector<8x32xf32> -> vector<8x32xf32>
    %262 = vector.extract_strided_slice %5 {offsets = [7, 0], sizes = [1, 32], strides = [1, 1]} : vector<10x32xf32> to vector<1x32xf32>
    %263 = vector.broadcast %262 : vector<1x32xf32> to vector<8x32xf32>
    %264 = arith.addf %261, %263 : vector<8x32xf32>
    %265 = arith.addf %250, %264 : vector<8x32xf32>
    %266 = vector.extract_strided_slice %5 {offsets = [8, 0], sizes = [1, 32], strides = [1, 1]} : vector<10x32xf32> to vector<1x32xf32>
    %267 = vector.extract_strided_slice %5 {offsets = [9, 0], sizes = [1, 32], strides = [1, 1]} : vector<10x32xf32> to vector<1x32xf32>
    %cst_93 = arith.constant dense<0.000000e+00> : vector<8xf32>
    %268 = vector.multi_reduction <add>, %265, %cst_93 [1] : vector<8x32xf32> to vector<8xf32>
    %269 = vector.shape_cast %268 : vector<8xf32> to vector<8x1xf32>
    %cst_94 = arith.constant 3.200000e+01 : f32
    %270 = vector.broadcast %cst_94 : f32 to vector<8x1xf32>
    %271 = arith.divf %269, %270 : vector<8x1xf32>
    %272 = vector.broadcast %271 : vector<8x1xf32> to vector<8x32xf32>
    %273 = arith.subf %265, %272 : vector<8x32xf32>
    %274 = arith.mulf %273, %273 : vector<8x32xf32>
    %cst_95 = arith.constant dense<0.000000e+00> : vector<8xf32>
    %275 = vector.multi_reduction <add>, %274, %cst_95 [1] : vector<8x32xf32> to vector<8xf32>
    %276 = vector.shape_cast %275 : vector<8xf32> to vector<8x1xf32>
    %cst_96 = arith.constant 3.200000e+01 : f32
    %277 = vector.broadcast %cst_96 : f32 to vector<8x1xf32>
    %278 = arith.divf %276, %277 : vector<8x1xf32>
    %279 = vector.broadcast %271 : vector<8x1xf32> to vector<8x32xf32>
    %280 = arith.subf %265, %279 : vector<8x32xf32>
    %cst_97 = arith.constant 9.99999974E-6 : f32
    %281 = vector.broadcast %cst_97 : f32 to vector<8x1xf32>
    %282 = arith.addf %278, %281 : vector<8x1xf32>
    %283 = math.rsqrt %282 : vector<8x1xf32>
    %284 = vector.broadcast %283 : vector<8x1xf32> to vector<8x32xf32>
    %285 = arith.mulf %280, %284 : vector<8x32xf32>
    %286 = vector.broadcast %266 : vector<1x32xf32> to vector<8x32xf32>
    %287 = arith.mulf %285, %286 : vector<8x32xf32>
    %288 = vector.broadcast %267 : vector<1x32xf32> to vector<8x32xf32>
    %289 = arith.addf %287, %288 : vector<8x32xf32>
    %290 = arith.truncf %289 : vector<8x32xf32> to vector<8x32xbf16>
    %c0_98 = arith.constant 0 : index
    %c0_99 = arith.constant 0 : index
    %c0_100 = arith.constant 0 : index
    %291 = vector.load %arg14[%c0_98, %c0_99, %c0_100] : memref<1x8x32xbf16, #tpu.memory_space<vmem>>, vector<1x8x32xbf16>
    %292 = vector.shape_cast %291 : vector<1x8x32xbf16> to vector<8x32xbf16>
    %293 = vector.shape_cast %290 : vector<8x32xbf16> to vector<1x8x32xbf16>
    tpu.vector_store %arg14[%c0_98, %c0_99, %c0_100], %293 {strides = array<i32>} : memref<1x8x32xbf16, #tpu.memory_space<vmem>>, vector<1x8x32xbf16>,
    return
  }
  func.func @transform_0(%arg0: i32) -> (i32, i32, i32) {
    %c0_i32 = arith.constant 0 : i32
    %c0_i32_0 = arith.constant 0 : i32
    %c0_i32_1 = arith.constant 0 : i32
    return %arg0, %c0_i32, %c0_i32_0 : i32, i32, i32
  }
  func.func @transform_1(%arg0: i32) -> (i32, i32, i32) {
    %c0_i32 = arith.constant 0 : i32
    %c0_i32_0 = arith.constant 0 : i32
    %c0_i32_1 = arith.constant 0 : i32
    return %arg0, %c0_i32, %c0_i32_0 : i32, i32, i32
  }
  func.func @transform_2(%arg0: i32) -> (i32, i32) {
    %c0_i32 = arith.constant 0 : i32
    %c0_i32_0 = arith.constant 0 : i32
    %c0_i32_1 = arith.constant 0 : i32
    return %c0_i32, %c0_i32_0 : i32, i32
  }
  func.func @transform_3(%arg0: i32) -> (i32, i32) {
    %c0_i32 = arith.constant 0 : i32
    %c0_i32_0 = arith.constant 0 : i32
    %c0_i32_1 = arith.constant 0 : i32
    return %c0_i32, %c0_i32_0 : i32, i32
  }
  func.func @transform_4(%arg0: i32) -> (i32, i32) {
    %c0_i32 = arith.constant 0 : i32
    %c0_i32_0 = arith.constant 0 : i32
    %c0_i32_1 = arith.constant 0 : i32
    return %c0_i32, %c0_i32_0 : i32, i32
  }
  func.func @transform_5(%arg0: i32) -> (i32, i32) {
    %c0_i32 = arith.constant 0 : i32
    %c0_i32_0 = arith.constant 0 : i32
    %c0_i32_1 = arith.constant 0 : i32
    return %c0_i32, %c0_i32_0 : i32, i32
  }
  func.func @transform_6(%arg0: i32) -> (i32, i32) {
    %c0_i32 = arith.constant 0 : i32
    %c0_i32_0 = arith.constant 0 : i32
    %c0_i32_1 = arith.constant 0 : i32
    return %c0_i32, %c0_i32_0 : i32, i32
  }
  func.func @transform_7(%arg0: i32) -> (i32, i32) {
    %c0_i32 = arith.constant 0 : i32
    %c0_i32_0 = arith.constant 0 : i32
    %c0_i32_1 = arith.constant 0 : i32
    return %c0_i32, %c0_i32_0 : i32, i32
  }
  func.func @transform_8(%arg0: i32) -> (i32, i32) {
    %c0_i32 = arith.constant 0 : i32
    %c0_i32_0 = arith.constant 0 : i32
    %c0_i32_1 = arith.constant 0 : i32
    return %c0_i32, %c0_i32_0 : i32, i32
  }
  func.func @transform_9(%arg0: i32) -> (i32, i32) {
    %c0_i32 = arith.constant 0 : i32
    %c0_i32_0 = arith.constant 0 : i32
    %c0_i32_1 = arith.constant 0 : i32
    return %c0_i32, %c0_i32_0 : i32, i32
  }
  func.func @transform_10(%arg0: i32) -> (i32, i32) {
    %c0_i32 = arith.constant 0 : i32
    %c0_i32_0 = arith.constant 0 : i32
    %c0_i32_1 = arith.constant 0 : i32
    return %c0_i32, %c0_i32_0 : i32, i32
  }
  func.func @transform_11(%arg0: i32) -> (i32, i32) {
    %c0_i32 = arith.constant 0 : i32
    %c0_i32_0 = arith.constant 0 : i32
    %c0_i32_1 = arith.constant 0 : i32
    return %c0_i32, %c0_i32_0 : i32, i32
  }
  func.func @transform_12(%arg0: i32) -> (i32, i32) {
    %c0_i32 = arith.constant 0 : i32
    %c0_i32_0 = arith.constant 0 : i32
    %c0_i32_1 = arith.constant 0 : i32
    return %c0_i32, %c0_i32_0 : i32, i32
  }
  func.func @transform_13(%arg0: i32) -> (i32, i32, i32) {
    %c0_i32 = arith.constant 0 : i32
    %c0_i32_0 = arith.constant 0 : i32
    %c0_i32_1 = arith.constant 0 : i32
    return %arg0, %c0_i32, %c0_i32_0 : i32, i32, i32
  }
}

module attributes {stable_mosaic.version = 11 : i64} {
  func.func @_head_softmax_kernel(%arg0: i32, %arg1: memref<16x32xbf16, #tpu.memory_space<vmem>>, %arg2: memref<32x128xbf16, #tpu.memory_space<vmem>>, %arg3: memref<1x128xf32, #tpu.memory_space<vmem>>, %arg4: memref<16x128xf32, #tpu.memory_space<vmem>>) attributes {dimension_semantics = [#tpu.dimension_semantics<parallel>], iteration_bounds = array<i64: 1>, scalar_prefetch = 0 : i64, scratch_operands = 0 : i64, tpu.core_type = #tpu.core_type<tc>, window_params = [{transform_indices = @transform_0, window_bounds = array<i64: 16, 32>}, {pipeline_mode = #tpu.pipeline_mode<synchronous>, transform_indices = @transform_1, window_bounds = array<i64: 32, 128>}, {pipeline_mode = #tpu.pipeline_mode<synchronous>, transform_indices = @transform_2, window_bounds = array<i64: 1, 128>}, {transform_indices = @transform_3, window_bounds = array<i64: 16, 128>}]} {
    %c0 = arith.constant 0 : index
    %c0_0 = arith.constant 0 : index
    %0 = vector.load %arg1[%c0, %c0_0] : memref<16x32xbf16, #tpu.memory_space<vmem>>, vector<16x32xbf16>
    %c0_1 = arith.constant 0 : index
    %c0_2 = arith.constant 0 : index
    %1 = vector.load %arg2[%c0_1, %c0_2] : memref<32x128xbf16, #tpu.memory_space<vmem>>, vector<32x128xbf16>
    %cst = arith.constant dense<0.000000e+00> : vector<16x128xf32>
    %2 = tpu.matmul %0, %1, %cst {dimension_numbers = #tpu.dot_dimension_numbers<[1], [0], [0], [1], [0, 0, 1, 1], [], []>} : vector<16x32xbf16>, vector<32x128xbf16>, vector<16x128xf32> -> vector<16x128xf32>
    %c0_3 = arith.constant 0 : index
    %c0_4 = arith.constant 0 : index
    %3 = vector.load %arg3[%c0_3, %c0_4] : memref<1x128xf32, #tpu.memory_space<vmem>>, vector<1x128xf32>
    %4 = vector.broadcast %3 : vector<1x128xf32> to vector<16x128xf32>
    %5 = arith.addf %2, %4 : vector<16x128xf32>
    %6 = tpu.iota {dimensions = array<i32: 1>} : vector<16x128xi32>
    %c10_i32 = arith.constant 10 : i32
    %7 = vector.broadcast %c10_i32 : i32 to vector<16x128xi32>
    %8 = arith.cmpi slt, %6, %7 : vector<16x128xi32>
    %cst_5 = arith.constant 0xFF800000 : f32
    %9 = vector.broadcast %cst_5 : f32 to vector<16x128xf32>
    %10 = arith.select %8, %5, %9 : vector<16x128xi1>, vector<16x128xf32>
    %cst_6 = arith.constant dense<0xFF800000> : vector<16xf32>
    %11 = vector.multi_reduction <maximumf>, %10, %cst_6 [1] : vector<16x128xf32> to vector<16xf32>
    %12 = vector.shape_cast %11 : vector<16xf32> to vector<16x1xf32>
    %13 = vector.broadcast %12 : vector<16x1xf32> to vector<16x128xf32>
    %14 = arith.subf %10, %13 : vector<16x128xf32>
    %15 = math.exp %14 : vector<16x128xf32>
    %cst_7 = arith.constant dense<0.000000e+00> : vector<16xf32>
    %16 = vector.multi_reduction <add>, %15, %cst_7 [1] : vector<16x128xf32> to vector<16xf32>
    %17 = vector.shape_cast %16 : vector<16xf32> to vector<16x1xf32>
    %18 = tpu.reciprocal %17 {approx = true} : vector<16x1xf32> -> vector<16x1xf32>
    %19 = vector.broadcast %18 : vector<16x1xf32> to vector<16x128xf32>
    %20 = arith.mulf %15, %19 : vector<16x128xf32>
    %c0_8 = arith.constant 0 : index
    %c0_9 = arith.constant 0 : index
    %21 = vector.load %arg4[%c0_8, %c0_9] : memref<16x128xf32, #tpu.memory_space<vmem>>, vector<16x128xf32>
    tpu.vector_store %arg4[%c0_8, %c0_9], %20 {strides = array<i32>} : memref<16x128xf32, #tpu.memory_space<vmem>>, vector<16x128xf32>,
    return
  }
  func.func @transform_0(%arg0: i32) -> (i32, i32) {
    %c0_i32 = arith.constant 0 : i32
    %c0_i32_0 = arith.constant 0 : i32
    return %arg0, %c0_i32 : i32, i32
  }
  func.func @transform_1(%arg0: i32) -> (i32, i32) {
    %c0_i32 = arith.constant 0 : i32
    %c0_i32_0 = arith.constant 0 : i32
    %c0_i32_1 = arith.constant 0 : i32
    return %c0_i32, %c0_i32_0 : i32, i32
  }
  func.func @transform_2(%arg0: i32) -> (i32, i32) {
    %c0_i32 = arith.constant 0 : i32
    %c0_i32_0 = arith.constant 0 : i32
    %c0_i32_1 = arith.constant 0 : i32
    return %c0_i32, %c0_i32_0 : i32, i32
  }
  func.func @transform_3(%arg0: i32) -> (i32, i32) {
    %c0_i32 = arith.constant 0 : i32
    %c0_i32_0 = arith.constant 0 : i32
    return %arg0, %c0_i32 : i32, i32
  }
}

</mosaic_0001>

<llo_original>
// kernel: top_former_forward.9
$region0: #{top_former_forward.9}
  #allocation0 [shape = 'u32[]', space=smem, size = 0x4, offset = 0x4, fixed_abs, tag = 'smem constant byte address 0x4 - core index']
  #allocation1 [shape = 'u32[144,128]{1,0:T(1,128)}', space=vmem, size = 0x12000, scoped, tag = 'internal scratch']
  %s0 = inlined_call_operand.vmem [shape: bf16[16,32], index: 0, kind: input, shape index: {}]
  %s1 = inlined_call_operand.vmem [shape: bf16[32,128], index: 1, kind: input, shape index: {}]
  %s2 = inlined_call_operand.vmem [shape: f32[1,128], index: 2, kind: input, shape index: {}]
  %s3 = inlined_call_operand.vmem [shape: f32[16,128], index: 3, kind: output, shape index: {}]
  %s4 = sld [smem:[#allocation0]]
  $region22: #{top_former_forward.9} parent=0
    _
  %s6 = ssub.s32 1, %s4
  %s7 = scalar_select 0, %s6, %s4
  // Predicated region
  $region2: #{top_former_forward.9} parent=0 // pred_check
    _
  $region3: #{top_former_forward.9} parent=0 // pred_check_branch
    %9 = sbr.rel (0) target = $region5
  $region4: #{top_former_forward.9} parent=0 // pred_region
    _
  $region5: #{top_former_forward.9} parent=0 // pred_fallthru
    _
  // Predicated region
  $region6: #{top_former_forward.9} parent=0 // pred_check
    _
  $region7: #{top_former_forward.9} parent=0 // pred_check_branch
    %11 = sbr.rel (0) target = $region9
  $region8: #{top_former_forward.9} parent=0 // pred_region
    _
  $region9: #{top_former_forward.9} parent=0 // pred_fallthru
    _
  // Predicated region
  $region10: #{top_former_forward.9} parent=0 // pred_check
    _
  $region11: #{top_former_forward.9} parent=0 // pred_check_branch
    %13 = sbr.rel (0) target = $region13
  $region12: #{top_former_forward.9} parent=0 // pred_region
    _
  $region13: #{top_former_forward.9} parent=0 // pred_fallthru
    _
  %v15 = vld [vmem:[%s0] sm:$0xf]
  %v16 = vld [vmem:[%s0 + $0x4] sm:$0xf]
  %v17 = vld [vmem:[%s1] sm:$0xf]
  %v18 = vld [vmem:[%s1 + $0x4] sm:$0xf]
  %v19 = vld [vmem:[%s1 + $0x8] sm:$0xf]
  %v20 = vld [vmem:[%s1 + $0xc] sm:$0xf]
  %v21 = vld [vmem:[%s2] sm:$0x1]
  %v23 = vlaneseq
  %v24 = vshrl.u32 %v23, 7
  %v25 = vsub.s32 0, %v24
  %v26 = vrot.slane %v21, %v25
  %v30 = vunpack.c.l.b16 %v15
  %v31 = vunpack.c.l.b16 %v16
  %v32 = vpack.c.b16 %v31, %v30
  %v37 = vunpack.c.l.b16 %v17
  %v38 = vunpack.c.l.b16 %v18
  %v39 = vunpack.c.l.b16 %v19
  %v40 = vunpack.c.l.b16 %v20
  %v41 = vpack.c.b16 %v38, %v37
  %v42 = vpack.c.b16 %v40, %v39
  %vm45 = vcmask 261120
  %v47 = vsel %vm45, %v32, 0
  %49 = vmatprep.subr.bf16.mxu0 0
  %50 = vmatpush1.bf16.msra.mxu0 %v41
  %51 = vmatprep.subr.bf16.mxu0 0
  %52 = vmatpush1.bf16.msra.mxu0 %v42
  %53 = vmatprep.subr.bf16.mxu0 0
  %54 = vmatpush1.bf16.msra.mxu0 0
  %55 = vmatprep.subr.bf16.mxu0 0
  %56 = vmatpush1.bf16.msra.mxu0 0
  %57 = vmatprep.subr.bf16.mxu0 0
  %58 = vmatpush1.bf16.msra.mxu0 0
  %59 = vmatprep.subr.bf16.mxu0 0
  %60 = vmatpush1.bf16.msra.mxu0 0
  %61 = vmatprep.subr.bf16.mxu0 0
  %62 = vmatpush1.bf16.msra.mxu0 0
  %63 = vmatprep.subr.bf16.mxu0 0
  %64 = vmatpush1.bf16.msra.mxu0 0
  %65 = vmatprep.subr.bf16.mxu0 0
  %66 = vmatpush1.bf16.msra.mxu0 0
  %67 = vmatprep.subr.bf16.mxu0 0
  %68 = vmatpush1.bf16.msra.mxu0 0
  %69 = vmatprep.subr.bf16.mxu0 0
  %70 = vmatpush1.bf16.msra.mxu0 0
  %71 = vmatprep.subr.bf16.mxu0 0
  %72 = vmatpush1.bf16.msra.mxu0 0
  %73 = vmatprep.subr.bf16.mxu0 0
  %74 = vmatpush1.bf16.msra.mxu0 0
  %75 = vmatprep.subr.bf16.mxu0 0
  %76 = vmatpush1.bf16.msra.mxu0 0
  %77 = vmatprep.subr.bf16.mxu0 0
  %78 = vmatpush1.bf16.msra.mxu0 0
  %79 = vmatprep.subr.bf16.mxu0 0
  %80 = vmatpush1.bf16.msra.mxu0 0
  %81 = vmatprep.mubr.bf16.mxu0 0
  %82 = vmatmul.mubr.bf16.gmra.mrb[0].mxu0 %v47
  %v83 = vpop.f32.mrb[0].mxu0
  %v84 = vadd.f32 %v26, %v83
  %v85 = vpop.f32.mrb[0].mxu0
  %v86 = vpop.f32.mrb[0].mxu0
  %v87 = vadd.f32 %v26, %v86
  %v88 = vpop.f32.mrb[0].mxu0
  %89 = vdwg.mxu0
  %v90 = vlaneseq
  %v91 = vand.u32 %v90, 127
  %vm92 = vcmp.lt.s32.totalorder %v91, 10
  %v93 = vsel %vm92, %v84, -inf
  %v94 = vsel %vm92, %v87, -inf
  %95 = vmax.xlane.f32.xlu0 %v93
  %v96 = vpop.xlane.xlu0 %95
  %97 = vmax.xlane.f32.xlu0 %v94
  %v98 = vpop.xlane.xlu0 %97
  %v99 = vsub.f32 %v93, %v96
  %v100 = vsub.f32 %v94, %v98
  %v101 = vmul.f32 %v99, 1.442695
  %v102 = vpow.pop %v101
  %v103 = vmul.f32 %v100, 1.442695
  %v104 = vpow.pop %v103
  %105 = vadd.xlane.f32.xlu0 %v102
  %v106 = vpop.xlane.xlu0 %105
  %107 = vadd.xlane.f32.xlu0 %v104
  %v108 = vpop.xlane.xlu0 %107
  %v109 = vrcp.pop %v106
  %v110 = vrcp.pop %v108
  %v111 = vmul.f32 %v102, %v109
  %v112 = vmul.f32 %v104, %v110
  %113 = vst [vmem:[%s3] sm:$0xff] %v111
  %114 = vst [vmem:[%s3 + $0x8] sm:$0xff] %v112
  // Predicated region
  $region14: #{top_former_forward.9} parent=0 // pred_check
    _
  $region15: #{top_former_forward.9} parent=0 // pred_check_branch
    %116 = sbr.rel (0) target = $region17
  $region16: #{top_former_forward.9} parent=0 // pred_region
    _
  $region17: #{top_former_forward.9} parent=0 // pred_fallthru
    _
  // Predicated region
  $region18: #{top_former_forward.9} parent=0 // pred_check
    _
  $region19: #{top_former_forward.9} parent=0 // pred_check_branch
    %118 = sbr.rel (0) target = $region21
  $region20: #{top_former_forward.9} parent=0 // pred_region
    _
  $region21: #{top_former_forward.9} parent=0 // pred_fallthru
    _

// kernel: top_former_forward.5
$region0: #{top_former_forward.5}
  #allocation0 [shape = 'u32[]', space=smem, size = 0x4, offset = 0x4, fixed_abs, tag = 'smem constant byte address 0x4 - core index']
  #allocation1 [shape = 'u32[144,128]{1,0:T(1,128)}', space=vmem, size = 0x12000, scoped, tag = 'internal scratch']
  #allocation2 [shape = 'f32[8,32]{1,0:T(8,128)}', space=vmem, size = 0x1000, scoped, tag = 'scratch operand']
  %s0 = inlined_call_operand.vmem [shape: bf16[2,8,32], index: 0, kind: input, shape index: {}]
  %s1 = inlined_call_operand.vmem [shape: bf16[32,96], index: 1, kind: input, shape index: {}]
  %s2 = inlined_call_operand.vmem [shape: f32[1,96], index: 2, kind: input, shape index: {}]
  %s3 = inlined_call_operand.vmem [shape: bf16[32,32], index: 3, kind: input, shape index: {}]
  %s4 = inlined_call_operand.vmem [shape: bf16[32,64], index: 4, kind: input, shape index: {}]
  %s5 = inlined_call_operand.vmem [shape: f32[1,64], index: 5, kind: input, shape index: {}]
  %s6 = inlined_call_operand.vmem [shape: bf16[64,32], index: 6, kind: input, shape index: {}]
  %s7 = inlined_call_operand.vmem [shape: f32[6,32], index: 7, kind: input, shape index: {}]
  %s8 = inlined_call_operand.vmem [shape: bf16[2,8,32], index: 8, kind: output, shape index: {}]
  %s9 = sld [smem:[#allocation0]]
  $region65: #{top_former_forward.5} parent=0
    _
  %s11 = ssub.s32 1, %s9
  %s12 = scalar_select 0, %s11, %s9
  loop: start=0, step=1, limit=4
  $region2: #{top_former_forward.5} parent=0 // loop_pre_header
    _
  $region3: #{top_former_forward.5} parent=0 // loop_header
    %s14 = sphi 0, %s18
    %p15 = scmp.ge.s32.totalorder %s14, 4
    %s24 = sphi 0, %s26
    %s27 = sphi 0, %s24
    %s28 = sphi 0, %s27
    %s44 = sphi 0, %s28
    %s48 = sphi 0, %s48
    %s50 = sphi 0, %s48
    %s51 = sphi 0, %s50
    %s65 = sphi 0, %s51
    %s69 = sphi 0, %s69
    %s71 = sphi 0, %s69
    %s72 = sphi 0, %s71
    %s86 = sphi 0, %s72
    %s90 = sphi 0, %s90
    %s92 = sphi 0, %s90
    %s93 = sphi 0, %s92
    %s107 = sphi 0, %s93
    %s111 = sphi 0, %s111
    %s113 = sphi 0, %s111
    %s114 = sphi 0, %s113
    %s128 = sphi 0, %s114
    %s132 = sphi 0, %s132
    %s134 = sphi 0, %s132
    %s135 = sphi 0, %s134
    %s149 = sphi 0, %s135
    %s153 = sphi 0, %s153
    %s155 = sphi 0, %s153
    %s156 = sphi 0, %s155
    %s170 = sphi 0, %s156
    %s174 = sphi 0, %s174
    %s176 = sphi 0, %s174
    %s177 = sphi 0, %s176
    %s191 = sphi 0, %s177
    %s197 = sphi 0, %s199
    %s200 = sphi 0, %s197
    %s201 = sphi 0, %s200
    %s217 = sphi 0, %s201
  $region4: #{top_former_forward.5} parent=0 // loop_header_branch
    %17 = sbr.rel (%p15) target = $region8
  $region5: #{top_former_forward.5} parent=0 // loop_body
    %s19 = ssub.s32 %s14, 1
    %s20 = ssub.s32 %s14, 2
    %s21 = sadd.s32 %s14, 1
    %s22 = ssub.s32 %s14, %s21
    %p23 = scmp.eq.s32.totalorder %s22, 0
    %s25 = sadd.s32 %s24, 1
    %s26 = scalar_select %p23, %s24, %s25
    %p29 = pneg %p23
    %p30 = scmp.eq.s32.totalorder %s14, 1
    %p31 = por %p29, %p30
    %p32 = scmp.ne.s32.totalorder %s24, %s27
    %p33 = scmp.eq.s32.totalorder %s14, 0
    %p34 = por %p32, %p33
    %p35 = scmp.ne.s32.totalorder %s24, %s27
    %p36 = scmp.eq.s32.totalorder %s19, 1
    %p37 = por %p35, %p36
    %p38 = scmp.ne.s32.totalorder %s27, %s28
    %p39 = scmp.eq.s32.totalorder %s19, 0
    %p40 = por %p38, %p39
    %p41 = scmp.ne.s32.totalorder %s27, %s28
    %p42 = scmp.eq.s32.totalorder %s20, 1
    %p43 = por %p41, %p42
    %p45 = scmp.ne.s32.totalorder %s28, %s44
    %p46 = scmp.eq.s32.totalorder %s20, 0
    %p47 = por %p45, %p46
    %s49 = sadd.s32 %s48, 1
    %p52 = scmp.eq.s32.totalorder %s14, 1
    %p53 = scmp.ne.s32.totalorder %s48, %s50
    %p54 = scmp.eq.s32.totalorder %s14, 0
    %p55 = por %p53, %p54
    %p56 = scmp.ne.s32.totalorder %s48, %s50
    %p57 = scmp.eq.s32.totalorder %s19, 1
    %p58 = por %p56, %p57
    %p59 = scmp.ne.s32.totalorder %s50, %s51
    %p60 = scmp.eq.s32.totalorder %s19, 0
    %p61 = por %p59, %p60
    %p62 = scmp.ne.s32.totalorder %s50, %s51
    %p63 = scmp.eq.s32.totalorder %s20, 1
    %p64 = por %p62, %p63
    %p66 = scmp.ne.s32.totalorder %s51, %s65
    %p67 = scmp.eq.s32.totalorder %s20, 0
    %p68 = por %p66, %p67
    %s70 = sadd.s32 %s69, 1
    %p73 = scmp.eq.s32.totalorder %s14, 1
    %p74 = scmp.ne.s32.totalorder %s69, %s71
    %p75 = scmp.eq.s32.totalorder %s14, 0
    %p76 = por %p74, %p75
    %p77 = scmp.ne.s32.totalorder %s69, %s71
    %p78 = scmp.eq.s32.totalorder %s19, 1
    %p79 = por %p77, %p78
    %p80 = scmp.ne.s32.totalorder %s71, %s72
    %p81 = scmp.eq.s32.totalorder %s19, 0
    %p82 = por %p80, %p81
    %p83 = scmp.ne.s32.totalorder %s71, %s72
    %p84 = scmp.eq.s32.totalorder %s20, 1
    %p85 = por %p83, %p84
    %p87 = scmp.ne.s32.totalorder %s72, %s86
    %p88 = scmp.eq.s32.totalorder %s20, 0
    %p89 = por %p87, %p88
    %s91 = sadd.s32 %s90, 1
    %p94 = scmp.eq.s32.totalorder %s14, 1
    %p95 = scmp.ne.s32.totalorder %s90, %s92
    %p96 = scmp.eq.s32.totalorder %s14, 0
    %p97 = por %p95, %p96
    %p98 = scmp.ne.s32.totalorder %s90, %s92
    %p99 = scmp.eq.s32.totalorder %s19, 1
    %p100 = por %p98, %p99
    %p101 = scmp.ne.s32.totalorder %s92, %s93
    %p102 = scmp.eq.s32.totalorder %s19, 0
    %p103 = por %p101, %p102
    %p104 = scmp.ne.s32.totalorder %s92, %s93
    %p105 = scmp.eq.s32.totalorder %s20, 1
    %p106 = por %p104, %p105
    %p108 = scmp.ne.s32.totalorder %s93, %s107
    %p109 = scmp.eq.s32.totalorder %s20, 0
    %p110 = por %p108, %p109
    %s112 = sadd.s32 %s111, 1
    %p115 = scmp.eq.s32.totalorder %s14, 1
    %p116 = scmp.ne.s32.totalorder %s111, %s113
    %p117 = scmp.eq.s32.totalorder %s14, 0
    %p118 = por %p116, %p117
    %p119 = scmp.ne.s32.totalorder %s111, %s113
    %p120 = scmp.eq.s32.totalorder %s19, 1
    %p121 = por %p119, %p120
    %p122 = scmp.ne.s32.totalorder %s113, %s114
    %p123 = scmp.eq.s32.totalorder %s19, 0
    %p124 = por %p122, %p123
    %p125 = scmp.ne.s32.totalorder %s113, %s114
    %p126 = scmp.eq.s32.totalorder %s20, 1
    %p127 = por %p125, %p126
    %p129 = scmp.ne.s32.totalorder %s114, %s128
    %p130 = scmp.eq.s32.totalorder %s20, 0
    %p131 = por %p129, %p130
    %s133 = sadd.s32 %s132, 1
    %p136 = scmp.eq.s32.totalorder %s14, 1
    %p137 = scmp.ne.s32.totalorder %s132, %s134
    %p138 = scmp.eq.s32.totalorder %s14, 0
    %p139 = por %p137, %p138
    %p140 = scmp.ne.s32.totalorder %s132, %s134
    %p141 = scmp.eq.s32.totalorder %s19, 1
    %p142 = por %p140, %p141
    %p143 = scmp.ne.s32.totalorder %s134, %s135
    %p144 = scmp.eq.s32.totalorder %s19, 0
    %p145 = por %p143, %p144
    %p146 = scmp.ne.s32.totalorder %s134, %s135
    %p147 = scmp.eq.s32.totalorder %s20, 1
    %p148 = por %p146, %p147
    %p150 = scmp.ne.s32.totalorder %s135, %s149
    %p151 = scmp.eq.s32.totalorder %s20, 0
    %p152 = por %p150, %p151
    %s154 = sadd.s32 %s153, 1
    %p157 = scmp.eq.s32.totalorder %s14, 1
    %p158 = scmp.ne.s32.totalorder %s153, %s155
    %p159 = scmp.eq.s32.totalorder %s14, 0
    %p160 = por %p158, %p159
    %p161 = scmp.ne.s32.totalorder %s153, %s155
    %p162 = scmp.eq.s32.totalorder %s19, 1
    %p163 = por %p161, %p162
    %p164 = scmp.ne.s32.totalorder %s155, %s156
    %p165 = scmp.eq.s32.totalorder %s19, 0
    %p166 = por %p164, %p165
    %p167 = scmp.ne.s32.totalorder %s155, %s156
    %p168 = scmp.eq.s32.totalorder %s20, 1
    %p169 = por %p167, %p168
    %p171 = scmp.ne.s32.totalorder %s156, %s170
    %p172 = scmp.eq.s32.totalorder %s20, 0
    %p173 = por %p171, %p172
    %s175 = sadd.s32 %s174, 1
    %p178 = scmp.eq.s32.totalorder %s14, 1
    %p179 = scmp.ne.s32.totalorder %s174, %s176
    %p180 = scmp.eq.s32.totalorder %s14, 0
    %p181 = por %p179, %p180
    %p182 = scmp.ne.s32.totalorder %s174, %s176
    %p183 = scmp.eq.s32.totalorder %s19, 1
    %p184 = por %p182, %p183
    %p185 = scmp.ne.s32.totalorder %s176, %s177
    %p186 = scmp.eq.s32.totalorder %s19, 0
    %p187 = por %p185, %p186
    %p188 = scmp.ne.s32.totalorder %s176, %s177
    %p189 = scmp.eq.s32.totalorder %s20, 1
    %p190 = por %p188, %p189
    %p192 = scmp.ne.s32.totalorder %s177, %s191
    %p193 = scmp.eq.s32.totalorder %s20, 0
    %p194 = por %p192, %p193
    %s195 = ssub.s32 %s14, %s21
    %p196 = scmp.eq.s32.totalorder %s195, 0
    %s198 = sadd.s32 %s197, 1
    %s199 = scalar_select %p196, %s197, %s198
    %p202 = pneg %p196
    %p203 = scmp.eq.s32.totalorder %s14, 1
    %p204 = por %p202, %p203
    %p205 = scmp.ne.s32.totalorder %s197, %s200
    %p206 = scmp.eq.s32.totalorder %s14, 0
    %p207 = por %p205, %p206
    %p208 = scmp.ne.s32.totalorder %s197, %s200
    %p209 = scmp.eq.s32.totalorder %s19, 1
    %p210 = por %p208, %p209
    %p211 = scmp.ne.s32.totalorder %s200, %s201
    %p212 = scmp.eq.s32.totalorder %s19, 0
    %p213 = por %p211, %p212
    %p214 = scmp.ne.s32.totalorder %s200, %s201
    %p215 = scmp.eq.s32.totalorder %s20, 1
    %p216 = por %p214, %p215
    %p218 = scmp.ne.s32.totalorder %s201, %s217
    %p219 = scmp.eq.s32.totalorder %s20, 0
    %p220 = por %p218, %p219
    %p221 = scmp.le.s32.totalorder 1, %s14
    %p222 = scmp.lt.s32.totalorder %s14, 3
    %p223 = pnand %p221, %p222
    %p224 = pneg %p223
    // Predicated region
    $region9: #{top_former_forward.5} parent=5 // pred_check
      _
    $region10: #{top_former_forward.5} parent=5 // pred_check_branch
      %226 = sbr.rel (%p223) target = $region12
    $region11: #{top_former_forward.5} parent=5 // pred_region
      %s227 = ssub.s32 %s14, 1
      // Predicated region
      $region13: #{top_former_forward.5} parent=11 // pred_check
        %p228 = pneg %p61
      $region14: #{top_former_forward.5} parent=11 // pred_check_branch
        %230 = sbr.rel (%p228) target = $region16
      $region15: #{top_former_forward.5} parent=11 // pred_region
        _
      $region16: #{top_former_forward.5} parent=11 // pred_fallthru
        _
      // Predicated region
      $region17: #{top_former_forward.5} parent=11 // pred_check
        %p231 = pneg %p82
      $region18: #{top_former_forward.5} parent=11 // pred_check_branch
        %233 = sbr.rel (%p231) target = $region20
      $region19: #{top_former_forward.5} parent=11 // pred_region
        _
      $region20: #{top_former_forward.5} parent=11 // pred_fallthru
        _
      // Predicated region
      $region21: #{top_former_forward.5} parent=11 // pred_check
        %p234 = pneg %p103
      $region22: #{top_former_forward.5} parent=11 // pred_check_branch
        %236 = sbr.rel (%p234) target = $region24
      $region23: #{top_former_forward.5} parent=11 // pred_region
        _
      $region24: #{top_former_forward.5} parent=11 // pred_fallthru
        _
      // Predicated region
      $region25: #{top_former_forward.5} parent=11 // pred_check
        %p237 = pneg %p124
      $region26: #{top_former_forward.5} parent=11 // pred_check_branch
        %239 = sbr.rel (%p237) target = $region28
      $region27: #{top_former_forward.5} parent=11 // pred_region
        _
      $region28: #{top_former_forward.5} parent=11 // pred_fallthru
        _
      // Predicated region
      $region29: #{top_former_forward.5} parent=11 // pred_check
        %p240 = pneg %p145
      $region30: #{top_former_forward.5} parent=11 // pred_check_branch
        %242 = sbr.rel (%p240) target = $region32
      $region31: #{top_former_forward.5} parent=11 // pred_region
        _
      $region32: #{top_former_forward.5} parent=11 // pred_fallthru
        _
      // Predicated region
      $region33: #{top_former_forward.5} parent=11 // pred_check
        %p243 = pneg %p166
      $region34: #{top_former_forward.5} parent=11 // pred_check_branch
        %245 = sbr.rel (%p243) target = $region36
      $region35: #{top_former_forward.5} parent=11 // pred_region
        _
      $region36: #{top_former_forward.5} parent=11 // pred_fallthru
        _
      // Predicated region
      $region37: #{top_former_forward.5} parent=11 // pred_check
        %p246 = pneg %p187
      $region38: #{top_former_forward.5} parent=11 // pred_check_branch
        %248 = sbr.rel (%p246) target = $region40
      $region39: #{top_former_forward.5} parent=11 // pred_region
        _
      $region40: #{top_former_forward.5} parent=11 // pred_fallthru
        _
    $region12: #{top_former_forward.5} parent=5 // pred_fallthru
      _
    %p249 = scmp.lt.s32.totalorder %s14, 2
    // Predicated region
    $region41: #{top_former_forward.5} parent=5 // pred_check
      %p250 = pneg %p249
    $region42: #{top_former_forward.5} parent=5 // pred_check_branch
      %252 = sbr.rel (%p250) target = $region44
    $region43: #{top_former_forward.5} parent=5 // pred_region
      // Predicated region
      $region45: #{top_former_forward.5} parent=43 // pred_check
        %p253 = pneg %p34
      $region46: #{top_former_forward.5} parent=43 // pred_check_branch
        %255 = sbr.rel (%p253) target = $region48
      $region47: #{top_former_forward.5} parent=43 // pred_region
        %p256 = scmp.lt.s32.totalorder %s14, 1
        %s257 = scalar_select %p256, %s14, 1
        %s258 = smul.addr %s257, 4
        %s259 = scalar_lea.vmem %s0, %s258
      $region48: #{top_former_forward.5} parent=43 // pred_fallthru
        _
    $region44: #{top_former_forward.5} parent=5 // pred_fallthru
      _
    %p260 = scmp.le.s32.totalorder 1, %s14
    %p261 = scmp.lt.s32.totalorder %s14, 3
    %p262 = pnand %p260, %p261
    %p263 = pneg %p262
    // Predicated region
    $region49: #{top_former_forward.5} parent=5 // pred_check
      _
    $region50: #{top_former_forward.5} parent=5 // pred_check_branch
      %265 = sbr.rel (%p262) target = $region52
    $region51: #{top_former_forward.5} parent=5 // pred_region
      %s266 = ssub.s32 %s14, 1
      %p267 = scmp.lt.s32.totalorder %s19, 1
      %s268 = scalar_select %p267, %s19, 1
      %s269 = smul.addr %s268, 4
      %s270 = scalar_lea.vmem %s0, %s269
      %p271 = pneg %p40
      %p272 = pneg %p37
      %p273 = pneg %p61
      %p274 = pneg %p58
      %p275 = pneg %p82
      %p276 = pneg %p79
      %p277 = pneg %p103
      %p278 = pneg %p100
      %p279 = pneg %p124
      %p280 = pneg %p121
      %p281 = pneg %p145
      %p282 = pneg %p142
      %p283 = pneg %p166
      %p284 = pneg %p163
      %p285 = pneg %p187
      %p286 = pneg %p184
      %p287 = pneg %p213
      %p288 = pneg %p210
      %p289 = scmp.lt.s32.totalorder %s19, 1
      %s290 = scalar_select %p289, %s19, 1
      %s291 = smul.addr %s290, 4
      %s292 = scalar_lea.vmem %s8, %s291
      %p293 = scmp.lt.s32.totalorder %s19, 1
      %s294 = scalar_select %p293, %s19, 1
      %s295 = smul.addr %s294, 4
      %s296 = scalar_lea.vmem %s0, %s295
      %p297 = scmp.lt.s32.totalorder %s19, 1
      %s298 = scalar_select %p297, %s19, 1
      %s299 = smul.addr %s298, 4
      %s300 = scalar_lea.vmem %s8, %s299
      %v302 = vld [vmem:[%s296] sm:$0xf]
      %v303 = vunpack.c.l.bf16 %v302
      %v304 = vld [vmem:[%s7] sm:$0x3f]
      %v305 = vld [vmem:[%s1] sm:$0xf]
      %v306 = vld [vmem:[%s1 + $0x4] sm:$0xf]
      %v307 = vld [vmem:[%s1 + $0x8] sm:$0xf]
      %v308 = vld [vmem:[%s1 + $0xc] sm:$0xf]
      %v309 = vld [vmem:[%s2] sm:$0x1]
      %v311 = vlaneseq
      %v312 = vshrl.u32 %v311, 7
      %v313 = vsub.s32 0, %v312
      %v314 = vrot.slane %v309, %v313
      %v320 = vunpack.c.l.b16 %v305
      %v321 = vunpack.c.l.b16 %v306
      %v322 = vunpack.c.l.b16 %v307
      %v323 = vunpack.c.l.b16 %v308
      %v324 = vpack.c.b16 %v321, %v320
      %v325 = vpack.c.b16 %v323, %v322
      %vm328 = vcmask 261120
      %v330 = vsel %vm328, %v302, 0
      %332 = vmatprep.subr.bf16.mxu0 0
      %333 = vmatpush1.bf16.msra.mxu0 %v324
      %334 = vmatprep.subr.bf16.mxu0 0
      %335 = vmatpush1.bf16.msra.mxu0 %v325
      %336 = vmatprep.subr.bf16.mxu0 0
      %337 = vmatpush1.bf16.msra.mxu0 0
      %338 = vmatprep.subr.bf16.mxu0 0
      %339 = vmatpush1.bf16.msra.mxu0 0
      %340 = vmatprep.subr.bf16.mxu0 0
      %341 = vmatpush1.bf16.msra.mxu0 0
      %342 = vmatprep.subr.bf16.mxu0 0
      %343 = vmatpush1.bf16.msra.mxu0 0
      %344 = vmatprep.subr.bf16.mxu0 0
      %345 = vmatpush1.bf16.msra.mxu0 0
      %346 = vmatprep.subr.bf16.mxu0 0
      %347 = vmatpush1.bf16.msra.mxu0 0
      %348 = vmatprep.subr.bf16.mxu0 0
      %349 = vmatpush1.bf16.msra.mxu0 0
      %350 = vmatprep.subr.bf16.mxu0 0
      %351 = vmatpush1.bf16.msra.mxu0 0
      %352 = vmatprep.subr.bf16.mxu0 0
      %353 = vmatpush1.bf16.msra.mxu0 0
      %354 = vmatprep.subr.bf16.mxu0 0
      %355 = vmatpush1.bf16.msra.mxu0 0
      %356 = vmatprep.subr.bf16.mxu0 0
      %357 = vmatpush1.bf16.msra.mxu0 0
      %358 = vmatprep.subr.bf16.mxu0 0
      %359 = vmatpush1.bf16.msra.mxu0 0
      %360 = vmatprep.subr.bf16.mxu0 0
      %361 = vmatpush1.bf16.msra.mxu0 0
      %362 = vmatprep.subr.bf16.mxu0 0
      %363 = vmatpush1.bf16.msra.mxu0 0
      %364 = vmatprep.mubr.bf16.mxu0 0
      %365 = vmatmul.mubr.bf16.gmra.mrb[0].mxu0 %v330
      %v366 = vpop.f32.mrb[0].mxu0
      %v367 = vadd.f32 %v314, %v366
      %v368 = vpop.f32.mrb[0].mxu0
      %v369 = vpop.f32.mrb[0].mxu0
      %v370 = vpop.f32.mrb[0].mxu0
      %371 = vdwg.mxu0
      %v372 = vpack.c.bf16 %v367, %v367
      %374 = vrot.lane.b32.xlu0 %v372, 96
      %v375 = vpop.permute.xlu0 %374
      %vm376 = vcmask 64512
      %v378 = vsel %vm376, %v372, 0
      %v381 = vsel %vm376, %v375, 0
      %383 = vmatprep.subr.bf16.mxu0 0
      %384 = vmatpush1.bf16.xpose.msra.mxu0 %v381
      %385 = vmatprep.subr.bf16.mxu0 0
      %386 = vmatpush1.bf16.xpose.msra.mxu0 0
      %387 = vmatprep.subr.bf16.mxu0 0
      %388 = vmatpush1.bf16.xpose.msra.mxu0 0
      %389 = vmatprep.subr.bf16.mxu0 0
      %390 = vmatpush1.bf16.xpose.msra.mxu0 0
      %391 = vmatprep.subr.bf16.mxu0 0
      %392 = vmatpush1.bf16.xpose.msra.mxu0 0
      %393 = vmatprep.subr.bf16.mxu0 0
      %394 = vmatpush1.bf16.xpose.msra.mxu0 0
      %395 = vmatprep.subr.bf16.mxu0 0
      %396 = vmatpush1.bf16.xpose.msra.mxu0 0
      %397 = vmatprep.subr.bf16.mxu0 0
      %398 = vmatpush1.bf16.xpose.msra.mxu0 0
      %399 = vmatprep.subr.bf16.mxu0 0
      %400 = vmatpush1.bf16.xpose.msra.mxu0 0
      %401 = vmatprep.subr.bf16.mxu0 0
      %402 = vmatpush1.bf16.xpose.msra.mxu0 0
      %403 = vmatprep.subr.bf16.mxu0 0
      %404 = vmatpush1.bf16.xpose.msra.mxu0 0
      %405 = vmatprep.subr.bf16.mxu0 0
      %406 = vmatpush1.bf16.xpose.msra.mxu0 0
      %407 = vmatprep.subr.bf16.mxu0 0
      %408 = vmatpush1.bf16.xpose.msra.mxu0 0
      %409 = vmatprep.subr.bf16.mxu0 0
      %410 = vmatpush1.bf16.xpose.msra.mxu0 0
      %411 = vmatprep.subr.bf16.mxu0 0
      %412 = vmatpush1.bf16.xpose.msra.mxu0 0
      %413 = vmatprep.subr.bf16.mxu0 0
      %414 = vmatpush1.bf16.xpose.msra.mxu0 0
      %415 = vmatprep.mubr.bf16.mxu0 0
      %416 = vmatmul.mubr.bf16.gmra.mrb[0].mxu0 %v378
      %v417 = vpop.f32.mrb[0].mxu0
      %v418 = vadd.f32 0.0, %v417
      %v419 = vpop.f32.mrb[0].mxu0
      %v420 = vpop.f32.mrb[0].mxu0
      %v421 = vpop.f32.mrb[0].mxu0
      %422 = vdwg.mxu0
      %v423 = vsel %vm376, %v418, -inf
      %424 = vmax.xlane.f32.xlu0 %v423
      %v425 = vpop.xlane.xlu0 %424
      %v426 = vsub.f32 %v418, %v425
      %v427 = vmul.f32 %v426, 1.442695
      %v428 = vpow.pop %v427
      %v429 = vsel %vm376, %v428, 0.0
      %430 = vadd.xlane.f32.xlu0 %v429
      %v431 = vpop.xlane.xlu0 %430
      %v432 = vrcp.pop %v431
      %v433 = vmul.f32 %v428, %v432
      %v434 = vpack.c.bf16 %v433, %v433
      %435 = vrot.lane.b32.xlu0 %v372, 64
      %v436 = vpop.permute.xlu0 %435
      %v438 = vsel %vm376, %v434, 0
      %vm440 = vcmask 1043456
      %v442 = vsel %vm440, %v436, 0
      %444 = vmatprep.subr.bf16.mxu0 0
      %445 = vmatpush1.bf16.msra.mxu0 %v442
      %446 = vmatprep.subr.bf16.mxu0 0
      %447 = vmatpush1.bf16.msra.mxu0 0
      %448 = vmatprep.subr.bf16.mxu0 0
      %449 = vmatpush1.bf16.msra.mxu0 0
      %450 = vmatprep.subr.bf16.mxu0 0
      %451 = vmatpush1.bf16.msra.mxu0 0
      %452 = vmatprep.subr.bf16.mxu0 0
      %453 = vmatpush1.bf16.msra.mxu0 0
      %454 = vmatprep.subr.bf16.mxu0 0
      %455 = vmatpush1.bf16.msra.mxu0 0
      %456 = vmatprep.subr.bf16.mxu0 0
      %457 = vmatpush1.bf16.msra.mxu0 0
      %458 = vmatprep.subr.bf16.mxu0 0
      %459 = vmatpush1.bf16.msra.mxu0 0
      %460 = vmatprep.subr.bf16.mxu0 0
      %461 = vmatpush1.bf16.msra.mxu0 0
      %462 = vmatprep.subr.bf16.mxu0 0
      %463 = vmatpush1.bf16.msra.mxu0 0
      %464 = vmatprep.subr.bf16.mxu0 0
      %465 = vmatpush1.bf16.msra.mxu0 0
      %466 = vmatprep.subr.bf16.mxu0 0
      %467 = vmatpush1.bf16.msra.mxu0 0
      %468 = vmatprep.subr.bf16.mxu0 0
      %469 = vmatpush1.bf16.msra.mxu0 0
      %470 = vmatprep.subr.bf16.mxu0 0
      %471 = vmatpush1.bf16.msra.mxu0 0
      %472 = vmatprep.subr.bf16.mxu0 0
      %473 = vmatpush1.bf16.msra.mxu0 0
      %474 = vmatprep.subr.bf16.mxu0 0
      %475 = vmatpush1.bf16.msra.mxu0 0
      %476 = vmatprep.mubr.bf16.mxu0 0
      %477 = vmatmul.mubr.bf16.gmra.mrb[0].mxu0 %v438
      %v478 = vpop.f32.mrb[0].mxu0
      %v479 = vadd.f32 0.0, %v478
      %v480 = vpop.f32.mrb[0].mxu0
      %v481 = vpop.f32.mrb[0].mxu0
      %v482 = vpop.f32.mrb[0].mxu0
      %483 = vdwg.mxu0
      %484 = vst.msk [vmem:[#allocation2] sm:$0xff] %vm376, %v479
      %485 = vrot.lane.b32.xlu0 %v372, 120
      %v486 = vpop.permute.xlu0 %485
      %487 = vrot.lane.b32.xlu0 %v372, 88
      %v488 = vpop.permute.xlu0 %487
      %v490 = vsel %vm376, %v486, 0
      %v493 = vsel %vm376, %v488, 0
      %495 = vmatprep.subr.bf16.mxu0 0
      %496 = vmatpush1.bf16.xpose.msra.mxu0 %v493
      %497 = vmatprep.subr.bf16.mxu0 0
      %498 = vmatpush1.bf16.xpose.msra.mxu0 0
      %499 = vmatprep.subr.bf16.mxu0 0
      %500 = vmatpush1.bf16.xpose.msra.mxu0 0
      %501 = vmatprep.subr.bf16.mxu0 0
      %502 = vmatpush1.bf16.xpose.msra.mxu0 0
      %503 = vmatprep.subr.bf16.mxu0 0
      %504 = vmatpush1.bf16.xpose.msra.mxu0 0
      %505 = vmatprep.subr.bf16.mxu0 0
      %506 = vmatpush1.bf16.xpose.msra.mxu0 0
      %507 = vmatprep.subr.bf16.mxu0 0
      %508 = vmatpush1.bf16.xpose.msra.mxu0 0
      %509 = vmatprep.subr.bf16.mxu0 0
      %510 = vmatpush1.bf16.xpose.msra.mxu0 0
      %511 = vmatprep.subr.bf16.mxu0 0
      %512 = vmatpush1.bf16.xpose.msra.mxu0 0
      %513 = vmatprep.subr.bf16.mxu0 0
      %514 = vmatpush1.bf16.xpose.msra.mxu0 0
      %515 = vmatprep.subr.bf16.mxu0 0
      %516 = vmatpush1.bf16.xpose.msra.mxu0 0
      %517 = vmatprep.subr.bf16.mxu0 0
      %518 = vmatpush1.bf16.xpose.msra.mxu0 0
      %519 = vmatprep.subr.bf16.mxu0 0
      %520 = vmatpush1.bf16.xpose.msra.mxu0 0
      %521 = vmatprep.subr.bf16.mxu0 0
      %522 = vmatpush1.bf16.xpose.msra.mxu0 0
      %523 = vmatprep.subr.bf16.mxu0 0
      %524 = vmatpush1.bf16.xpose.msra.mxu0 0
      %525 = vmatprep.subr.bf16.mxu0 0
      %526 = vmatpush1.bf16.xpose.msra.mxu0 0
      %527 = vmatprep.mubr.bf16.mxu0 0
      %528 = vmatmul.mubr.bf16.gmra.mrb[0].mxu0 %v490
      %v529 = vpop.f32.mrb[0].mxu0
      %v530 = vadd.f32 0.0, %v529
      %v531 = vpop.f32.mrb[0].mxu0
      %v532 = vpop.f32.mrb[0].mxu0
      %v533 = vpop.f32.mrb[0].mxu0
      %534 = vdwg.mxu0
      %v535 = vsel %vm376, %v530, -inf
      %536 = vmax.xlane.f32.xlu0 %v535
      %v537 = vpop.xlane.xlu0 %536
      %v538 = vsub.f32 %v530, %v537
      %v539 = vmul.f32 %v538, 1.442695
      %v540 = vpow.pop %v539
      %v541 = vsel %vm376, %v540, 0.0
      %542 = vadd.xlane.f32.xlu0 %v541
      %v543 = vpop.xlane.xlu0 %542
      %v544 = vrcp.pop %v543
      %v545 = vmul.f32 %v540, %v544
      %v546 = vpack.c.bf16 %v545, %v545
      %547 = vrot.lane.b32.xlu0 %v372, 56
      %v548 = vpop.permute.xlu0 %547
      %v550 = vsel %vm376, %v546, 0
      %v553 = vsel %vm440, %v548, 0
      %555 = vmatprep.subr.bf16.mxu0 0
      %556 = vmatpush1.bf16.msra.mxu0 %v553
      %557 = vmatprep.subr.bf16.mxu0 0
      %558 = vmatpush1.bf16.msra.mxu0 0
      %559 = vmatprep.subr.bf16.mxu0 0
      %560 = vmatpush1.bf16.msra.mxu0 0
      %561 = vmatprep.subr.bf16.mxu0 0
      %562 = vmatpush1.bf16.msra.mxu0 0
      %563 = vmatprep.subr.bf16.mxu0 0
      %564 = vmatpush1.bf16.msra.mxu0 0
      %565 = vmatprep.subr.bf16.mxu0 0
      %566 = vmatpush1.bf16.msra.mxu0 0
      %567 = vmatprep.subr.bf16.mxu0 0
      %568 = vmatpush1.bf16.msra.mxu0 0
      %569 = vmatprep.subr.bf16.mxu0 0
      %570 = vmatpush1.bf16.msra.mxu0 0
      %571 = vmatprep.subr.bf16.mxu0 0
      %572 = vmatpush1.bf16.msra.mxu0 0
      %573 = vmatprep.subr.bf16.mxu0 0
      %574 = vmatpush1.bf16.msra.mxu0 0
      %575 = vmatprep.subr.bf16.mxu0 0
      %576 = vmatpush1.bf16.msra.mxu0 0
      %577 = vmatprep.subr.bf16.mxu0 0
      %578 = vmatpush1.bf16.msra.mxu0 0
      %579 = vmatprep.subr.bf16.mxu0 0
      %580 = vmatpush1.bf16.msra.mxu0 0
      %581 = vmatprep.subr.bf16.mxu0 0
      %582 = vmatpush1.bf16.msra.mxu0 0
      %583 = vmatprep.subr.bf16.mxu0 0
      %584 = vmatpush1.bf16.msra.mxu0 0
      %585 = vmatprep.subr.bf16.mxu0 0
      %586 = vmatpush1.bf16.msra.mxu0 0
      %587 = vmatprep.mubr.bf16.mxu0 0
      %588 = vmatmul.mubr.bf16.gmra.mrb[0].mxu0 %v550
      %v589 = vpop.f32.mrb[0].mxu0
      %v590 = vadd.f32 0.0, %v589
      %v591 = vpop.f32.mrb[0].mxu0
      %v592 = vpop.f32.mrb[0].mxu0
      %v593 = vpop.f32.mrb[0].mxu0
      %594 = vdwg.mxu0
      %596 = vrot.lane.b32.xlu0 %v590, 8
      %v597 = vpop.permute.xlu0 %596
      %vm599 = vcmask 130112
      %600 = vst.msk [vmem:[#allocation2] sm:$0xff] %vm599, %v597
      %601 = vrot.lane.b32.xlu0 %v372, 112
      %v602 = vpop.permute.xlu0 %601
      %603 = vrot.lane.b32.xlu0 %v372, 80
      %v604 = vpop.permute.xlu0 %603
      %v606 = vsel %vm376, %v602, 0
      %v609 = vsel %vm376, %v604, 0
      %611 = vmatprep.subr.bf16.mxu0 0
      %612 = vmatpush1.bf16.xpose.msra.mxu0 %v609
      %613 = vmatprep.subr.bf16.mxu0 0
      %614 = vmatpush1.bf16.xpose.msra.mxu0 0
      %615 = vmatprep.subr.bf16.mxu0 0
      %616 = vmatpush1.bf16.xpose.msra.mxu0 0
      %617 = vmatprep.subr.bf16.mxu0 0
      %618 = vmatpush1.bf16.xpose.msra.mxu0 0
      %619 = vmatprep.subr.bf16.mxu0 0
      %620 = vmatpush1.bf16.xpose.msra.mxu0 0
      %621 = vmatprep.subr.bf16.mxu0 0
      %622 = vmatpush1.bf16.xpose.msra.mxu0 0
      %623 = vmatprep.subr.bf16.mxu0 0
      %624 = vmatpush1.bf16.xpose.msra.mxu0 0
      %625 = vmatprep.subr.bf16.mxu0 0
      %626 = vmatpush1.bf16.xpose.msra.mxu0 0
      %627 = vmatprep.subr.bf16.mxu0 0
      %628 = vmatpush1.bf16.xpose.msra.mxu0 0
      %629 = vmatprep.subr.bf16.mxu0 0
      %630 = vmatpush1.bf16.xpose.msra.mxu0 0
      %631 = vmatprep.subr.bf16.mxu0 0
      %632 = vmatpush1.bf16.xpose.msra.mxu0 0
      %633 = vmatprep.subr.bf16.mxu0 0
      %634 = vmatpush1.bf16.xpose.msra.mxu0 0
      %635 = vmatprep.subr.bf16.mxu0 0
      %636 = vmatpush1.bf16.xpose.msra.mxu0 0
      %637 = vmatprep.subr.bf16.mxu0 0
      %638 = vmatpush1.bf16.xpose.msra.mxu0 0
      %639 = vmatprep.subr.bf16.mxu0 0
      %640 = vmatpush1.bf16.xpose.msra.mxu0 0
      %641 = vmatprep.subr.bf16.mxu0 0
      %642 = vmatpush1.bf16.xpose.msra.mxu0 0
      %643 = vmatprep.mubr.bf16.mxu0 0
      %644 = vmatmul.mubr.bf16.gmra.mrb[0].mxu0 %v606
      %v645 = vpop.f32.mrb[0].mxu0
      %v646 = vadd.f32 0.0, %v645
      %v647 = vpop.f32.mrb[0].mxu0
      %v648 = vpop.f32.mrb[0].mxu0
      %v649 = vpop.f32.mrb[0].mxu0
      %650 = vdwg.mxu0
      %v651 = vsel %vm376, %v646, -inf
      %652 = vmax.xlane.f32.xlu0 %v651
      %v653 = vpop.xlane.xlu0 %652
      %v654 = vsub.f32 %v646, %v653
      %v655 = vmul.f32 %v654, 1.442695
      %v656 = vpow.pop %v655
      %v657 = vsel %vm376, %v656, 0.0
      %658 = vadd.xlane.f32.xlu0 %v657
      %v659 = vpop.xlane.xlu0 %658
      %v660 = vrcp.pop %v659
      %v661 = vmul.f32 %v656, %v660
      %v662 = vpack.c.bf16 %v661, %v661
      %663 = vrot.lane.b32.xlu0 %v372, 48
      %v664 = vpop.permute.xlu0 %663
      %v666 = vsel %vm376, %v662, 0
      %v669 = vsel %vm440, %v664, 0
      %671 = vmatprep.subr.bf16.mxu0 0
      %672 = vmatpush1.bf16.msra.mxu0 %v669
      %673 = vmatprep.subr.bf16.mxu0 0
      %674 = vmatpush1.bf16.msra.mxu0 0
      %675 = vmatprep.subr.bf16.mxu0 0
      %676 = vmatpush1.bf16.msra.mxu0 0
      %677 = vmatprep.subr.bf16.mxu0 0
      %678 = vmatpush1.bf16.msra.mxu0 0
      %679 = vmatprep.subr.bf16.mxu0 0
      %680 = vmatpush1.bf16.msra.mxu0 0
      %681 = vmatprep.subr.bf16.mxu0 0
      %682 = vmatpush1.bf16.msra.mxu0 0
      %683 = vmatprep.subr.bf16.mxu0 0
      %684 = vmatpush1.bf16.msra.mxu0 0
      %685 = vmatprep.subr.bf16.mxu0 0
      %686 = vmatpush1.bf16.msra.mxu0 0
      %687 = vmatprep.subr.bf16.mxu0 0
      %688 = vmatpush1.bf16.msra.mxu0 0
      %689 = vmatprep.subr.bf16.mxu0 0
      %690 = vmatpush1.bf16.msra.mxu0 0
      %691 = vmatprep.subr.bf16.mxu0 0
      %692 = vmatpush1.bf16.msra.mxu0 0
      %693 = vmatprep.subr.bf16.mxu0 0
      %694 = vmatpush1.bf16.msra.mxu0 0
      %695 = vmatprep.subr.bf16.mxu0 0
      %696 = vmatpush1.bf16.msra.mxu0 0
      %697 = vmatprep.subr.bf16.mxu0 0
      %698 = vmatpush1.bf16.msra.mxu0 0
      %699 = vmatprep.subr.bf16.mxu0 0
      %700 = vmatpush1.bf16.msra.mxu0 0
      %701 = vmatprep.subr.bf16.mxu0 0
      %702 = vmatpush1.bf16.msra.mxu0 0
      %703 = vmatprep.mubr.bf16.mxu0 0
      %704 = vmatmul.mubr.bf16.gmra.mrb[0].mxu0 %v666
      %v705 = vpop.f32.mrb[0].mxu0
      %v706 = vadd.f32 0.0, %v705
      %v707 = vpop.f32.mrb[0].mxu0
      %v708 = vpop.f32.mrb[0].mxu0
      %v709 = vpop.f32.mrb[0].mxu0
      %710 = vdwg.mxu0
      %712 = vrot.lane.b32.xlu0 %v706, 16
      %v713 = vpop.permute.xlu0 %712
      %vm715 = vcmask 195712
      %716 = vst.msk [vmem:[#allocation2] sm:$0xff] %vm715, %v713
      %717 = vrot.lane.b32.xlu0 %v372, 104
      %v718 = vpop.permute.xlu0 %717
      %719 = vrot.lane.b32.xlu0 %v372, 72
      %v720 = vpop.permute.xlu0 %719
      %v722 = vsel %vm376, %v718, 0
      %v725 = vsel %vm376, %v720, 0
      %727 = vmatprep.subr.bf16.mxu0 0
      %728 = vmatpush1.bf16.xpose.msra.mxu0 %v725
      %729 = vmatprep.subr.bf16.mxu0 0
      %730 = vmatpush1.bf16.xpose.msra.mxu0 0
      %731 = vmatprep.subr.bf16.mxu0 0
      %732 = vmatpush1.bf16.xpose.msra.mxu0 0
      %733 = vmatprep.subr.bf16.mxu0 0
      %734 = vmatpush1.bf16.xpose.msra.mxu0 0
      %735 = vmatprep.subr.bf16.mxu0 0
      %736 = vmatpush1.bf16.xpose.msra.mxu0 0
      %737 = vmatprep.subr.bf16.mxu0 0
      %738 = vmatpush1.bf16.xpose.msra.mxu0 0
      %739 = vmatprep.subr.bf16.mxu0 0
      %740 = vmatpush1.bf16.xpose.msra.mxu0 0
      %741 = vmatprep.subr.bf16.mxu0 0
      %742 = vmatpush1.bf16.xpose.msra.mxu0 0
      %743 = vmatprep.subr.bf16.mxu0 0
      %744 = vmatpush1.bf16.xpose.msra.mxu0 0
      %745 = vmatprep.subr.bf16.mxu0 0
      %746 = vmatpush1.bf16.xpose.msra.mxu0 0
      %747 = vmatprep.subr.bf16.mxu0 0
      %748 = vmatpush1.bf16.xpose.msra.mxu0 0
      %749 = vmatprep.subr.bf16.mxu0 0
      %750 = vmatpush1.bf16.xpose.msra.mxu0 0
      %751 = vmatprep.subr.bf16.mxu0 0
      %752 = vmatpush1.bf16.xpose.msra.mxu0 0
      %753 = vmatprep.subr.bf16.mxu0 0
      %754 = vmatpush1.bf16.xpose.msra.mxu0 0
      %755 = vmatprep.subr.bf16.mxu0 0
      %756 = vmatpush1.bf16.xpose.msra.mxu0 0
      %757 = vmatprep.subr.bf16.mxu0 0
      %758 = vmatpush1.bf16.xpose.msra.mxu0 0
      %759 = vmatprep.mubr.bf16.mxu0 0
      %760 = vmatmul.mubr.bf16.gmra.mrb[0].mxu0 %v722
      %v761 = vpop.f32.mrb[0].mxu0
      %v762 = vadd.f32 0.0, %v761
      %v763 = vpop.f32.mrb[0].mxu0
      %v764 = vpop.f32.mrb[0].mxu0
      %v765 = vpop.f32.mrb[0].mxu0
      %766 = vdwg.mxu0
      %v767 = vsel %vm376, %v762, -inf
      %768 = vmax.xlane.f32.xlu0 %v767
      %v769 = vpop.xlane.xlu0 %768
      %v770 = vsub.f32 %v762, %v769
      %v771 = vmul.f32 %v770, 1.442695
      %v772 = vpow.pop %v771
      %v773 = vsel %vm376, %v772, 0.0
      %774 = vadd.xlane.f32.xlu0 %v773
      %v775 = vpop.xlane.xlu0 %774
      %v776 = vrcp.pop %v775
      %v777 = vmul.f32 %v772, %v776
      %v778 = vpack.c.bf16 %v777, %v777
      %779 = vrot.lane.b32.xlu0 %v372, 40
      %v780 = vpop.permute.xlu0 %779
      %v782 = vsel %vm376, %v778, 0
      %v785 = vsel %vm440, %v780, 0
      %787 = vmatprep.subr.bf16.mxu0 0
      %788 = vmatpush1.bf16.msra.mxu0 %v785
      %789 = vmatprep.subr.bf16.mxu0 0
      %790 = vmatpush1.bf16.msra.mxu0 0
      %791 = vmatprep.subr.bf16.mxu0 0
      %792 = vmatpush1.bf16.msra.mxu0 0
      %793 = vmatprep.subr.bf16.mxu0 0
      %794 = vmatpush1.bf16.msra.mxu0 0
      %795 = vmatprep.subr.bf16.mxu0 0
      %796 = vmatpush1.bf16.msra.mxu0 0
      %797 = vmatprep.subr.bf16.mxu0 0
      %798 = vmatpush1.bf16.msra.mxu0 0
      %799 = vmatprep.subr.bf16.mxu0 0
      %800 = vmatpush1.bf16.msra.mxu0 0
      %801 = vmatprep.subr.bf16.mxu0 0
      %802 = vmatpush1.bf16.msra.mxu0 0
      %803 = vmatprep.subr.bf16.mxu0 0
      %804 = vmatpush1.bf16.msra.mxu0 0
      %805 = vmatprep.subr.bf16.mxu0 0
      %806 = vmatpush1.bf16.msra.mxu0 0
      %807 = vmatprep.subr.bf16.mxu0 0
      %808 = vmatpush1.bf16.msra.mxu0 0
      %809 = vmatprep.subr.bf16.mxu0 0
      %810 = vmatpush1.bf16.msra.mxu0 0
      %811 = vmatprep.subr.bf16.mxu0 0
      %812 = vmatpush1.bf16.msra.mxu0 0
      %813 = vmatprep.subr.bf16.mxu0 0
      %814 = vmatpush1.bf16.msra.mxu0 0
      %815 = vmatprep.subr.bf16.mxu0 0
      %816 = vmatpush1.bf16.msra.mxu0 0
      %817 = vmatprep.subr.bf16.mxu0 0
      %818 = vmatpush1.bf16.msra.mxu0 0
      %819 = vmatprep.mubr.bf16.mxu0 0
      %820 = vmatmul.mubr.bf16.gmra.mrb[0].mxu0 %v782
      %v821 = vpop.f32.mrb[0].mxu0
      %v822 = vadd.f32 0.0, %v821
      %v823 = vpop.f32.mrb[0].mxu0
      %v824 = vpop.f32.mrb[0].mxu0
      %v825 = vpop.f32.mrb[0].mxu0
      %826 = vdwg.mxu0
      %828 = vrot.lane.b32.xlu0 %v822, 24
      %v829 = vpop.permute.xlu0 %828
      %vm831 = vcmask 261312
      %832 = vst.msk [vmem:[#allocation2] sm:$0xff] %vm831, %v829
      %v833 = vld [vmem:[#allocation2] sm:$0xff]
      %v834 = vpack.c.bf16 %v833, %v833
      %v835 = vld [vmem:[%s3] sm:$0xf]
      %v836 = vld [vmem:[%s3 + $0x4] sm:$0xf]
      %v837 = vld [vmem:[%s3 + $0x8] sm:$0xf]
      %v838 = vld [vmem:[%s3 + $0xc] sm:$0xf]
      %v839 = vlaneseq
      %v840 = vshrl.u32 %v839, 7
      %v841 = vsub.s32 0, %v840
      %v842 = vrot.slane %v304, %v841
      %v847 = vunpack.c.l.b16 %v835
      %v848 = vunpack.c.l.b16 %v836
      %v849 = vunpack.c.l.b16 %v837
      %v850 = vunpack.c.l.b16 %v838
      %v851 = vpack.c.b16 %v848, %v847
      %v852 = vpack.c.b16 %v850, %v849
      %v856 = vsel %vm328, %v834, 0
      %858 = vmatprep.subr.bf16.mxu0 0
      %859 = vmatpush1.bf16.msra.mxu0 %v851
      %860 = vmatprep.subr.bf16.mxu0 0
      %861 = vmatpush1.bf16.msra.mxu0 %v852
      %862 = vmatprep.subr.bf16.mxu0 0
      %863 = vmatpush1.bf16.msra.mxu0 0
      %864 = vmatprep.subr.bf16.mxu0 0
      %865 = vmatpush1.bf16.msra.mxu0 0
      %866 = vmatprep.subr.bf16.mxu0 0
      %867 = vmatpush1.bf16.msra.mxu0 0
      %868 = vmatprep.subr.bf16.mxu0 0
      %869 = vmatpush1.bf16.msra.mxu0 0
      %870 = vmatprep.subr.bf16.mxu0 0
      %871 = vmatpush1.bf16.msra.mxu0 0
      %872 = vmatprep.subr.bf16.mxu0 0
      %873 = vmatpush1.bf16.msra.mxu0 0
      %874 = vmatprep.subr.bf16.mxu0 0
      %875 = vmatpush1.bf16.msra.mxu0 0
      %876 = vmatprep.subr.bf16.mxu0 0
      %877 = vmatpush1.bf16.msra.mxu0 0
      %878 = vmatprep.subr.bf16.mxu0 0
      %879 = vmatpush1.bf16.msra.mxu0 0
      %880 = vmatprep.subr.bf16.mxu0 0
      %881 = vmatpush1.bf16.msra.mxu0 0
      %882 = vmatprep.subr.bf16.mxu0 0
      %883 = vmatpush1.bf16.msra.mxu0 0
      %884 = vmatprep.subr.bf16.mxu0 0
      %885 = vmatpush1.bf16.msra.mxu0 0
      %886 = vmatprep.subr.bf16.mxu0 0
      %887 = vmatpush1.bf16.msra.mxu0 0
      %888 = vmatprep.subr.bf16.mxu0 0
      %889 = vmatpush1.bf16.msra.mxu0 0
      %890 = vmatprep.mubr.bf16.mxu0 0
      %891 = vmatmul.mubr.bf16.gmra.mrb[0].mxu0 %v856
      %v892 = vpop.f32.mrb[0].mxu0
      %v893 = vadd.f32 %v842, %v892
      %v894 = vpop.f32.mrb[0].mxu0
      %v895 = vpop.f32.mrb[0].mxu0
      %v896 = vpop.f32.mrb[0].mxu0
      %897 = vdwg.mxu0
      %v898 = vadd.f32 %v303, %v893
      %v899 = vsel %vm328, %v898, 0.0
      %900 = vadd.xlane.f32.xlu0 %v899
      %v901 = vpop.xlane.xlu0 %900
      %v902 = vrcp.pop 32.0
      %v903 = vmul.f32 %v901, %v902
      %v904 = vsub.f32 %v898, %v903
      %v905 = vmul.f32 %v904, %v904
      %v906 = vsel %vm328, %v905, 0.0
      %907 = vadd.xlane.f32.xlu0 %v906
      %v908 = vpop.xlane.xlu0 %907
      %v909 = vmul.f32 %v908, %v902
      %v910 = vadd.f32 %v909, 1e-05
      %v911 = vrsqrt.pop %v910
      %v912 = vmul.f32 %v904, %v911
      %v913 = vlaneseq
      %v914 = vshrl.u32 %v913, 7
      %v915 = vsub.s32 1, %v914
      %v916 = vrot.slane %v304, %v915
      %v917 = vmul.f32 %v912, %v916
      %v918 = vlaneseq
      %v919 = vshrl.u32 %v918, 7
      %v920 = vsub.s32 2, %v919
      %v921 = vrot.slane %v304, %v920
      %v922 = vadd.f32 %v917, %v921
      %v923 = vpack.c.bf16 %v922, %v922
      %v924 = vld [vmem:[%s4] sm:$0xf]
      %v925 = vld [vmem:[%s4 + $0x4] sm:$0xf]
      %v926 = vld [vmem:[%s4 + $0x8] sm:$0xf]
      %v927 = vld [vmem:[%s4 + $0xc] sm:$0xf]
      %v928 = vld [vmem:[%s5] sm:$0x1]
      %v930 = vlaneseq
      %v931 = vshrl.u32 %v930, 7
      %v932 = vsub.s32 0, %v931
      %v933 = vrot.slane %v928, %v932
      %v939 = vunpack.c.l.b16 %v924
      %v940 = vunpack.c.l.b16 %v925
      %v941 = vunpack.c.l.b16 %v926
      %v942 = vunpack.c.l.b16 %v927
      %v943 = vpack.c.b16 %v940, %v939
      %v944 = vpack.c.b16 %v942, %v941
      %v948 = vsel %vm328, %v923, 0
      %950 = vmatprep.subr.bf16.mxu0 0
      %951 = vmatpush1.bf16.msra.mxu0 %v943
      %952 = vmatprep.subr.bf16.mxu0 0
      %953 = vmatpush1.bf16.msra.mxu0 %v944
      %954 = vmatprep.subr.bf16.mxu0 0
      %955 = vmatpush1.bf16.msra.mxu0 0
      %956 = vmatprep.subr.bf16.mxu0 0
      %957 = vmatpush1.bf16.msra.mxu0 0
      %958 = vmatprep.subr.bf16.mxu0 0
      %959 = vmatpush1.bf16.msra.mxu0 0
      %960 = vmatprep.subr.bf16.mxu0 0
      %961 = vmatpush1.bf16.msra.mxu0 0
      %962 = vmatprep.subr.bf16.mxu0 0
      %963 = vmatpush1.bf16.msra.mxu0 0
      %964 = vmatprep.subr.bf16.mxu0 0
      %965 = vmatpush1.bf16.msra.mxu0 0
      %966 = vmatprep.subr.bf16.mxu0 0
      %967 = vmatpush1.bf16.msra.mxu0 0
      %968 = vmatprep.subr.bf16.mxu0 0
      %969 = vmatpush1.bf16.msra.mxu0 0
      %970 = vmatprep.subr.bf16.mxu0 0
      %971 = vmatpush1.bf16.msra.mxu0 0
      %972 = vmatprep.subr.bf16.mxu0 0
      %973 = vmatpush1.bf16.msra.mxu0 0
      %974 = vmatprep.subr.bf16.mxu0 0
      %975 = vmatpush1.bf16.msra.mxu0 0
      %976 = vmatprep.subr.bf16.mxu0 0
      %977 = vmatpush1.bf16.msra.mxu0 0
      %978 = vmatprep.subr.bf16.mxu0 0
      %979 = vmatpush1.bf16.msra.mxu0 0
      %980 = vmatprep.subr.bf16.mxu0 0
      %981 = vmatpush1.bf16.msra.mxu0 0
      %982 = vmatprep.mubr.bf16.mxu0 0
      %983 = vmatmul.mubr.bf16.gmra.mrb[0].mxu0 %v948
      %v984 = vpop.f32.mrb[0].mxu0
      %v985 = vadd.f32 %v933, %v984
      %v986 = vpop.f32.mrb[0].mxu0
      %v987 = vpop.f32.mrb[0].mxu0
      %v988 = vpop.f32.mrb[0].mxu0
      %989 = vdwg.mxu0
      %v990 = vmax.f32 %v985, 0.0
      %v991 = vpack.c.bf16 %v990, %v990
      %v992 = vld [vmem:[%s6] sm:$0xf]
      %v993 = vld [vmem:[%s6 + $0x4] sm:$0xf]
      %v994 = vld [vmem:[%s6 + $0x8] sm:$0xf]
      %v995 = vld [vmem:[%s6 + $0xc] sm:$0xf]
      %v996 = vld [vmem:[%s6 + $0x10] sm:$0xf]
      %v997 = vld [vmem:[%s6 + $0x14] sm:$0xf]
      %v998 = vld [vmem:[%s6 + $0x18] sm:$0xf]
      %v999 = vld [vmem:[%s6 + $0x1c] sm:$0xf]
      %v1000 = vlaneseq
      %v1001 = vshrl.u32 %v1000, 7
      %v1002 = vsub.s32 3, %v1001
      %v1003 = vrot.slane %v304, %v1002
      %v1012 = vunpack.c.l.b16 %v992
      %v1013 = vunpack.c.l.b16 %v993
      %v1014 = vunpack.c.l.b16 %v994
      %v1015 = vunpack.c.l.b16 %v995
      %v1016 = vunpack.c.l.b16 %v996
      %v1017 = vunpack.c.l.b16 %v997
      %v1018 = vunpack.c.l.b16 %v998
      %v1019 = vunpack.c.l.b16 %v999
      %v1020 = vpack.c.b16 %v1013, %v1012
      %v1021 = vpack.c.b16 %v1015, %v1014
      %v1022 = vpack.c.b16 %v1017, %v1016
      %v1023 = vpack.c.b16 %v1019, %v1018
      %vm1028 = vcmask 523264
      %v1030 = vsel %vm1028, %v991, 0
      %1032 = vmatprep.subr.bf16.mxu0 0
      %1033 = vmatpush1.bf16.msra.mxu0 %v1020
      %1034 = vmatprep.subr.bf16.mxu0 0
      %1035 = vmatpush1.bf16.msra.mxu0 %v1021
      %1036 = vmatprep.subr.bf16.mxu0 0
      %1037 = vmatpush1.bf16.msra.mxu0 %v1022
      %1038 = vmatprep.subr.bf16.mxu0 0
      %1039 = vmatpush1.bf16.msra.mxu0 %v1023
      %1040 = vmatprep.subr.bf16.mxu0 0
      %1041 = vmatpush1.bf16.msra.mxu0 0
      %1042 = vmatprep.subr.bf16.mxu0 0
      %1043 = vmatpush1.bf16.msra.mxu0 0
      %1044 = vmatprep.subr.bf16.mxu0 0
      %1045 = vmatpush1.bf16.msra.mxu0 0
      %1046 = vmatprep.subr.bf16.mxu0 0
      %1047 = vmatpush1.bf16.msra.mxu0 0
      %1048 = vmatprep.subr.bf16.mxu0 0
      %1049 = vmatpush1.bf16.msra.mxu0 0
      %1050 = vmatprep.subr.bf16.mxu0 0
      %1051 = vmatpush1.bf16.msra.mxu0 0
      %1052 = vmatprep.subr.bf16.mxu0 0
      %1053 = vmatpush1.bf16.msra.mxu0 0
      %1054 = vmatprep.subr.bf16.mxu0 0
      %1055 = vmatpush1.bf16.msra.mxu0 0
      %1056 = vmatprep.subr.bf16.mxu0 0
      %1057 = vmatpush1.bf16.msra.mxu0 0
      %1058 = vmatprep.subr.bf16.mxu0 0
      %1059 = vmatpush1.bf16.msra.mxu0 0
      %1060 = vmatprep.subr.bf16.mxu0 0
      %1061 = vmatpush1.bf16.msra.mxu0 0
      %1062 = vmatprep.subr.bf16.mxu0 0
      %1063 = vmatpush1.bf16.msra.mxu0 0
      %1064 = vmatprep.mubr.bf16.mxu0 0
      %1065 = vmatmul.mubr.bf16.gmra.mrb[0].mxu0 %v1030
      %v1066 = vpop.f32.mrb[0].mxu0
      %v1067 = vadd.f32 %v1003, %v1066
      %v1068 = vpop.f32.mrb[0].mxu0
      %v1069 = vpop.f32.mrb[0].mxu0
      %v1070 = vpop.f32.mrb[0].mxu0
      %1071 = vdwg.mxu0
      %v1072 = vadd.f32 %v922, %v1067
      %v1073 = vsel %vm328, %v1072, 0.0
      %1074 = vadd.xlane.f32.xlu0 %v1073
      %v1075 = vpop.xlane.xlu0 %1074
      %v1076 = vmul.f32 %v1075, %v902
      %v1077 = vsub.f32 %v1072, %v1076
      %v1078 = vmul.f32 %v1077, %v1077
      %v1079 = vsel %vm328, %v1078, 0.0
      %1080 = vadd.xlane.f32.xlu0 %v1079
      %v1081 = vpop.xlane.xlu0 %1080
      %v1082 = vmul.f32 %v1081, %v902
      %v1083 = vadd.f32 %v1082, 1e-05
      %v1084 = vrsqrt.pop %v1083
      %v1085 = vmul.f32 %v1077, %v1084
      %v1086 = vlaneseq
      %v1087 = vshrl.u32 %v1086, 7
      %v1088 = vsub.s32 4, %v1087
      %v1089 = vrot.slane %v304, %v1088
      %v1090 = vmul.f32 %v1085, %v1089
      %v1091 = vlaneseq
      %v1092 = vshrl.u32 %v1091, 7
      %v1093 = vsub.s32 5, %v1092
      %v1094 = vrot.slane %v304, %v1093
      %v1095 = vadd.f32 %v1090, %v1094
      %v1096 = vpack.c.bf16 %v1095, %v1095
      %vm1097 = vcmask 257024
      %1098 = vst.msk [vmem:[%s300] sm:$0xf] %vm1097, %v1096
      %p1099 = scmp.lt.s32.totalorder %s19, 1
      %s1100 = scalar_select %p1099, %s19, 1
      %s1101 = smul.addr %s1100, 4
      %s1102 = scalar_lea.vmem %s8, %s1101
      // Predicated region
      $region53: #{top_former_forward.5} parent=51 // pred_check
        %p1103 = pneg %p210
      $region54: #{top_former_forward.5} parent=51 // pred_check_branch
        %1105 = sbr.rel (%p1103) target = $region56
      $region55: #{top_former_forward.5} parent=51 // pred_region
        _
      $region56: #{top_former_forward.5} parent=51 // pred_fallthru
        _
    $region52: #{top_former_forward.5} parent=5 // pred_fallthru
      _
    %p1106 = scmp.le.s32.totalorder 2, %s14
    // Predicated region
    $region57: #{top_former_forward.5} parent=5 // pred_check
      %p1107 = pneg %p1106
    $region58: #{top_former_forward.5} parent=5 // pred_check_branch
      %1109 = sbr.rel (%p1107) target = $region60
    $region59: #{top_former_forward.5} parent=5 // pred_region
      %s1110 = ssub.s32 %s14, 2
      // Predicated region
      $region61: #{top_former_forward.5} parent=59 // pred_check
        %p1111 = pneg %p216
      $region62: #{top_former_forward.5} parent=59 // pred_check_branch
        %1113 = sbr.rel (%p1111) target = $region64
      $region63: #{top_former_forward.5} parent=59 // pred_region
        %p1114 = scmp.lt.s32.totalorder %s20, 1
        %s1115 = scalar_select %p1114, %s20, 1
        %s1116 = smul.addr %s1115, 4
        %s1117 = scalar_lea.vmem %s8, %s1116
      $region64: #{top_former_forward.5} parent=59 // pred_fallthru
        _
    $region60: #{top_former_forward.5} parent=5 // pred_fallthru
      _
  $region6: #{top_former_forward.5} parent=0 // loop_footer
    %s18 = sadd.s32 1, %s14
  $region7: #{top_former_forward.5} parent=0 // loop_footer_branch
    %13 = sbr.rel target = $region3
  $region8: #{top_former_forward.5} parent=0 // loop_exit
    _

// kernel: top_former_forward.7
$region0: #{top_former_forward.7}
  #allocation0 [shape = 'u32[]', space=smem, size = 0x4, offset = 0x4, fixed_abs, tag = 'smem constant byte address 0x4 - core index']
  #allocation1 [shape = 'u32[144,128]{1,0:T(1,128)}', space=vmem, size = 0x12000, scoped, tag = 'internal scratch']
  #allocation2 [shape = 'f32[8,32]{1,0:T(8,128)}', space=vmem, size = 0x1000, scoped, tag = 'scratch operand']
  %s0 = inlined_call_operand.vmem [shape: bf16[2,8,32], index: 0, kind: input, shape index: {}]
  %s1 = inlined_call_operand.vmem [shape: bf16[2,8,32], index: 1, kind: input, shape index: {}]
  %s2 = inlined_call_operand.vmem [shape: bf16[32,96], index: 2, kind: input, shape index: {}]
  %s3 = inlined_call_operand.vmem [shape: f32[1,96], index: 3, kind: input, shape index: {}]
  %s4 = inlined_call_operand.vmem [shape: bf16[32,32], index: 4, kind: input, shape index: {}]
  %s5 = inlined_call_operand.vmem [shape: bf16[32,32], index: 5, kind: input, shape index: {}]
  %s6 = inlined_call_operand.vmem [shape: bf16[32,64], index: 6, kind: input, shape index: {}]
  %s7 = inlined_call_operand.vmem [shape: f32[1,64], index: 7, kind: input, shape index: {}]
  %s8 = inlined_call_operand.vmem [shape: bf16[32,32], index: 8, kind: input, shape index: {}]
  %s9 = inlined_call_operand.vmem [shape: bf16[32,64], index: 9, kind: input, shape index: {}]
  %s10 = inlined_call_operand.vmem [shape: f32[1,64], index: 10, kind: input, shape index: {}]
  %s11 = inlined_call_operand.vmem [shape: bf16[64,32], index: 11, kind: input, shape index: {}]
  %s12 = inlined_call_operand.vmem [shape: f32[10,32], index: 12, kind: input, shape index: {}]
  %s13 = inlined_call_operand.vmem [shape: bf16[2,8,32], index: 13, kind: output, shape index: {}]
  %s14 = sld [smem:[#allocation0]]
  $region85: #{top_former_forward.7} parent=0
    _
  %s16 = ssub.s32 1, %s14
  %s17 = scalar_select 0, %s16, %s14
  loop: start=0, step=1, limit=4
  $region2: #{top_former_forward.7} parent=0 // loop_pre_header
    _
  $region3: #{top_former_forward.7} parent=0 // loop_header
    %s19 = sphi 0, %s23
    %p20 = scmp.ge.s32.totalorder %s19, 4
    %s29 = sphi 0, %s31
    %s32 = sphi 0, %s29
    %s33 = sphi 0, %s32
    %s49 = sphi 0, %s33
    %s55 = sphi 0, %s57
    %s58 = sphi 0, %s55
    %s59 = sphi 0, %s58
    %s75 = sphi 0, %s59
    %s79 = sphi 0, %s79
    %s81 = sphi 0, %s79
    %s82 = sphi 0, %s81
    %s96 = sphi 0, %s82
    %s100 = sphi 0, %s100
    %s102 = sphi 0, %s100
    %s103 = sphi 0, %s102
    %s117 = sphi 0, %s103
    %s121 = sphi 0, %s121
    %s123 = sphi 0, %s121
    %s124 = sphi 0, %s123
    %s138 = sphi 0, %s124
    %s142 = sphi 0, %s142
    %s144 = sphi 0, %s142
    %s145 = sphi 0, %s144
    %s159 = sphi 0, %s145
    %s163 = sphi 0, %s163
    %s165 = sphi 0, %s163
    %s166 = sphi 0, %s165
    %s180 = sphi 0, %s166
    %s184 = sphi 0, %s184
    %s186 = sphi 0, %s184
    %s187 = sphi 0, %s186
    %s201 = sphi 0, %s187
    %s205 = sphi 0, %s205
    %s207 = sphi 0, %s205
    %s208 = sphi 0, %s207
    %s222 = sphi 0, %s208
    %s226 = sphi 0, %s226
    %s228 = sphi 0, %s226
    %s229 = sphi 0, %s228
    %s243 = sphi 0, %s229
    %s247 = sphi 0, %s247
    %s249 = sphi 0, %s247
    %s250 = sphi 0, %s249
    %s264 = sphi 0, %s250
    %s268 = sphi 0, %s268
    %s270 = sphi 0, %s268
    %s271 = sphi 0, %s270
    %s285 = sphi 0, %s271
    %s289 = sphi 0, %s289
    %s291 = sphi 0, %s289
    %s292 = sphi 0, %s291
    %s306 = sphi 0, %s292
    %s312 = sphi 0, %s314
    %s315 = sphi 0, %s312
    %s316 = sphi 0, %s315
    %s332 = sphi 0, %s316
  $region4: #{top_former_forward.7} parent=0 // loop_header_branch
    %22 = sbr.rel (%p20) target = $region8
  $region5: #{top_former_forward.7} parent=0 // loop_body
    %s24 = ssub.s32 %s19, 1
    %s25 = ssub.s32 %s19, 2
    %s26 = sadd.s32 %s19, 1
    %s27 = ssub.s32 %s19, %s26
    %p28 = scmp.eq.s32.totalorder %s27, 0
    %s30 = sadd.s32 %s29, 1
    %s31 = scalar_select %p28, %s29, %s30
    %p34 = pneg %p28
    %p35 = scmp.eq.s32.totalorder %s19, 1
    %p36 = por %p34, %p35
    %p37 = scmp.ne.s32.totalorder %s29, %s32
    %p38 = scmp.eq.s32.totalorder %s19, 0
    %p39 = por %p37, %p38
    %p40 = scmp.ne.s32.totalorder %s29, %s32
    %p41 = scmp.eq.s32.totalorder %s24, 1
    %p42 = por %p40, %p41
    %p43 = scmp.ne.s32.totalorder %s32, %s33
    %p44 = scmp.eq.s32.totalorder %s24, 0
    %p45 = por %p43, %p44
    %p46 = scmp.ne.s32.totalorder %s32, %s33
    %p47 = scmp.eq.s32.totalorder %s25, 1
    %p48 = por %p46, %p47
    %p50 = scmp.ne.s32.totalorder %s33, %s49
    %p51 = scmp.eq.s32.totalorder %s25, 0
    %p52 = por %p50, %p51
    %s53 = ssub.s32 %s19, %s26
    %p54 = scmp.eq.s32.totalorder %s53, 0
    %s56 = sadd.s32 %s55, 1
    %s57 = scalar_select %p54, %s55, %s56
    %p60 = pneg %p54
    %p61 = scmp.eq.s32.totalorder %s19, 1
    %p62 = por %p60, %p61
    %p63 = scmp.ne.s32.totalorder %s55, %s58
    %p64 = scmp.eq.s32.totalorder %s19, 0
    %p65 = por %p63, %p64
    %p66 = scmp.ne.s32.totalorder %s55, %s58
    %p67 = scmp.eq.s32.totalorder %s24, 1
    %p68 = por %p66, %p67
    %p69 = scmp.ne.s32.totalorder %s58, %s59
    %p70 = scmp.eq.s32.totalorder %s24, 0
    %p71 = por %p69, %p70
    %p72 = scmp.ne.s32.totalorder %s58, %s59
    %p73 = scmp.eq.s32.totalorder %s25, 1
    %p74 = por %p72, %p73
    %p76 = scmp.ne.s32.totalorder %s59, %s75
    %p77 = scmp.eq.s32.totalorder %s25, 0
    %p78 = por %p76, %p77
    %s80 = sadd.s32 %s79, 1
    %p83 = scmp.eq.s32.totalorder %s19, 1
    %p84 = scmp.ne.s32.totalorder %s79, %s81
    %p85 = scmp.eq.s32.totalorder %s19, 0
    %p86 = por %p84, %p85
    %p87 = scmp.ne.s32.totalorder %s79, %s81
    %p88 = scmp.eq.s32.totalorder %s24, 1
    %p89 = por %p87, %p88
    %p90 = scmp.ne.s32.totalorder %s81, %s82
    %p91 = scmp.eq.s32.totalorder %s24, 0
    %p92 = por %p90, %p91
    %p93 = scmp.ne.s32.totalorder %s81, %s82
    %p94 = scmp.eq.s32.totalorder %s25, 1
    %p95 = por %p93, %p94
    %p97 = scmp.ne.s32.totalorder %s82, %s96
    %p98 = scmp.eq.s32.totalorder %s25, 0
    %p99 = por %p97, %p98
    %s101 = sadd.s32 %s100, 1
    %p104 = scmp.eq.s32.totalorder %s19, 1
    %p105 = scmp.ne.s32.totalorder %s100, %s102
    %p106 = scmp.eq.s32.totalorder %s19, 0
    %p107 = por %p105, %p106
    %p108 = scmp.ne.s32.totalorder %s100, %s102
    %p109 = scmp.eq.s32.totalorder %s24, 1
    %p110 = por %p108, %p109
    %p111 = scmp.ne.s32.totalorder %s102, %s103
    %p112 = scmp.eq.s32.totalorder %s24, 0
    %p113 = por %p111, %p112
    %p114 = scmp.ne.s32.totalorder %s102, %s103
    %p115 = scmp.eq.s32.totalorder %s25, 1
    %p116 = por %p114, %p115
    %p118 = scmp.ne.s32.totalorder %s103, %s117
    %p119 = scmp.eq.s32.totalorder %s25, 0
    %p120 = por %p118, %p119
    %s122 = sadd.s32 %s121, 1
    %p125 = scmp.eq.s32.totalorder %s19, 1
    %p126 = scmp.ne.s32.totalorder %s121, %s123
    %p127 = scmp.eq.s32.totalorder %s19, 0
    %p128 = por %p126, %p127
    %p129 = scmp.ne.s32.totalorder %s121, %s123
    %p130 = scmp.eq.s32.totalorder %s24, 1
    %p131 = por %p129, %p130
    %p132 = scmp.ne.s32.totalorder %s123, %s124
    %p133 = scmp.eq.s32.totalorder %s24, 0
    %p134 = por %p132, %p133
    %p135 = scmp.ne.s32.totalorder %s123, %s124
    %p136 = scmp.eq.s32.totalorder %s25, 1
    %p137 = por %p135, %p136
    %p139 = scmp.ne.s32.totalorder %s124, %s138
    %p140 = scmp.eq.s32.totalorder %s25, 0
    %p141 = por %p139, %p140
    %s143 = sadd.s32 %s142, 1
    %p146 = scmp.eq.s32.totalorder %s19, 1
    %p147 = scmp.ne.s32.totalorder %s142, %s144
    %p148 = scmp.eq.s32.totalorder %s19, 0
    %p149 = por %p147, %p148
    %p150 = scmp.ne.s32.totalorder %s142, %s144
    %p151 = scmp.eq.s32.totalorder %s24, 1
    %p152 = por %p150, %p151
    %p153 = scmp.ne.s32.totalorder %s144, %s145
    %p154 = scmp.eq.s32.totalorder %s24, 0
    %p155 = por %p153, %p154
    %p156 = scmp.ne.s32.totalorder %s144, %s145
    %p157 = scmp.eq.s32.totalorder %s25, 1
    %p158 = por %p156, %p157
    %p160 = scmp.ne.s32.totalorder %s145, %s159
    %p161 = scmp.eq.s32.totalorder %s25, 0
    %p162 = por %p160, %p161
    %s164 = sadd.s32 %s163, 1
    %p167 = scmp.eq.s32.totalorder %s19, 1
    %p168 = scmp.ne.s32.totalorder %s163, %s165
    %p169 = scmp.eq.s32.totalorder %s19, 0
    %p170 = por %p168, %p169
    %p171 = scmp.ne.s32.totalorder %s163, %s165
    %p172 = scmp.eq.s32.totalorder %s24, 1
    %p173 = por %p171, %p172
    %p174 = scmp.ne.s32.totalorder %s165, %s166
    %p175 = scmp.eq.s32.totalorder %s24, 0
    %p176 = por %p174, %p175
    %p177 = scmp.ne.s32.totalorder %s165, %s166
    %p178 = scmp.eq.s32.totalorder %s25, 1
    %p179 = por %p177, %p178
    %p181 = scmp.ne.s32.totalorder %s166, %s180
    %p182 = scmp.eq.s32.totalorder %s25, 0
    %p183 = por %p181, %p182
    %s185 = sadd.s32 %s184, 1
    %p188 = scmp.eq.s32.totalorder %s19, 1
    %p189 = scmp.ne.s32.totalorder %s184, %s186
    %p190 = scmp.eq.s32.totalorder %s19, 0
    %p191 = por %p189, %p190
    %p192 = scmp.ne.s32.totalorder %s184, %s186
    %p193 = scmp.eq.s32.totalorder %s24, 1
    %p194 = por %p192, %p193
    %p195 = scmp.ne.s32.totalorder %s186, %s187
    %p196 = scmp.eq.s32.totalorder %s24, 0
    %p197 = por %p195, %p196
    %p198 = scmp.ne.s32.totalorder %s186, %s187
    %p199 = scmp.eq.s32.totalorder %s25, 1
    %p200 = por %p198, %p199
    %p202 = scmp.ne.s32.totalorder %s187, %s201
    %p203 = scmp.eq.s32.totalorder %s25, 0
    %p204 = por %p202, %p203
    %s206 = sadd.s32 %s205, 1
    %p209 = scmp.eq.s32.totalorder %s19, 1
    %p210 = scmp.ne.s32.totalorder %s205, %s207
    %p211 = scmp.eq.s32.totalorder %s19, 0
    %p212 = por %p210, %p211
    %p213 = scmp.ne.s32.totalorder %s205, %s207
    %p214 = scmp.eq.s32.totalorder %s24, 1
    %p215 = por %p213, %p214
    %p216 = scmp.ne.s32.totalorder %s207, %s208
    %p217 = scmp.eq.s32.totalorder %s24, 0
    %p218 = por %p216, %p217
    %p219 = scmp.ne.s32.totalorder %s207, %s208
    %p220 = scmp.eq.s32.totalorder %s25, 1
    %p221 = por %p219, %p220
    %p223 = scmp.ne.s32.totalorder %s208, %s222
    %p224 = scmp.eq.s32.totalorder %s25, 0
    %p225 = por %p223, %p224
    %s227 = sadd.s32 %s226, 1
    %p230 = scmp.eq.s32.totalorder %s19, 1
    %p231 = scmp.ne.s32.totalorder %s226, %s228
    %p232 = scmp.eq.s32.totalorder %s19, 0
    %p233 = por %p231, %p232
    %p234 = scmp.ne.s32.totalorder %s226, %s228
    %p235 = scmp.eq.s32.totalorder %s24, 1
    %p236 = por %p234, %p235
    %p237 = scmp.ne.s32.totalorder %s228, %s229
    %p238 = scmp.eq.s32.totalorder %s24, 0
    %p239 = por %p237, %p238
    %p240 = scmp.ne.s32.totalorder %s228, %s229
    %p241 = scmp.eq.s32.totalorder %s25, 1
    %p242 = por %p240, %p241
    %p244 = scmp.ne.s32.totalorder %s229, %s243
    %p245 = scmp.eq.s32.totalorder %s25, 0
    %p246 = por %p244, %p245
    %s248 = sadd.s32 %s247, 1
    %p251 = scmp.eq.s32.totalorder %s19, 1
    %p252 = scmp.ne.s32.totalorder %s247, %s249
    %p253 = scmp.eq.s32.totalorder %s19, 0
    %p254 = por %p252, %p253
    %p255 = scmp.ne.s32.totalorder %s247, %s249
    %p256 = scmp.eq.s32.totalorder %s24, 1
    %p257 = por %p255, %p256
    %p258 = scmp.ne.s32.totalorder %s249, %s250
    %p259 = scmp.eq.s32.totalorder %s24, 0
    %p260 = por %p258, %p259
    %p261 = scmp.ne.s32.totalorder %s249, %s250
    %p262 = scmp.eq.s32.totalorder %s25, 1
    %p263 = por %p261, %p262
    %p265 = scmp.ne.s32.totalorder %s250, %s264
    %p266 = scmp.eq.s32.totalorder %s25, 0
    %p267 = por %p265, %p266
    %s269 = sadd.s32 %s268, 1
    %p272 = scmp.eq.s32.totalorder %s19, 1
    %p273 = scmp.ne.s32.totalorder %s268, %s270
    %p274 = scmp.eq.s32.totalorder %s19, 0
    %p275 = por %p273, %p274
    %p276 = scmp.ne.s32.totalorder %s268, %s270
    %p277 = scmp.eq.s32.totalorder %s24, 1
    %p278 = por %p276, %p277
    %p279 = scmp.ne.s32.totalorder %s270, %s271
    %p280 = scmp.eq.s32.totalorder %s24, 0
    %p281 = por %p279, %p280
    %p282 = scmp.ne.s32.totalorder %s270, %s271
    %p283 = scmp.eq.s32.totalorder %s25, 1
    %p284 = por %p282, %p283
    %p286 = scmp.ne.s32.totalorder %s271, %s285
    %p287 = scmp.eq.s32.totalorder %s25, 0
    %p288 = por %p286, %p287
    %s290 = sadd.s32 %s289, 1
    %p293 = scmp.eq.s32.totalorder %s19, 1
    %p294 = scmp.ne.s32.totalorder %s289, %s291
    %p295 = scmp.eq.s32.totalorder %s19, 0
    %p296 = por %p294, %p295
    %p297 = scmp.ne.s32.totalorder %s289, %s291
    %p298 = scmp.eq.s32.totalorder %s24, 1
    %p299 = por %p297, %p298
    %p300 = scmp.ne.s32.totalorder %s291, %s292
    %p301 = scmp.eq.s32.totalorder %s24, 0
    %p302 = por %p300, %p301
    %p303 = scmp.ne.s32.totalorder %s291, %s292
    %p304 = scmp.eq.s32.totalorder %s25, 1
    %p305 = por %p303, %p304
    %p307 = scmp.ne.s32.totalorder %s292, %s306
    %p308 = scmp.eq.s32.totalorder %s25, 0
    %p309 = por %p307, %p308
    %s310 = ssub.s32 %s19, %s26
    %p311 = scmp.eq.s32.totalorder %s310, 0
    %s313 = sadd.s32 %s312, 1
    %s314 = scalar_select %p311, %s312, %s313
    %p317 = pneg %p311
    %p318 = scmp.eq.s32.totalorder %s19, 1
    %p319 = por %p317, %p318
    %p320 = scmp.ne.s32.totalorder %s312, %s315
    %p321 = scmp.eq.s32.totalorder %s19, 0
    %p322 = por %p320, %p321
    %p323 = scmp.ne.s32.totalorder %s312, %s315
    %p324 = scmp.eq.s32.totalorder %s24, 1
    %p325 = por %p323, %p324
    %p326 = scmp.ne.s32.totalorder %s315, %s316
    %p327 = scmp.eq.s32.totalorder %s24, 0
    %p328 = por %p326, %p327
    %p329 = scmp.ne.s32.totalorder %s315, %s316
    %p330 = scmp.eq.s32.totalorder %s25, 1
    %p331 = por %p329, %p330
    %p333 = scmp.ne.s32.totalorder %s316, %s332
    %p334 = scmp.eq.s32.totalorder %s25, 0
    %p335 = por %p333, %p334
    %p336 = scmp.le.s32.totalorder 1, %s19
    %p337 = scmp.lt.s32.totalorder %s19, 3
    %p338 = pnand %p336, %p337
    %p339 = pneg %p338
    // Predicated region
    $region9: #{top_former_forward.7} parent=5 // pred_check
      _
    $region10: #{top_former_forward.7} parent=5 // pred_check_branch
      %341 = sbr.rel (%p338) target = $region12
    $region11: #{top_former_forward.7} parent=5 // pred_region
      %s342 = ssub.s32 %s19, 1
      // Predicated region
      $region13: #{top_former_forward.7} parent=11 // pred_check
        %p343 = pneg %p92
      $region14: #{top_former_forward.7} parent=11 // pred_check_branch
        %345 = sbr.rel (%p343) target = $region16
      $region15: #{top_former_forward.7} parent=11 // pred_region
        _
      $region16: #{top_former_forward.7} parent=11 // pred_fallthru
        _
      // Predicated region
      $region17: #{top_former_forward.7} parent=11 // pred_check
        %p346 = pneg %p113
      $region18: #{top_former_forward.7} parent=11 // pred_check_branch
        %348 = sbr.rel (%p346) target = $region20
      $region19: #{top_former_forward.7} parent=11 // pred_region
        _
      $region20: #{top_former_forward.7} parent=11 // pred_fallthru
        _
      // Predicated region
      $region21: #{top_former_forward.7} parent=11 // pred_check
        %p349 = pneg %p134
      $region22: #{top_former_forward.7} parent=11 // pred_check_branch
        %351 = sbr.rel (%p349) target = $region24
      $region23: #{top_former_forward.7} parent=11 // pred_region
        _
      $region24: #{top_former_forward.7} parent=11 // pred_fallthru
        _
      // Predicated region
      $region25: #{top_former_forward.7} parent=11 // pred_check
        %p352 = pneg %p155
      $region26: #{top_former_forward.7} parent=11 // pred_check_branch
        %354 = sbr.rel (%p352) target = $region28
      $region27: #{top_former_forward.7} parent=11 // pred_region
        _
      $region28: #{top_former_forward.7} parent=11 // pred_fallthru
        _
      // Predicated region
      $region29: #{top_former_forward.7} parent=11 // pred_check
        %p355 = pneg %p176
      $region30: #{top_former_forward.7} parent=11 // pred_check_branch
        %357 = sbr.rel (%p355) target = $region32
      $region31: #{top_former_forward.7} parent=11 // pred_region
        _
      $region32: #{top_former_forward.7} parent=11 // pred_fallthru
        _
      // Predicated region
      $region33: #{top_former_forward.7} parent=11 // pred_check
        %p358 = pneg %p197
      $region34: #{top_former_forward.7} parent=11 // pred_check_branch
        %360 = sbr.rel (%p358) target = $region36
      $region35: #{top_former_forward.7} parent=11 // pred_region
        _
      $region36: #{top_former_forward.7} parent=11 // pred_fallthru
        _
      // Predicated region
      $region37: #{top_former_forward.7} parent=11 // pred_check
        %p361 = pneg %p218
      $region38: #{top_former_forward.7} parent=11 // pred_check_branch
        %363 = sbr.rel (%p361) target = $region40
      $region39: #{top_former_forward.7} parent=11 // pred_region
        _
      $region40: #{top_former_forward.7} parent=11 // pred_fallthru
        _
      // Predicated region
      $region41: #{top_former_forward.7} parent=11 // pred_check
        %p364 = pneg %p239
      $region42: #{top_former_forward.7} parent=11 // pred_check_branch
        %366 = sbr.rel (%p364) target = $region44
      $region43: #{top_former_forward.7} parent=11 // pred_region
        _
      $region44: #{top_former_forward.7} parent=11 // pred_fallthru
        _
      // Predicated region
      $region45: #{top_former_forward.7} parent=11 // pred_check
        %p367 = pneg %p260
      $region46: #{top_former_forward.7} parent=11 // pred_check_branch
        %369 = sbr.rel (%p367) target = $region48
      $region47: #{top_former_forward.7} parent=11 // pred_region
        _
      $region48: #{top_former_forward.7} parent=11 // pred_fallthru
        _
      // Predicated region
      $region49: #{top_former_forward.7} parent=11 // pred_check
        %p370 = pneg %p281
      $region50: #{top_former_forward.7} parent=11 // pred_check_branch
        %372 = sbr.rel (%p370) target = $region52
      $region51: #{top_former_forward.7} parent=11 // pred_region
        _
      $region52: #{top_former_forward.7} parent=11 // pred_fallthru
        _
      // Predicated region
      $region53: #{top_former_forward.7} parent=11 // pred_check
        %p373 = pneg %p302
      $region54: #{top_former_forward.7} parent=11 // pred_check_branch
        %375 = sbr.rel (%p373) target = $region56
      $region55: #{top_former_forward.7} parent=11 // pred_region
        _
      $region56: #{top_former_forward.7} parent=11 // pred_fallthru
        _
    $region12: #{top_former_forward.7} parent=5 // pred_fallthru
      _
    %p376 = scmp.lt.s32.totalorder %s19, 2
    // Predicated region
    $region57: #{top_former_forward.7} parent=5 // pred_check
      %p377 = pneg %p376
    $region58: #{top_former_forward.7} parent=5 // pred_check_branch
      %379 = sbr.rel (%p377) target = $region60
    $region59: #{top_former_forward.7} parent=5 // pred_region
      // Predicated region
      $region61: #{top_former_forward.7} parent=59 // pred_check
        %p380 = pneg %p39
      $region62: #{top_former_forward.7} parent=59 // pred_check_branch
        %382 = sbr.rel (%p380) target = $region64
      $region63: #{top_former_forward.7} parent=59 // pred_region
        %p383 = scmp.lt.s32.totalorder %s19, 1
        %s384 = scalar_select %p383, %s19, 1
        %s385 = smul.addr %s384, 4
        %s386 = scalar_lea.vmem %s0, %s385
      $region64: #{top_former_forward.7} parent=59 // pred_fallthru
        _
      // Predicated region
      $region65: #{top_former_forward.7} parent=59 // pred_check
        %p387 = pneg %p65
      $region66: #{top_former_forward.7} parent=59 // pred_check_branch
        %389 = sbr.rel (%p387) target = $region68
      $region67: #{top_former_forward.7} parent=59 // pred_region
        %p390 = scmp.lt.s32.totalorder %s19, 1
        %s391 = scalar_select %p390, %s19, 1
        %s392 = smul.addr %s391, 4
        %s393 = scalar_lea.vmem %s1, %s392
      $region68: #{top_former_forward.7} parent=59 // pred_fallthru
        _
    $region60: #{top_former_forward.7} parent=5 // pred_fallthru
      _
    %p394 = scmp.le.s32.totalorder 1, %s19
    %p395 = scmp.lt.s32.totalorder %s19, 3
    %p396 = pnand %p394, %p395
    %p397 = pneg %p396
    // Predicated region
    $region69: #{top_former_forward.7} parent=5 // pred_check
      _
    $region70: #{top_former_forward.7} parent=5 // pred_check_branch
      %399 = sbr.rel (%p396) target = $region72
    $region71: #{top_former_forward.7} parent=5 // pred_region
      %s400 = ssub.s32 %s19, 1
      %p401 = scmp.lt.s32.totalorder %s24, 1
      %s402 = scalar_select %p401, %s24, 1
      %s403 = smul.addr %s402, 4
      %s404 = scalar_lea.vmem %s0, %s403
      %p405 = pneg %p45
      %p406 = pneg %p42
      %p407 = scmp.lt.s32.totalorder %s24, 1
      %s408 = scalar_select %p407, %s24, 1
      %s409 = smul.addr %s408, 4
      %s410 = scalar_lea.vmem %s1, %s409
      %p411 = pneg %p71
      %p412 = pneg %p68
      %p413 = pneg %p92
      %p414 = pneg %p89
      %p415 = pneg %p113
      %p416 = pneg %p110
      %p417 = pneg %p134
      %p418 = pneg %p131
      %p419 = pneg %p155
      %p420 = pneg %p152
      %p421 = pneg %p176
      %p422 = pneg %p173
      %p423 = pneg %p197
      %p424 = pneg %p194
      %p425 = pneg %p218
      %p426 = pneg %p215
      %p427 = pneg %p239
      %p428 = pneg %p236
      %p429 = pneg %p260
      %p430 = pneg %p257
      %p431 = pneg %p281
      %p432 = pneg %p278
      %p433 = pneg %p302
      %p434 = pneg %p299
      %p435 = pneg %p328
      %p436 = pneg %p325
      %p437 = scmp.lt.s32.totalorder %s24, 1
      %s438 = scalar_select %p437, %s24, 1
      %s439 = smul.addr %s438, 4
      %s440 = scalar_lea.vmem %s13, %s439
      %p441 = scmp.lt.s32.totalorder %s24, 1
      %s442 = scalar_select %p441, %s24, 1
      %s443 = smul.addr %s442, 4
      %s444 = scalar_lea.vmem %s0, %s443
      %p445 = scmp.lt.s32.totalorder %s24, 1
      %s446 = scalar_select %p445, %s24, 1
      %s447 = smul.addr %s446, 4
      %s448 = scalar_lea.vmem %s1, %s447
      %p449 = scmp.lt.s32.totalorder %s24, 1
      %s450 = scalar_select %p449, %s24, 1
      %s451 = smul.addr %s450, 4
      %s452 = scalar_lea.vmem %s13, %s451
      %v454 = vld [vmem:[%s444] sm:$0xf]
      %v455 = vunpack.c.l.bf16 %v454
      %v456 = vld [vmem:[%s448] sm:$0xf]
      %v457 = vld [vmem:[%s12] sm:$0xff]
      %v458 = vld [vmem:[%s12 + $0x8] sm:$0x3]
      %v459 = vld [vmem:[%s2] sm:$0xf]
      %v460 = vld [vmem:[%s2 + $0x4] sm:$0xf]
      %v461 = vld [vmem:[%s2 + $0x8] sm:$0xf]
      %v462 = vld [vmem:[%s2 + $0xc] sm:$0xf]
      %v463 = vld [vmem:[%s3] sm:$0x1]
      %v465 = vlaneseq
      %v466 = vshrl.u32 %v465, 7
      %v467 = vsub.s32 0, %v466
      %v468 = vrot.slane %v463, %v467
      %v474 = vunpack.c.l.b16 %v459
      %v475 = vunpack.c.l.b16 %v460
      %v476 = vunpack.c.l.b16 %v461
      %v477 = vunpack.c.l.b16 %v462
      %v478 = vpack.c.b16 %v475, %v474
      %v479 = vpack.c.b16 %v477, %v476
      %vm482 = vcmask 261120
      %v484 = vsel %vm482, %v454, 0
      %486 = vmatprep.subr.bf16.mxu0 0
      %487 = vmatpush1.bf16.msra.mxu0 %v478
      %488 = vmatprep.subr.bf16.mxu0 0
      %489 = vmatpush1.bf16.msra.mxu0 %v479
      %490 = vmatprep.subr.bf16.mxu0 0
      %491 = vmatpush1.bf16.msra.mxu0 0
      %492 = vmatprep.subr.bf16.mxu0 0
      %493 = vmatpush1.bf16.msra.mxu0 0
      %494 = vmatprep.subr.bf16.mxu0 0
      %495 = vmatpush1.bf16.msra.mxu0 0
      %496 = vmatprep.subr.bf16.mxu0 0
      %497 = vmatpush1.bf16.msra.mxu0 0
      %498 = vmatprep.subr.bf16.mxu0 0
      %499 = vmatpush1.bf16.msra.mxu0 0
      %500 = vmatprep.subr.bf16.mxu0 0
      %501 = vmatpush1.bf16.msra.mxu0 0
      %502 = vmatprep.subr.bf16.mxu0 0
      %503 = vmatpush1.bf16.msra.mxu0 0
      %504 = vmatprep.subr.bf16.mxu0 0
      %505 = vmatpush1.bf16.msra.mxu0 0
      %506 = vmatprep.subr.bf16.mxu0 0
      %507 = vmatpush1.bf16.msra.mxu0 0
      %508 = vmatprep.subr.bf16.mxu0 0
      %509 = vmatpush1.bf16.msra.mxu0 0
      %510 = vmatprep.subr.bf16.mxu0 0
      %511 = vmatpush1.bf16.msra.mxu0 0
      %512 = vmatprep.subr.bf16.mxu0 0
      %513 = vmatpush1.bf16.msra.mxu0 0
      %514 = vmatprep.subr.bf16.mxu0 0
      %515 = vmatpush1.bf16.msra.mxu0 0
      %516 = vmatprep.subr.bf16.mxu0 0
      %517 = vmatpush1.bf16.msra.mxu0 0
      %518 = vmatprep.mubr.bf16.mxu0 0
      %519 = vmatmul.mubr.bf16.gmra.mrb[0].mxu0 %v484
      %v520 = vpop.f32.mrb[0].mxu0
      %v521 = vadd.f32 %v468, %v520
      %v522 = vpop.f32.mrb[0].mxu0
      %v523 = vpop.f32.mrb[0].mxu0
      %v524 = vpop.f32.mrb[0].mxu0
      %525 = vdwg.mxu0
      %v526 = vpack.c.bf16 %v521, %v521
      %528 = vrot.lane.b32.xlu0 %v526, 96
      %v529 = vpop.permute.xlu0 %528
      %vm530 = vcmask 64512
      %v532 = vsel %vm530, %v526, 0
      %v535 = vsel %vm530, %v529, 0
      %537 = vmatprep.subr.bf16.mxu0 0
      %538 = vmatpush1.bf16.xpose.msra.mxu0 %v535
      %539 = vmatprep.subr.bf16.mxu0 0
      %540 = vmatpush1.bf16.xpose.msra.mxu0 0
      %541 = vmatprep.subr.bf16.mxu0 0
      %542 = vmatpush1.bf16.xpose.msra.mxu0 0
      %543 = vmatprep.subr.bf16.mxu0 0
      %544 = vmatpush1.bf16.xpose.msra.mxu0 0
      %545 = vmatprep.subr.bf16.mxu0 0
      %546 = vmatpush1.bf16.xpose.msra.mxu0 0
      %547 = vmatprep.subr.bf16.mxu0 0
      %548 = vmatpush1.bf16.xpose.msra.mxu0 0
      %549 = vmatprep.subr.bf16.mxu0 0
      %550 = vmatpush1.bf16.xpose.msra.mxu0 0
      %551 = vmatprep.subr.bf16.mxu0 0
      %552 = vmatpush1.bf16.xpose.msra.mxu0 0
      %553 = vmatprep.subr.bf16.mxu0 0
      %554 = vmatpush1.bf16.xpose.msra.mxu0 0
      %555 = vmatprep.subr.bf16.mxu0 0
      %556 = vmatpush1.bf16.xpose.msra.mxu0 0
      %557 = vmatprep.subr.bf16.mxu0 0
      %558 = vmatpush1.bf16.xpose.msra.mxu0 0
      %559 = vmatprep.subr.bf16.mxu0 0
      %560 = vmatpush1.bf16.xpose.msra.mxu0 0
      %561 = vmatprep.subr.bf16.mxu0 0
      %562 = vmatpush1.bf16.xpose.msra.mxu0 0
      %563 = vmatprep.subr.bf16.mxu0 0
      %564 = vmatpush1.bf16.xpose.msra.mxu0 0
      %565 = vmatprep.subr.bf16.mxu0 0
      %566 = vmatpush1.bf16.xpose.msra.mxu0 0
      %567 = vmatprep.subr.bf16.mxu0 0
      %568 = vmatpush1.bf16.xpose.msra.mxu0 0
      %569 = vmatprep.mubr.bf16.mxu0 0
      %570 = vmatmul.mubr.bf16.gmra.mrb[0].mxu0 %v532
      %v571 = vpop.f32.mrb[0].mxu0
      %v572 = vadd.f32 0.0, %v571
      %v573 = vpop.f32.mrb[0].mxu0
      %v574 = vpop.f32.mrb[0].mxu0
      %v575 = vpop.f32.mrb[0].mxu0
      %576 = vdwg.mxu0
      %v577 = vsel %vm530, %v572, -inf
      %578 = vmax.xlane.f32.xlu0 %v577
      %v579 = vpop.xlane.xlu0 %578
      %v580 = vsub.f32 %v572, %v579
      %v581 = vmul.f32 %v580, 1.442695
      %v582 = vpow.pop %v581
      %v583 = vsel %vm530, %v582, 0.0
      %584 = vadd.xlane.f32.xlu0 %v583
      %v585 = vpop.xlane.xlu0 %584
      %v586 = vrcp.pop %v585
      %v587 = vmul.f32 %v582, %v586
      %v588 = vpack.c.bf16 %v587, %v587
      %589 = vrot.lane.b32.xlu0 %v526, 64
      %v590 = vpop.permute.xlu0 %589
      %v592 = vsel %vm530, %v588, 0
      %vm594 = vcmask 1043456
      %v596 = vsel %vm594, %v590, 0
      %598 = vmatprep.subr.bf16.mxu0 0
      %599 = vmatpush1.bf16.msra.mxu0 %v596
      %600 = vmatprep.subr.bf16.mxu0 0
      %601 = vmatpush1.bf16.msra.mxu0 0
      %602 = vmatprep.subr.bf16.mxu0 0
      %603 = vmatpush1.bf16.msra.mxu0 0
      %604 = vmatprep.subr.bf16.mxu0 0
      %605 = vmatpush1.bf16.msra.mxu0 0
      %606 = vmatprep.subr.bf16.mxu0 0
      %607 = vmatpush1.bf16.msra.mxu0 0
      %608 = vmatprep.subr.bf16.mxu0 0
      %609 = vmatpush1.bf16.msra.mxu0 0
      %610 = vmatprep.subr.bf16.mxu0 0
      %611 = vmatpush1.bf16.msra.mxu0 0
      %612 = vmatprep.subr.bf16.mxu0 0
      %613 = vmatpush1.bf16.msra.mxu0 0
      %614 = vmatprep.subr.bf16.mxu0 0
      %615 = vmatpush1.bf16.msra.mxu0 0
      %616 = vmatprep.subr.bf16.mxu0 0
      %617 = vmatpush1.bf16.msra.mxu0 0
      %618 = vmatprep.subr.bf16.mxu0 0
      %619 = vmatpush1.bf16.msra.mxu0 0
      %620 = vmatprep.subr.bf16.mxu0 0
      %621 = vmatpush1.bf16.msra.mxu0 0
      %622 = vmatprep.subr.bf16.mxu0 0
      %623 = vmatpush1.bf16.msra.mxu0 0
      %624 = vmatprep.subr.bf16.mxu0 0
      %625 = vmatpush1.bf16.msra.mxu0 0
      %626 = vmatprep.subr.bf16.mxu0 0
      %627 = vmatpush1.bf16.msra.mxu0 0
      %628 = vmatprep.subr.bf16.mxu0 0
      %629 = vmatpush1.bf16.msra.mxu0 0
      %630 = vmatprep.mubr.bf16.mxu0 0
      %631 = vmatmul.mubr.bf16.gmra.mrb[0].mxu0 %v592
      %v632 = vpop.f32.mrb[0].mxu0
      %v633 = vadd.f32 0.0, %v632
      %v634 = vpop.f32.mrb[0].mxu0
      %v635 = vpop.f32.mrb[0].mxu0
      %v636 = vpop.f32.mrb[0].mxu0
      %637 = vdwg.mxu0
      %638 = vst.msk [vmem:[#allocation2] sm:$0xff] %vm530, %v633
      %639 = vrot.lane.b32.xlu0 %v526, 120
      %v640 = vpop.permute.xlu0 %639
      %641 = vrot.lane.b32.xlu0 %v526, 88
      %v642 = vpop.permute.xlu0 %641
      %v644 = vsel %vm530, %v640, 0
      %v647 = vsel %vm530, %v642, 0
      %649 = vmatprep.subr.bf16.mxu0 0
      %650 = vmatpush1.bf16.xpose.msra.mxu0 %v647
      %651 = vmatprep.subr.bf16.mxu0 0
      %652 = vmatpush1.bf16.xpose.msra.mxu0 0
      %653 = vmatprep.subr.bf16.mxu0 0
      %654 = vmatpush1.bf16.xpose.msra.mxu0 0
      %655 = vmatprep.subr.bf16.mxu0 0
      %656 = vmatpush1.bf16.xpose.msra.mxu0 0
      %657 = vmatprep.subr.bf16.mxu0 0
      %658 = vmatpush1.bf16.xpose.msra.mxu0 0
      %659 = vmatprep.subr.bf16.mxu0 0
      %660 = vmatpush1.bf16.xpose.msra.mxu0 0
      %661 = vmatprep.subr.bf16.mxu0 0
      %662 = vmatpush1.bf16.xpose.msra.mxu0 0
      %663 = vmatprep.subr.bf16.mxu0 0
      %664 = vmatpush1.bf16.xpose.msra.mxu0 0
      %665 = vmatprep.subr.bf16.mxu0 0
      %666 = vmatpush1.bf16.xpose.msra.mxu0 0
      %667 = vmatprep.subr.bf16.mxu0 0
      %668 = vmatpush1.bf16.xpose.msra.mxu0 0
      %669 = vmatprep.subr.bf16.mxu0 0
      %670 = vmatpush1.bf16.xpose.msra.mxu0 0
      %671 = vmatprep.subr.bf16.mxu0 0
      %672 = vmatpush1.bf16.xpose.msra.mxu0 0
      %673 = vmatprep.subr.bf16.mxu0 0
      %674 = vmatpush1.bf16.xpose.msra.mxu0 0
      %675 = vmatprep.subr.bf16.mxu0 0
      %676 = vmatpush1.bf16.xpose.msra.mxu0 0
      %677 = vmatprep.subr.bf16.mxu0 0
      %678 = vmatpush1.bf16.xpose.msra.mxu0 0
      %679 = vmatprep.subr.bf16.mxu0 0
      %680 = vmatpush1.bf16.xpose.msra.mxu0 0
      %681 = vmatprep.mubr.bf16.mxu0 0
      %682 = vmatmul.mubr.bf16.gmra.mrb[0].mxu0 %v644
      %v683 = vpop.f32.mrb[0].mxu0
      %v684 = vadd.f32 0.0, %v683
      %v685 = vpop.f32.mrb[0].mxu0
      %v686 = vpop.f32.mrb[0].mxu0
      %v687 = vpop.f32.mrb[0].mxu0
      %688 = vdwg.mxu0
      %v689 = vsel %vm530, %v684, -inf
      %690 = vmax.xlane.f32.xlu0 %v689
      %v691 = vpop.xlane.xlu0 %690
      %v692 = vsub.f32 %v684, %v691
      %v693 = vmul.f32 %v692, 1.442695
      %v694 = vpow.pop %v693
      %v695 = vsel %vm530, %v694, 0.0
      %696 = vadd.xlane.f32.xlu0 %v695
      %v697 = vpop.xlane.xlu0 %696
      %v698 = vrcp.pop %v697
      %v699 = vmul.f32 %v694, %v698
      %v700 = vpack.c.bf16 %v699, %v699
      %701 = vrot.lane.b32.xlu0 %v526, 56
      %v702 = vpop.permute.xlu0 %701
      %v704 = vsel %vm530, %v700, 0
      %v707 = vsel %vm594, %v702, 0
      %709 = vmatprep.subr.bf16.mxu0 0
      %710 = vmatpush1.bf16.msra.mxu0 %v707
      %711 = vmatprep.subr.bf16.mxu0 0
      %712 = vmatpush1.bf16.msra.mxu0 0
      %713 = vmatprep.subr.bf16.mxu0 0
      %714 = vmatpush1.bf16.msra.mxu0 0
      %715 = vmatprep.subr.bf16.mxu0 0
      %716 = vmatpush1.bf16.msra.mxu0 0
      %717 = vmatprep.subr.bf16.mxu0 0
      %718 = vmatpush1.bf16.msra.mxu0 0
      %719 = vmatprep.subr.bf16.mxu0 0
      %720 = vmatpush1.bf16.msra.mxu0 0
      %721 = vmatprep.subr.bf16.mxu0 0
      %722 = vmatpush1.bf16.msra.mxu0 0
      %723 = vmatprep.subr.bf16.mxu0 0
      %724 = vmatpush1.bf16.msra.mxu0 0
      %725 = vmatprep.subr.bf16.mxu0 0
      %726 = vmatpush1.bf16.msra.mxu0 0
      %727 = vmatprep.subr.bf16.mxu0 0
      %728 = vmatpush1.bf16.msra.mxu0 0
      %729 = vmatprep.subr.bf16.mxu0 0
      %730 = vmatpush1.bf16.msra.mxu0 0
      %731 = vmatprep.subr.bf16.mxu0 0
      %732 = vmatpush1.bf16.msra.mxu0 0
      %733 = vmatprep.subr.bf16.mxu0 0
      %734 = vmatpush1.bf16.msra.mxu0 0
      %735 = vmatprep.subr.bf16.mxu0 0
      %736 = vmatpush1.bf16.msra.mxu0 0
      %737 = vmatprep.subr.bf16.mxu0 0
      %738 = vmatpush1.bf16.msra.mxu0 0
      %739 = vmatprep.subr.bf16.mxu0 0
      %740 = vmatpush1.bf16.msra.mxu0 0
      %741 = vmatprep.mubr.bf16.mxu0 0
      %742 = vmatmul.mubr.bf16.gmra.mrb[0].mxu0 %v704
      %v743 = vpop.f32.mrb[0].mxu0
      %v744 = vadd.f32 0.0, %v743
      %v745 = vpop.f32.mrb[0].mxu0
      %v746 = vpop.f32.mrb[0].mxu0
      %v747 = vpop.f32.mrb[0].mxu0
      %748 = vdwg.mxu0
      %750 = vrot.lane.b32.xlu0 %v744, 8
      %v751 = vpop.permute.xlu0 %750
      %vm753 = vcmask 130112
      %754 = vst.msk [vmem:[#allocation2] sm:$0xff] %vm753, %v751
      %755 = vrot.lane.b32.xlu0 %v526, 112
      %v756 = vpop.permute.xlu0 %755
      %757 = vrot.lane.b32.xlu0 %v526, 80
      %v758 = vpop.permute.xlu0 %757
      %v760 = vsel %vm530, %v756, 0
      %v763 = vsel %vm530, %v758, 0
      %765 = vmatprep.subr.bf16.mxu0 0
      %766 = vmatpush1.bf16.xpose.msra.mxu0 %v763
      %767 = vmatprep.subr.bf16.mxu0 0
      %768 = vmatpush1.bf16.xpose.msra.mxu0 0
      %769 = vmatprep.subr.bf16.mxu0 0
      %770 = vmatpush1.bf16.xpose.msra.mxu0 0
      %771 = vmatprep.subr.bf16.mxu0 0
      %772 = vmatpush1.bf16.xpose.msra.mxu0 0
      %773 = vmatprep.subr.bf16.mxu0 0
      %774 = vmatpush1.bf16.xpose.msra.mxu0 0
      %775 = vmatprep.subr.bf16.mxu0 0
      %776 = vmatpush1.bf16.xpose.msra.mxu0 0
      %777 = vmatprep.subr.bf16.mxu0 0
      %778 = vmatpush1.bf16.xpose.msra.mxu0 0
      %779 = vmatprep.subr.bf16.mxu0 0
      %780 = vmatpush1.bf16.xpose.msra.mxu0 0
      %781 = vmatprep.subr.bf16.mxu0 0
      %782 = vmatpush1.bf16.xpose.msra.mxu0 0
      %783 = vmatprep.subr.bf16.mxu0 0
      %784 = vmatpush1.bf16.xpose.msra.mxu0 0
      %785 = vmatprep.subr.bf16.mxu0 0
      %786 = vmatpush1.bf16.xpose.msra.mxu0 0
      %787 = vmatprep.subr.bf16.mxu0 0
      %788 = vmatpush1.bf16.xpose.msra.mxu0 0
      %789 = vmatprep.subr.bf16.mxu0 0
      %790 = vmatpush1.bf16.xpose.msra.mxu0 0
      %791 = vmatprep.subr.bf16.mxu0 0
      %792 = vmatpush1.bf16.xpose.msra.mxu0 0
      %793 = vmatprep.subr.bf16.mxu0 0
      %794 = vmatpush1.bf16.xpose.msra.mxu0 0
      %795 = vmatprep.subr.bf16.mxu0 0
      %796 = vmatpush1.bf16.xpose.msra.mxu0 0
      %797 = vmatprep.mubr.bf16.mxu0 0
      %798 = vmatmul.mubr.bf16.gmra.mrb[0].mxu0 %v760
      %v799 = vpop.f32.mrb[0].mxu0
      %v800 = vadd.f32 0.0, %v799
      %v801 = vpop.f32.mrb[0].mxu0
      %v802 = vpop.f32.mrb[0].mxu0
      %v803 = vpop.f32.mrb[0].mxu0
      %804 = vdwg.mxu0
      %v805 = vsel %vm530, %v800, -inf
      %806 = vmax.xlane.f32.xlu0 %v805
      %v807 = vpop.xlane.xlu0 %806
      %v808 = vsub.f32 %v800, %v807
      %v809 = vmul.f32 %v808, 1.442695
      %v810 = vpow.pop %v809
      %v811 = vsel %vm530, %v810, 0.0
      %812 = vadd.xlane.f32.xlu0 %v811
      %v813 = vpop.xlane.xlu0 %812
      %v814 = vrcp.pop %v813
      %v815 = vmul.f32 %v810, %v814
      %v816 = vpack.c.bf16 %v815, %v815
      %817 = vrot.lane.b32.xlu0 %v526, 48
      %v818 = vpop.permute.xlu0 %817
      %v820 = vsel %vm530, %v816, 0
      %v823 = vsel %vm594, %v818, 0
      %825 = vmatprep.subr.bf16.mxu0 0
      %826 = vmatpush1.bf16.msra.mxu0 %v823
      %827 = vmatprep.subr.bf16.mxu0 0
      %828 = vmatpush1.bf16.msra.mxu0 0
      %829 = vmatprep.subr.bf16.mxu0 0
      %830 = vmatpush1.bf16.msra.mxu0 0
      %831 = vmatprep.subr.bf16.mxu0 0
      %832 = vmatpush1.bf16.msra.mxu0 0
      %833 = vmatprep.subr.bf16.mxu0 0
      %834 = vmatpush1.bf16.msra.mxu0 0
      %835 = vmatprep.subr.bf16.mxu0 0
      %836 = vmatpush1.bf16.msra.mxu0 0
      %837 = vmatprep.subr.bf16.mxu0 0
      %838 = vmatpush1.bf16.msra.mxu0 0
      %839 = vmatprep.subr.bf16.mxu0 0
      %840 = vmatpush1.bf16.msra.mxu0 0
      %841 = vmatprep.subr.bf16.mxu0 0
      %842 = vmatpush1.bf16.msra.mxu0 0
      %843 = vmatprep.subr.bf16.mxu0 0
      %844 = vmatpush1.bf16.msra.mxu0 0
      %845 = vmatprep.subr.bf16.mxu0 0
      %846 = vmatpush1.bf16.msra.mxu0 0
      %847 = vmatprep.subr.bf16.mxu0 0
      %848 = vmatpush1.bf16.msra.mxu0 0
      %849 = vmatprep.subr.bf16.mxu0 0
      %850 = vmatpush1.bf16.msra.mxu0 0
      %851 = vmatprep.subr.bf16.mxu0 0
      %852 = vmatpush1.bf16.msra.mxu0 0
      %853 = vmatprep.subr.bf16.mxu0 0
      %854 = vmatpush1.bf16.msra.mxu0 0
      %855 = vmatprep.subr.bf16.mxu0 0
      %856 = vmatpush1.bf16.msra.mxu0 0
      %857 = vmatprep.mubr.bf16.mxu0 0
      %858 = vmatmul.mubr.bf16.gmra.mrb[0].mxu0 %v820
      %v859 = vpop.f32.mrb[0].mxu0
      %v860 = vadd.f32 0.0, %v859
      %v861 = vpop.f32.mrb[0].mxu0
      %v862 = vpop.f32.mrb[0].mxu0
      %v863 = vpop.f32.mrb[0].mxu0
      %864 = vdwg.mxu0
      %866 = vrot.lane.b32.xlu0 %v860, 16
      %v867 = vpop.permute.xlu0 %866
      %vm869 = vcmask 195712
      %870 = vst.msk [vmem:[#allocation2] sm:$0xff] %vm869, %v867
      %871 = vrot.lane.b32.xlu0 %v526, 104
      %v872 = vpop.permute.xlu0 %871
      %873 = vrot.lane.b32.xlu0 %v526, 72
      %v874 = vpop.permute.xlu0 %873
      %v876 = vsel %vm530, %v872, 0
      %v879 = vsel %vm530, %v874, 0
      %881 = vmatprep.subr.bf16.mxu0 0
      %882 = vmatpush1.bf16.xpose.msra.mxu0 %v879
      %883 = vmatprep.subr.bf16.mxu0 0
      %884 = vmatpush1.bf16.xpose.msra.mxu0 0
      %885 = vmatprep.subr.bf16.mxu0 0
      %886 = vmatpush1.bf16.xpose.msra.mxu0 0
      %887 = vmatprep.subr.bf16.mxu0 0
      %888 = vmatpush1.bf16.xpose.msra.mxu0 0
      %889 = vmatprep.subr.bf16.mxu0 0
      %890 = vmatpush1.bf16.xpose.msra.mxu0 0
      %891 = vmatprep.subr.bf16.mxu0 0
      %892 = vmatpush1.bf16.xpose.msra.mxu0 0
      %893 = vmatprep.subr.bf16.mxu0 0
      %894 = vmatpush1.bf16.xpose.msra.mxu0 0
      %895 = vmatprep.subr.bf16.mxu0 0
      %896 = vmatpush1.bf16.xpose.msra.mxu0 0
      %897 = vmatprep.subr.bf16.mxu0 0
      %898 = vmatpush1.bf16.xpose.msra.mxu0 0
      %899 = vmatprep.subr.bf16.mxu0 0
      %900 = vmatpush1.bf16.xpose.msra.mxu0 0
      %901 = vmatprep.subr.bf16.mxu0 0
      %902 = vmatpush1.bf16.xpose.msra.mxu0 0
      %903 = vmatprep.subr.bf16.mxu0 0
      %904 = vmatpush1.bf16.xpose.msra.mxu0 0
      %905 = vmatprep.subr.bf16.mxu0 0
      %906 = vmatpush1.bf16.xpose.msra.mxu0 0
      %907 = vmatprep.subr.bf16.mxu0 0
      %908 = vmatpush1.bf16.xpose.msra.mxu0 0
      %909 = vmatprep.subr.bf16.mxu0 0
      %910 = vmatpush1.bf16.xpose.msra.mxu0 0
      %911 = vmatprep.subr.bf16.mxu0 0
      %912 = vmatpush1.bf16.xpose.msra.mxu0 0
      %913 = vmatprep.mubr.bf16.mxu0 0
      %914 = vmatmul.mubr.bf16.gmra.mrb[0].mxu0 %v876
      %v915 = vpop.f32.mrb[0].mxu0
      %v916 = vadd.f32 0.0, %v915
      %v917 = vpop.f32.mrb[0].mxu0
      %v918 = vpop.f32.mrb[0].mxu0
      %v919 = vpop.f32.mrb[0].mxu0
      %920 = vdwg.mxu0
      %v921 = vsel %vm530, %v916, -inf
      %922 = vmax.xlane.f32.xlu0 %v921
      %v923 = vpop.xlane.xlu0 %922
      %v924 = vsub.f32 %v916, %v923
      %v925 = vmul.f32 %v924, 1.442695
      %v926 = vpow.pop %v925
      %v927 = vsel %vm530, %v926, 0.0
      %928 = vadd.xlane.f32.xlu0 %v927
      %v929 = vpop.xlane.xlu0 %928
      %v930 = vrcp.pop %v929
      %v931 = vmul.f32 %v926, %v930
      %v932 = vpack.c.bf16 %v931, %v931
      %933 = vrot.lane.b32.xlu0 %v526, 40
      %v934 = vpop.permute.xlu0 %933
      %v936 = vsel %vm530, %v932, 0
      %v939 = vsel %vm594, %v934, 0
      %941 = vmatprep.subr.bf16.mxu0 0
      %942 = vmatpush1.bf16.msra.mxu0 %v939
      %943 = vmatprep.subr.bf16.mxu0 0
      %944 = vmatpush1.bf16.msra.mxu0 0
      %945 = vmatprep.subr.bf16.mxu0 0
      %946 = vmatpush1.bf16.msra.mxu0 0
      %947 = vmatprep.subr.bf16.mxu0 0
      %948 = vmatpush1.bf16.msra.mxu0 0
      %949 = vmatprep.subr.bf16.mxu0 0
      %950 = vmatpush1.bf16.msra.mxu0 0
      %951 = vmatprep.subr.bf16.mxu0 0
      %952 = vmatpush1.bf16.msra.mxu0 0
      %953 = vmatprep.subr.bf16.mxu0 0
      %954 = vmatpush1.bf16.msra.mxu0 0
      %955 = vmatprep.subr.bf16.mxu0 0
      %956 = vmatpush1.bf16.msra.mxu0 0
      %957 = vmatprep.subr.bf16.mxu0 0
      %958 = vmatpush1.bf16.msra.mxu0 0
      %959 = vmatprep.subr.bf16.mxu0 0
      %960 = vmatpush1.bf16.msra.mxu0 0
      %961 = vmatprep.subr.bf16.mxu0 0
      %962 = vmatpush1.bf16.msra.mxu0 0
      %963 = vmatprep.subr.bf16.mxu0 0
      %964 = vmatpush1.bf16.msra.mxu0 0
      %965 = vmatprep.subr.bf16.mxu0 0
      %966 = vmatpush1.bf16.msra.mxu0 0
      %967 = vmatprep.subr.bf16.mxu0 0
      %968 = vmatpush1.bf16.msra.mxu0 0
      %969 = vmatprep.subr.bf16.mxu0 0
      %970 = vmatpush1.bf16.msra.mxu0 0
      %971 = vmatprep.subr.bf16.mxu0 0
      %972 = vmatpush1.bf16.msra.mxu0 0
      %973 = vmatprep.mubr.bf16.mxu0 0
      %974 = vmatmul.mubr.bf16.gmra.mrb[0].mxu0 %v936
      %v975 = vpop.f32.mrb[0].mxu0
      %v976 = vadd.f32 0.0, %v975
      %v977 = vpop.f32.mrb[0].mxu0
      %v978 = vpop.f32.mrb[0].mxu0
      %v979 = vpop.f32.mrb[0].mxu0
      %980 = vdwg.mxu0
      %982 = vrot.lane.b32.xlu0 %v976, 24
      %v983 = vpop.permute.xlu0 %982
      %vm985 = vcmask 261312
      %986 = vst.msk [vmem:[#allocation2] sm:$0xff] %vm985, %v983
      %v987 = vld [vmem:[#allocation2] sm:$0xff]
      %v988 = vpack.c.bf16 %v987, %v987
      %v989 = vld [vmem:[%s4] sm:$0xf]
      %v990 = vld [vmem:[%s4 + $0x4] sm:$0xf]
      %v991 = vld [vmem:[%s4 + $0x8] sm:$0xf]
      %v992 = vld [vmem:[%s4 + $0xc] sm:$0xf]
      %v993 = vlaneseq
      %v994 = vshrl.u32 %v993, 7
      %v995 = vsub.s32 0, %v994
      %v996 = vrot.slane %v457, %v995
      %v1001 = vunpack.c.l.b16 %v989
      %v1002 = vunpack.c.l.b16 %v990
      %v1003 = vunpack.c.l.b16 %v991
      %v1004 = vunpack.c.l.b16 %v992
      %v1005 = vpack.c.b16 %v1002, %v1001
      %v1006 = vpack.c.b16 %v1004, %v1003
      %v1010 = vsel %vm482, %v988, 0
      %1012 = vmatprep.subr.bf16.mxu0 0
      %1013 = vmatpush1.bf16.msra.mxu0 %v1005
      %1014 = vmatprep.subr.bf16.mxu0 0
      %1015 = vmatpush1.bf16.msra.mxu0 %v1006
      %1016 = vmatprep.subr.bf16.mxu0 0
      %1017 = vmatpush1.bf16.msra.mxu0 0
      %1018 = vmatprep.subr.bf16.mxu0 0
      %1019 = vmatpush1.bf16.msra.mxu0 0
      %1020 = vmatprep.subr.bf16.mxu0 0
      %1021 = vmatpush1.bf16.msra.mxu0 0
      %1022 = vmatprep.subr.bf16.mxu0 0
      %1023 = vmatpush1.bf16.msra.mxu0 0
      %1024 = vmatprep.subr.bf16.mxu0 0
      %1025 = vmatpush1.bf16.msra.mxu0 0
      %1026 = vmatprep.subr.bf16.mxu0 0
      %1027 = vmatpush1.bf16.msra.mxu0 0
      %1028 = vmatprep.subr.bf16.mxu0 0
      %1029 = vmatpush1.bf16.msra.mxu0 0
      %1030 = vmatprep.subr.bf16.mxu0 0
      %1031 = vmatpush1.bf16.msra.mxu0 0
      %1032 = vmatprep.subr.bf16.mxu0 0
      %1033 = vmatpush1.bf16.msra.mxu0 0
      %1034 = vmatprep.subr.bf16.mxu0 0
      %1035 = vmatpush1.bf16.msra.mxu0 0
      %1036 = vmatprep.subr.bf16.mxu0 0
      %1037 = vmatpush1.bf16.msra.mxu0 0
      %1038 = vmatprep.subr.bf16.mxu0 0
      %1039 = vmatpush1.bf16.msra.mxu0 0
      %1040 = vmatprep.subr.bf16.mxu0 0
      %1041 = vmatpush1.bf16.msra.mxu0 0
      %1042 = vmatprep.subr.bf16.mxu0 0
      %1043 = vmatpush1.bf16.msra.mxu0 0
      %1044 = vmatprep.mubr.bf16.mxu0 0
      %1045 = vmatmul.mubr.bf16.gmra.mrb[0].mxu0 %v1010
      %v1046 = vpop.f32.mrb[0].mxu0
      %v1047 = vadd.f32 %v996, %v1046
      %v1048 = vpop.f32.mrb[0].mxu0
      %v1049 = vpop.f32.mrb[0].mxu0
      %v1050 = vpop.f32.mrb[0].mxu0
      %1051 = vdwg.mxu0
      %v1052 = vadd.f32 %v455, %v1047
      %v1053 = vsel %vm482, %v1052, 0.0
      %1054 = vadd.xlane.f32.xlu0 %v1053
      %v1055 = vpop.xlane.xlu0 %1054
      %v1056 = vrcp.pop 32.0
      %v1057 = vmul.f32 %v1055, %v1056
      %v1058 = vsub.f32 %v1052, %v1057
      %v1059 = vmul.f32 %v1058, %v1058
      %v1060 = vsel %vm482, %v1059, 0.0
      %1061 = vadd.xlane.f32.xlu0 %v1060
      %v1062 = vpop.xlane.xlu0 %1061
      %v1063 = vmul.f32 %v1062, %v1056
      %v1064 = vadd.f32 %v1063, 1e-05
      %v1065 = vrsqrt.pop %v1064
      %v1066 = vmul.f32 %v1058, %v1065
      %v1067 = vlaneseq
      %v1068 = vshrl.u32 %v1067, 7
      %v1069 = vsub.s32 1, %v1068
      %v1070 = vrot.slane %v457, %v1069
      %v1071 = vmul.f32 %v1066, %v1070
      %v1072 = vlaneseq
      %v1073 = vshrl.u32 %v1072, 7
      %v1074 = vsub.s32 2, %v1073
      %v1075 = vrot.slane %v457, %v1074
      %v1076 = vadd.f32 %v1071, %v1075
      %v1077 = vpack.c.bf16 %v1076, %v1076
      %v1078 = vld [vmem:[%s5] sm:$0xf]
      %v1079 = vld [vmem:[%s5 + $0x4] sm:$0xf]
      %v1080 = vld [vmem:[%s5 + $0x8] sm:$0xf]
      %v1081 = vld [vmem:[%s5 + $0xc] sm:$0xf]
      %v1082 = vlaneseq
      %v1083 = vshrl.u32 %v1082, 7
      %v1084 = vsub.s32 3, %v1083
      %v1085 = vrot.slane %v457, %v1084
      %v1090 = vunpack.c.l.b16 %v1078
      %v1091 = vunpack.c.l.b16 %v1079
      %v1092 = vunpack.c.l.b16 %v1080
      %v1093 = vunpack.c.l.b16 %v1081
      %v1094 = vpack.c.b16 %v1091, %v1090
      %v1095 = vpack.c.b16 %v1093, %v1092
      %v1099 = vsel %vm482, %v1077, 0
      %1101 = vmatprep.subr.bf16.mxu0 0
      %1102 = vmatpush1.bf16.msra.mxu0 %v1094
      %1103 = vmatprep.subr.bf16.mxu0 0
      %1104 = vmatpush1.bf16.msra.mxu0 %v1095
      %1105 = vmatprep.subr.bf16.mxu0 0
      %1106 = vmatpush1.bf16.msra.mxu0 0
      %1107 = vmatprep.subr.bf16.mxu0 0
      %1108 = vmatpush1.bf16.msra.mxu0 0
      %1109 = vmatprep.subr.bf16.mxu0 0
      %1110 = vmatpush1.bf16.msra.mxu0 0
      %1111 = vmatprep.subr.bf16.mxu0 0
      %1112 = vmatpush1.bf16.msra.mxu0 0
      %1113 = vmatprep.subr.bf16.mxu0 0
      %1114 = vmatpush1.bf16.msra.mxu0 0
      %1115 = vmatprep.subr.bf16.mxu0 0
      %1116 = vmatpush1.bf16.msra.mxu0 0
      %1117 = vmatprep.subr.bf16.mxu0 0
      %1118 = vmatpush1.bf16.msra.mxu0 0
      %1119 = vmatprep.subr.bf16.mxu0 0
      %1120 = vmatpush1.bf16.msra.mxu0 0
      %1121 = vmatprep.subr.bf16.mxu0 0
      %1122 = vmatpush1.bf16.msra.mxu0 0
      %1123 = vmatprep.subr.bf16.mxu0 0
      %1124 = vmatpush1.bf16.msra.mxu0 0
      %1125 = vmatprep.subr.bf16.mxu0 0
      %1126 = vmatpush1.bf16.msra.mxu0 0
      %1127 = vmatprep.subr.bf16.mxu0 0
      %1128 = vmatpush1.bf16.msra.mxu0 0
      %1129 = vmatprep.subr.bf16.mxu0 0
      %1130 = vmatpush1.bf16.msra.mxu0 0
      %1131 = vmatprep.subr.bf16.mxu0 0
      %1132 = vmatpush1.bf16.msra.mxu0 0
      %1133 = vmatprep.mubr.bf16.mxu0 0
      %1134 = vmatmul.mubr.bf16.gmra.mrb[0].mxu0 %v1099
      %v1135 = vpop.f32.mrb[0].mxu0
      %v1136 = vadd.f32 %v1085, %v1135
      %v1137 = vpop.f32.mrb[0].mxu0
      %v1138 = vpop.f32.mrb[0].mxu0
      %v1139 = vpop.f32.mrb[0].mxu0
      %1140 = vdwg.mxu0
      %v1141 = vld [vmem:[%s6] sm:$0xf]
      %v1142 = vld [vmem:[%s6 + $0x4] sm:$0xf]
      %v1143 = vld [vmem:[%s6 + $0x8] sm:$0xf]
      %v1144 = vld [vmem:[%s6 + $0xc] sm:$0xf]
      %v1145 = vld [vmem:[%s7] sm:$0x1]
      %v1147 = vlaneseq
      %v1148 = vshrl.u32 %v1147, 7
      %v1149 = vsub.s32 0, %v1148
      %v1150 = vrot.slane %v1145, %v1149
      %v1156 = vunpack.c.l.b16 %v1141
      %v1157 = vunpack.c.l.b16 %v1142
      %v1158 = vunpack.c.l.b16 %v1143
      %v1159 = vunpack.c.l.b16 %v1144
      %v1160 = vpack.c.b16 %v1157, %v1156
      %v1161 = vpack.c.b16 %v1159, %v1158
      %v1165 = vsel %vm482, %v456, 0
      %1167 = vmatprep.subr.bf16.mxu0 0
      %1168 = vmatpush1.bf16.msra.mxu0 %v1160
      %1169 = vmatprep.subr.bf16.mxu0 0
      %1170 = vmatpush1.bf16.msra.mxu0 %v1161
      %1171 = vmatprep.subr.bf16.mxu0 0
      %1172 = vmatpush1.bf16.msra.mxu0 0
      %1173 = vmatprep.subr.bf16.mxu0 0
      %1174 = vmatpush1.bf16.msra.mxu0 0
      %1175 = vmatprep.subr.bf16.mxu0 0
      %1176 = vmatpush1.bf16.msra.mxu0 0
      %1177 = vmatprep.subr.bf16.mxu0 0
      %1178 = vmatpush1.bf16.msra.mxu0 0
      %1179 = vmatprep.subr.bf16.mxu0 0
      %1180 = vmatpush1.bf16.msra.mxu0 0
      %1181 = vmatprep.subr.bf16.mxu0 0
      %1182 = vmatpush1.bf16.msra.mxu0 0
      %1183 = vmatprep.subr.bf16.mxu0 0
      %1184 = vmatpush1.bf16.msra.mxu0 0
      %1185 = vmatprep.subr.bf16.mxu0 0
      %1186 = vmatpush1.bf16.msra.mxu0 0
      %1187 = vmatprep.subr.bf16.mxu0 0
      %1188 = vmatpush1.bf16.msra.mxu0 0
      %1189 = vmatprep.subr.bf16.mxu0 0
      %1190 = vmatpush1.bf16.msra.mxu0 0
      %1191 = vmatprep.subr.bf16.mxu0 0
      %1192 = vmatpush1.bf16.msra.mxu0 0
      %1193 = vmatprep.subr.bf16.mxu0 0
      %1194 = vmatpush1.bf16.msra.mxu0 0
      %1195 = vmatprep.subr.bf16.mxu0 0
      %1196 = vmatpush1.bf16.msra.mxu0 0
      %1197 = vmatprep.subr.bf16.mxu0 0
      %1198 = vmatpush1.bf16.msra.mxu0 0
      %1199 = vmatprep.mubr.bf16.mxu0 0
      %1200 = vmatmul.mubr.bf16.gmra.mrb[0].mxu0 %v1165
      %v1201 = vpop.f32.mrb[0].mxu0
      %v1202 = vadd.f32 %v1150, %v1201
      %v1203 = vpop.f32.mrb[0].mxu0
      %v1204 = vpop.f32.mrb[0].mxu0
      %v1205 = vpop.f32.mrb[0].mxu0
      %1206 = vdwg.mxu0
      %v1207 = vpack.c.bf16 %v1136, %v1136
      %v1208 = vpack.c.bf16 %v1202, %v1202
      %v1210 = vsel %vm530, %v1207, 0
      %v1213 = vsel %vm530, %v1208, 0
      %1215 = vmatprep.subr.bf16.mxu0 0
      %1216 = vmatpush1.bf16.xpose.msra.mxu0 %v1213
      %1217 = vmatprep.subr.bf16.mxu0 0
      %1218 = vmatpush1.bf16.xpose.msra.mxu0 0
      %1219 = vmatprep.subr.bf16.mxu0 0
      %1220 = vmatpush1.bf16.xpose.msra.mxu0 0
      %1221 = vmatprep.subr.bf16.mxu0 0
      %1222 = vmatpush1.bf16.xpose.msra.mxu0 0
      %1223 = vmatprep.subr.bf16.mxu0 0
      %1224 = vmatpush1.bf16.xpose.msra.mxu0 0
      %1225 = vmatprep.subr.bf16.mxu0 0
      %1226 = vmatpush1.bf16.xpose.msra.mxu0 0
      %1227 = vmatprep.subr.bf16.mxu0 0
      %1228 = vmatpush1.bf16.xpose.msra.mxu0 0
      %1229 = vmatprep.subr.bf16.mxu0 0
      %1230 = vmatpush1.bf16.xpose.msra.mxu0 0
      %1231 = vmatprep.subr.bf16.mxu0 0
      %1232 = vmatpush1.bf16.xpose.msra.mxu0 0
      %1233 = vmatprep.subr.bf16.mxu0 0
      %1234 = vmatpush1.bf16.xpose.msra.mxu0 0
      %1235 = vmatprep.subr.bf16.mxu0 0
      %1236 = vmatpush1.bf16.xpose.msra.mxu0 0
      %1237 = vmatprep.subr.bf16.mxu0 0
      %1238 = vmatpush1.bf16.xpose.msra.mxu0 0
      %1239 = vmatprep.subr.bf16.mxu0 0
      %1240 = vmatpush1.bf16.xpose.msra.mxu0 0
      %1241 = vmatprep.subr.bf16.mxu0 0
      %1242 = vmatpush1.bf16.xpose.msra.mxu0 0
      %1243 = vmatprep.subr.bf16.mxu0 0
      %1244 = vmatpush1.bf16.xpose.msra.mxu0 0
      %1245 = vmatprep.subr.bf16.mxu0 0
      %1246 = vmatpush1.bf16.xpose.msra.mxu0 0
      %1247 = vmatprep.mubr.bf16.mxu0 0
      %1248 = vmatmul.mubr.bf16.gmra.mrb[0].mxu0 %v1210
      %v1249 = vpop.f32.mrb[0].mxu0
      %v1250 = vadd.f32 0.0, %v1249
      %v1251 = vpop.f32.mrb[0].mxu0
      %v1252 = vpop.f32.mrb[0].mxu0
      %v1253 = vpop.f32.mrb[0].mxu0
      %1254 = vdwg.mxu0
      %v1255 = vsel %vm530, %v1250, -inf
      %1256 = vmax.xlane.f32.xlu0 %v1255
      %v1257 = vpop.xlane.xlu0 %1256
      %v1258 = vsub.f32 %v1250, %v1257
      %v1259 = vmul.f32 %v1258, 1.442695
      %v1260 = vpow.pop %v1259
      %v1261 = vsel %vm530, %v1260, 0.0
      %1262 = vadd.xlane.f32.xlu0 %v1261
      %v1263 = vpop.xlane.xlu0 %1262
      %v1264 = vrcp.pop %v1263
      %v1265 = vmul.f32 %v1260, %v1264
      %v1266 = vpack.c.bf16 %v1265, %v1265
      %1268 = vrot.lane.b32.xlu0 %v1208, 96
      %v1269 = vpop.permute.xlu0 %1268
      %v1271 = vsel %vm530, %v1266, 0
      %v1274 = vsel %vm594, %v1269, 0
      %1276 = vmatprep.subr.bf16.mxu0 0
      %1277 = vmatpush1.bf16.msra.mxu0 %v1274
      %1278 = vmatprep.subr.bf16.mxu0 0
      %1279 = vmatpush1.bf16.msra.mxu0 0
      %1280 = vmatprep.subr.bf16.mxu0 0
      %1281 = vmatpush1.bf16.msra.mxu0 0
      %1282 = vmatprep.subr.bf16.mxu0 0
      %1283 = vmatpush1.bf16.msra.mxu0 0
      %1284 = vmatprep.subr.bf16.mxu0 0
      %1285 = vmatpush1.bf16.msra.mxu0 0
      %1286 = vmatprep.subr.bf16.mxu0 0
      %1287 = vmatpush1.bf16.msra.mxu0 0
      %1288 = vmatprep.subr.bf16.mxu0 0
      %1289 = vmatpush1.bf16.msra.mxu0 0
      %1290 = vmatprep.subr.bf16.mxu0 0
      %1291 = vmatpush1.bf16.msra.mxu0 0
      %1292 = vmatprep.subr.bf16.mxu0 0
      %1293 = vmatpush1.bf16.msra.mxu0 0
      %1294 = vmatprep.subr.bf16.mxu0 0
      %1295 = vmatpush1.bf16.msra.mxu0 0
      %1296 = vmatprep.subr.bf16.mxu0 0
      %1297 = vmatpush1.bf16.msra.mxu0 0
      %1298 = vmatprep.subr.bf16.mxu0 0
      %1299 = vmatpush1.bf16.msra.mxu0 0
      %1300 = vmatprep.subr.bf16.mxu0 0
      %1301 = vmatpush1.bf16.msra.mxu0 0
      %1302 = vmatprep.subr.bf16.mxu0 0
      %1303 = vmatpush1.bf16.msra.mxu0 0
      %1304 = vmatprep.subr.bf16.mxu0 0
      %1305 = vmatpush1.bf16.msra.mxu0 0
      %1306 = vmatprep.subr.bf16.mxu0 0
      %1307 = vmatpush1.bf16.msra.mxu0 0
      %1308 = vmatprep.mubr.bf16.mxu0 0
      %1309 = vmatmul.mubr.bf16.gmra.mrb[0].mxu0 %v1271
      %v1310 = vpop.f32.mrb[0].mxu0
      %v1311 = vadd.f32 0.0, %v1310
      %v1312 = vpop.f32.mrb[0].mxu0
      %v1313 = vpop.f32.mrb[0].mxu0
      %v1314 = vpop.f32.mrb[0].mxu0
      %1315 = vdwg.mxu0
      %1316 = vst.msk [vmem:[#allocation2] sm:$0xff] %vm530, %v1311
      %1318 = vrot.lane.b32.xlu0 %v1207, 120
      %v1319 = vpop.permute.xlu0 %1318
      %1320 = vrot.lane.b32.xlu0 %v1208, 120
      %v1321 = vpop.permute.xlu0 %1320
      %v1323 = vsel %vm530, %v1319, 0
      %v1326 = vsel %vm530, %v1321, 0
      %1328 = vmatprep.subr.bf16.mxu0 0
      %1329 = vmatpush1.bf16.xpose.msra.mxu0 %v1326
      %1330 = vmatprep.subr.bf16.mxu0 0
      %1331 = vmatpush1.bf16.xpose.msra.mxu0 0
      %1332 = vmatprep.subr.bf16.mxu0 0
      %1333 = vmatpush1.bf16.xpose.msra.mxu0 0
      %1334 = vmatprep.subr.bf16.mxu0 0
      %1335 = vmatpush1.bf16.xpose.msra.mxu0 0
      %1336 = vmatprep.subr.bf16.mxu0 0
      %1337 = vmatpush1.bf16.xpose.msra.mxu0 0
      %1338 = vmatprep.subr.bf16.mxu0 0
      %1339 = vmatpush1.bf16.xpose.msra.mxu0 0
      %1340 = vmatprep.subr.bf16.mxu0 0
      %1341 = vmatpush1.bf16.xpose.msra.mxu0 0
      %1342 = vmatprep.subr.bf16.mxu0 0
      %1343 = vmatpush1.bf16.xpose.msra.mxu0 0
      %1344 = vmatprep.subr.bf16.mxu0 0
      %1345 = vmatpush1.bf16.xpose.msra.mxu0 0
      %1346 = vmatprep.subr.bf16.mxu0 0
      %1347 = vmatpush1.bf16.xpose.msra.mxu0 0
      %1348 = vmatprep.subr.bf16.mxu0 0
      %1349 = vmatpush1.bf16.xpose.msra.mxu0 0
      %1350 = vmatprep.subr.bf16.mxu0 0
      %1351 = vmatpush1.bf16.xpose.msra.mxu0 0
      %1352 = vmatprep.subr.bf16.mxu0 0
      %1353 = vmatpush1.bf16.xpose.msra.mxu0 0
      %1354 = vmatprep.subr.bf16.mxu0 0
      %1355 = vmatpush1.bf16.xpose.msra.mxu0 0
      %1356 = vmatprep.subr.bf16.mxu0 0
      %1357 = vmatpush1.bf16.xpose.msra.mxu0 0
      %1358 = vmatprep.subr.bf16.mxu0 0
      %1359 = vmatpush1.bf16.xpose.msra.mxu0 0
      %1360 = vmatprep.mubr.bf16.mxu0 0
      %1361 = vmatmul.mubr.bf16.gmra.mrb[0].mxu0 %v1323
      %v1362 = vpop.f32.mrb[0].mxu0
      %v1363 = vadd.f32 0.0, %v1362
      %v1364 = vpop.f32.mrb[0].mxu0
      %v1365 = vpop.f32.mrb[0].mxu0
      %v1366 = vpop.f32.mrb[0].mxu0
      %1367 = vdwg.mxu0
      %v1368 = vsel %vm530, %v1363, -inf
      %1369 = vmax.xlane.f32.xlu0 %v1368
      %v1370 = vpop.xlane.xlu0 %1369
      %v1371 = vsub.f32 %v1363, %v1370
      %v1372 = vmul.f32 %v1371, 1.442695
      %v1373 = vpow.pop %v1372
      %v1374 = vsel %vm530, %v1373, 0.0
      %1375 = vadd.xlane.f32.xlu0 %v1374
      %v1376 = vpop.xlane.xlu0 %1375
      %v1377 = vrcp.pop %v1376
      %v1378 = vmul.f32 %v1373, %v1377
      %v1379 = vpack.c.bf16 %v1378, %v1378
      %1380 = vrot.lane.b32.xlu0 %v1208, 88
      %v1381 = vpop.permute.xlu0 %1380
      %v1383 = vsel %vm530, %v1379, 0
      %v1386 = vsel %vm594, %v1381, 0
      %1388 = vmatprep.subr.bf16.mxu0 0
      %1389 = vmatpush1.bf16.msra.mxu0 %v1386
      %1390 = vmatprep.subr.bf16.mxu0 0
      %1391 = vmatpush1.bf16.msra.mxu0 0
      %1392 = vmatprep.subr.bf16.mxu0 0
      %1393 = vmatpush1.bf16.msra.mxu0 0
      %1394 = vmatprep.subr.bf16.mxu0 0
      %1395 = vmatpush1.bf16.msra.mxu0 0
      %1396 = vmatprep.subr.bf16.mxu0 0
      %1397 = vmatpush1.bf16.msra.mxu0 0
      %1398 = vmatprep.subr.bf16.mxu0 0
      %1399 = vmatpush1.bf16.msra.mxu0 0
      %1400 = vmatprep.subr.bf16.mxu0 0
      %1401 = vmatpush1.bf16.msra.mxu0 0
      %1402 = vmatprep.subr.bf16.mxu0 0
      %1403 = vmatpush1.bf16.msra.mxu0 0
      %1404 = vmatprep.subr.bf16.mxu0 0
      %1405 = vmatpush1.bf16.msra.mxu0 0
      %1406 = vmatprep.subr.bf16.mxu0 0
      %1407 = vmatpush1.bf16.msra.mxu0 0
      %1408 = vmatprep.subr.bf16.mxu0 0
      %1409 = vmatpush1.bf16.msra.mxu0 0
      %1410 = vmatprep.subr.bf16.mxu0 0
      %1411 = vmatpush1.bf16.msra.mxu0 0
      %1412 = vmatprep.subr.bf16.mxu0 0
      %1413 = vmatpush1.bf16.msra.mxu0 0
      %1414 = vmatprep.subr.bf16.mxu0 0
      %1415 = vmatpush1.bf16.msra.mxu0 0
      %1416 = vmatprep.subr.bf16.mxu0 0
      %1417 = vmatpush1.bf16.msra.mxu0 0
      %1418 = vmatprep.subr.bf16.mxu0 0
      %1419 = vmatpush1.bf16.msra.mxu0 0
      %1420 = vmatprep.mubr.bf16.mxu0 0
      %1421 = vmatmul.mubr.bf16.gmra.mrb[0].mxu0 %v1383
      %v1422 = vpop.f32.mrb[0].mxu0
      %v1423 = vadd.f32 0.0, %v1422
      %v1424 = vpop.f32.mrb[0].mxu0
      %v1425 = vpop.f32.mrb[0].mxu0
      %v1426 = vpop.f32.mrb[0].mxu0
      %1427 = vdwg.mxu0
      %1429 = vrot.lane.b32.xlu0 %v1423, 8
      %v1430 = vpop.permute.xlu0 %1429
      %1432 = vst.msk [vmem:[#allocation2] sm:$0xff] %vm753, %v1430
      %1433 = vrot.lane.b32.xlu0 %v1207, 112
      %v1434 = vpop.permute.xlu0 %1433
      %1435 = vrot.lane.b32.xlu0 %v1208, 112
      %v1436 = vpop.permute.xlu0 %1435
      %v1438 = vsel %vm530, %v1434, 0
      %v1441 = vsel %vm530, %v1436, 0
      %1443 = vmatprep.subr.bf16.mxu0 0
      %1444 = vmatpush1.bf16.xpose.msra.mxu0 %v1441
      %1445 = vmatprep.subr.bf16.mxu0 0
      %1446 = vmatpush1.bf16.xpose.msra.mxu0 0
      %1447 = vmatprep.subr.bf16.mxu0 0
      %1448 = vmatpush1.bf16.xpose.msra.mxu0 0
      %1449 = vmatprep.subr.bf16.mxu0 0
      %1450 = vmatpush1.bf16.xpose.msra.mxu0 0
      %1451 = vmatprep.subr.bf16.mxu0 0
      %1452 = vmatpush1.bf16.xpose.msra.mxu0 0
      %1453 = vmatprep.subr.bf16.mxu0 0
      %1454 = vmatpush1.bf16.xpose.msra.mxu0 0
      %1455 = vmatprep.subr.bf16.mxu0 0
      %1456 = vmatpush1.bf16.xpose.msra.mxu0 0
      %1457 = vmatprep.subr.bf16.mxu0 0
      %1458 = vmatpush1.bf16.xpose.msra.mxu0 0
      %1459 = vmatprep.subr.bf16.mxu0 0
      %1460 = vmatpush1.bf16.xpose.msra.mxu0 0
      %1461 = vmatprep.subr.bf16.mxu0 0
      %1462 = vmatpush1.bf16.xpose.msra.mxu0 0
      %1463 = vmatprep.subr.bf16.mxu0 0
      %1464 = vmatpush1.bf16.xpose.msra.mxu0 0
      %1465 = vmatprep.subr.bf16.mxu0 0
      %1466 = vmatpush1.bf16.xpose.msra.mxu0 0
      %1467 = vmatprep.subr.bf16.mxu0 0
      %1468 = vmatpush1.bf16.xpose.msra.mxu0 0
      %1469 = vmatprep.subr.bf16.mxu0 0
      %1470 = vmatpush1.bf16.xpose.msra.mxu0 0
      %1471 = vmatprep.subr.bf16.mxu0 0
      %1472 = vmatpush1.bf16.xpose.msra.mxu0 0
      %1473 = vmatprep.subr.bf16.mxu0 0
      %1474 = vmatpush1.bf16.xpose.msra.mxu0 0
      %1475 = vmatprep.mubr.bf16.mxu0 0
      %1476 = vmatmul.mubr.bf16.gmra.mrb[0].mxu0 %v1438
      %v1477 = vpop.f32.mrb[0].mxu0
      %v1478 = vadd.f32 0.0, %v1477
      %v1479 = vpop.f32.mrb[0].mxu0
      %v1480 = vpop.f32.mrb[0].mxu0
      %v1481 = vpop.f32.mrb[0].mxu0
      %1482 = vdwg.mxu0
      %v1483 = vsel %vm530, %v1478, -inf
      %1484 = vmax.xlane.f32.xlu0 %v1483
      %v1485 = vpop.xlane.xlu0 %1484
      %v1486 = vsub.f32 %v1478, %v1485
      %v1487 = vmul.f32 %v1486, 1.442695
      %v1488 = vpow.pop %v1487
      %v1489 = vsel %vm530, %v1488, 0.0
      %1490 = vadd.xlane.f32.xlu0 %v1489
      %v1491 = vpop.xlane.xlu0 %1490
      %v1492 = vrcp.pop %v1491
      %v1493 = vmul.f32 %v1488, %v1492
      %v1494 = vpack.c.bf16 %v1493, %v1493
      %1495 = vrot.lane.b32.xlu0 %v1208, 80
      %v1496 = vpop.permute.xlu0 %1495
      %v1498 = vsel %vm530, %v1494, 0
      %v1501 = vsel %vm594, %v1496, 0
      %1503 = vmatprep.subr.bf16.mxu0 0
      %1504 = vmatpush1.bf16.msra.mxu0 %v1501
      %1505 = vmatprep.subr.bf16.mxu0 0
      %1506 = vmatpush1.bf16.msra.mxu0 0
      %1507 = vmatprep.subr.bf16.mxu0 0
      %1508 = vmatpush1.bf16.msra.mxu0 0
      %1509 = vmatprep.subr.bf16.mxu0 0
      %1510 = vmatpush1.bf16.msra.mxu0 0
      %1511 = vmatprep.subr.bf16.mxu0 0
      %1512 = vmatpush1.bf16.msra.mxu0 0
      %1513 = vmatprep.subr.bf16.mxu0 0
      %1514 = vmatpush1.bf16.msra.mxu0 0
      %1515 = vmatprep.subr.bf16.mxu0 0
      %1516 = vmatpush1.bf16.msra.mxu0 0
      %1517 = vmatprep.subr.bf16.mxu0 0
      %1518 = vmatpush1.bf16.msra.mxu0 0
      %1519 = vmatprep.subr.bf16.mxu0 0
      %1520 = vmatpush1.bf16.msra.mxu0 0
      %1521 = vmatprep.subr.bf16.mxu0 0
      %1522 = vmatpush1.bf16.msra.mxu0 0
      %1523 = vmatprep.subr.bf16.mxu0 0
      %1524 = vmatpush1.bf16.msra.mxu0 0
      %1525 = vmatprep.subr.bf16.mxu0 0
      %1526 = vmatpush1.bf16.msra.mxu0 0
      %1527 = vmatprep.subr.bf16.mxu0 0
      %1528 = vmatpush1.bf16.msra.mxu0 0
      %1529 = vmatprep.subr.bf16.mxu0 0
      %1530 = vmatpush1.bf16.msra.mxu0 0
      %1531 = vmatprep.subr.bf16.mxu0 0
      %1532 = vmatpush1.bf16.msra.mxu0 0
      %1533 = vmatprep.subr.bf16.mxu0 0
      %1534 = vmatpush1.bf16.msra.mxu0 0
      %1535 = vmatprep.mubr.bf16.mxu0 0
      %1536 = vmatmul.mubr.bf16.gmra.mrb[0].mxu0 %v1498
      %v1537 = vpop.f32.mrb[0].mxu0
      %v1538 = vadd.f32 0.0, %v1537
      %v1539 = vpop.f32.mrb[0].mxu0
      %v1540 = vpop.f32.mrb[0].mxu0
      %v1541 = vpop.f32.mrb[0].mxu0
      %1542 = vdwg.mxu0
      %1544 = vrot.lane.b32.xlu0 %v1538, 16
      %v1545 = vpop.permute.xlu0 %1544
      %1547 = vst.msk [vmem:[#allocation2] sm:$0xff] %vm869, %v1545
      %1548 = vrot.lane.b32.xlu0 %v1207, 104
      %v1549 = vpop.permute.xlu0 %1548
      %1550 = vrot.lane.b32.xlu0 %v1208, 104
      %v1551 = vpop.permute.xlu0 %1550
      %v1553 = vsel %vm530, %v1549, 0
      %v1556 = vsel %vm530, %v1551, 0
      %1558 = vmatprep.subr.bf16.mxu0 0
      %1559 = vmatpush1.bf16.xpose.msra.mxu0 %v1556
      %1560 = vmatprep.subr.bf16.mxu0 0
      %1561 = vmatpush1.bf16.xpose.msra.mxu0 0
      %1562 = vmatprep.subr.bf16.mxu0 0
      %1563 = vmatpush1.bf16.xpose.msra.mxu0 0
      %1564 = vmatprep.subr.bf16.mxu0 0
      %1565 = vmatpush1.bf16.xpose.msra.mxu0 0
      %1566 = vmatprep.subr.bf16.mxu0 0
      %1567 = vmatpush1.bf16.xpose.msra.mxu0 0
      %1568 = vmatprep.subr.bf16.mxu0 0
      %1569 = vmatpush1.bf16.xpose.msra.mxu0 0
      %1570 = vmatprep.subr.bf16.mxu0 0
      %1571 = vmatpush1.bf16.xpose.msra.mxu0 0
      %1572 = vmatprep.subr.bf16.mxu0 0
      %1573 = vmatpush1.bf16.xpose.msra.mxu0 0
      %1574 = vmatprep.subr.bf16.mxu0 0
      %1575 = vmatpush1.bf16.xpose.msra.mxu0 0
      %1576 = vmatprep.subr.bf16.mxu0 0
      %1577 = vmatpush1.bf16.xpose.msra.mxu0 0
      %1578 = vmatprep.subr.bf16.mxu0 0
      %1579 = vmatpush1.bf16.xpose.msra.mxu0 0
      %1580 = vmatprep.subr.bf16.mxu0 0
      %1581 = vmatpush1.bf16.xpose.msra.mxu0 0
      %1582 = vmatprep.subr.bf16.mxu0 0
      %1583 = vmatpush1.bf16.xpose.msra.mxu0 0
      %1584 = vmatprep.subr.bf16.mxu0 0
      %1585 = vmatpush1.bf16.xpose.msra.mxu0 0
      %1586 = vmatprep.subr.bf16.mxu0 0
      %1587 = vmatpush1.bf16.xpose.msra.mxu0 0
      %1588 = vmatprep.subr.bf16.mxu0 0
      %1589 = vmatpush1.bf16.xpose.msra.mxu0 0
      %1590 = vmatprep.mubr.bf16.mxu0 0
      %1591 = vmatmul.mubr.bf16.gmra.mrb[0].mxu0 %v1553
      %v1592 = vpop.f32.mrb[0].mxu0
      %v1593 = vadd.f32 0.0, %v1592
      %v1594 = vpop.f32.mrb[0].mxu0
      %v1595 = vpop.f32.mrb[0].mxu0
      %v1596 = vpop.f32.mrb[0].mxu0
      %1597 = vdwg.mxu0
      %v1598 = vsel %vm530, %v1593, -inf
      %1599 = vmax.xlane.f32.xlu0 %v1598
      %v1600 = vpop.xlane.xlu0 %1599
      %v1601 = vsub.f32 %v1593, %v1600
      %v1602 = vmul.f32 %v1601, 1.442695
      %v1603 = vpow.pop %v1602
      %v1604 = vsel %vm530, %v1603, 0.0
      %1605 = vadd.xlane.f32.xlu0 %v1604
      %v1606 = vpop.xlane.xlu0 %1605
      %v1607 = vrcp.pop %v1606
      %v1608 = vmul.f32 %v1603, %v1607
      %v1609 = vpack.c.bf16 %v1608, %v1608
      %1610 = vrot.lane.b32.xlu0 %v1208, 72
      %v1611 = vpop.permute.xlu0 %1610
      %v1613 = vsel %vm530, %v1609, 0
      %v1616 = vsel %vm594, %v1611, 0
      %1618 = vmatprep.subr.bf16.mxu0 0
      %1619 = vmatpush1.bf16.msra.mxu0 %v1616
      %1620 = vmatprep.subr.bf16.mxu0 0
      %1621 = vmatpush1.bf16.msra.mxu0 0
      %1622 = vmatprep.subr.bf16.mxu0 0
      %1623 = vmatpush1.bf16.msra.mxu0 0
      %1624 = vmatprep.subr.bf16.mxu0 0
      %1625 = vmatpush1.bf16.msra.mxu0 0
      %1626 = vmatprep.subr.bf16.mxu0 0
      %1627 = vmatpush1.bf16.msra.mxu0 0
      %1628 = vmatprep.subr.bf16.mxu0 0
      %1629 = vmatpush1.bf16.msra.mxu0 0
      %1630 = vmatprep.subr.bf16.mxu0 0
      %1631 = vmatpush1.bf16.msra.mxu0 0
      %1632 = vmatprep.subr.bf16.mxu0 0
      %1633 = vmatpush1.bf16.msra.mxu0 0
      %1634 = vmatprep.subr.bf16.mxu0 0
      %1635 = vmatpush1.bf16.msra.mxu0 0
      %1636 = vmatprep.subr.bf16.mxu0 0
      %1637 = vmatpush1.bf16.msra.mxu0 0
      %1638 = vmatprep.subr.bf16.mxu0 0
      %1639 = vmatpush1.bf16.msra.mxu0 0
      %1640 = vmatprep.subr.bf16.mxu0 0
      %1641 = vmatpush1.bf16.msra.mxu0 0
      %1642 = vmatprep.subr.bf16.mxu0 0
      %1643 = vmatpush1.bf16.msra.mxu0 0
      %1644 = vmatprep.subr.bf16.mxu0 0
      %1645 = vmatpush1.bf16.msra.mxu0 0
      %1646 = vmatprep.subr.bf16.mxu0 0
      %1647 = vmatpush1.bf16.msra.mxu0 0
      %1648 = vmatprep.subr.bf16.mxu0 0
      %1649 = vmatpush1.bf16.msra.mxu0 0
      %1650 = vmatprep.mubr.bf16.mxu0 0
      %1651 = vmatmul.mubr.bf16.gmra.mrb[0].mxu0 %v1613
      %v1652 = vpop.f32.mrb[0].mxu0
      %v1653 = vadd.f32 0.0, %v1652
      %v1654 = vpop.f32.mrb[0].mxu0
      %v1655 = vpop.f32.mrb[0].mxu0
      %v1656 = vpop.f32.mrb[0].mxu0
      %1657 = vdwg.mxu0
      %1659 = vrot.lane.b32.xlu0 %v1653, 24
      %v1660 = vpop.permute.xlu0 %1659
      %1662 = vst.msk [vmem:[#allocation2] sm:$0xff] %vm985, %v1660
      %v1663 = vld [vmem:[#allocation2] sm:$0xff]
      %v1664 = vpack.c.bf16 %v1663, %v1663
      %v1665 = vld [vmem:[%s8] sm:$0xf]
      %v1666 = vld [vmem:[%s8 + $0x4] sm:$0xf]
      %v1667 = vld [vmem:[%s8 + $0x8] sm:$0xf]
      %v1668 = vld [vmem:[%s8 + $0xc] sm:$0xf]
      %v1669 = vlaneseq
      %v1670 = vshrl.u32 %v1669, 7
      %v1671 = vsub.s32 4, %v1670
      %v1672 = vrot.slane %v457, %v1671
      %v1677 = vunpack.c.l.b16 %v1665
      %v1678 = vunpack.c.l.b16 %v1666
      %v1679 = vunpack.c.l.b16 %v1667
      %v1680 = vunpack.c.l.b16 %v1668
      %v1681 = vpack.c.b16 %v1678, %v1677
      %v1682 = vpack.c.b16 %v1680, %v1679
      %v1686 = vsel %vm482, %v1664, 0
      %1688 = vmatprep.subr.bf16.mxu0 0
      %1689 = vmatpush1.bf16.msra.mxu0 %v1681
      %1690 = vmatprep.subr.bf16.mxu0 0
      %1691 = vmatpush1.bf16.msra.mxu0 %v1682
      %1692 = vmatprep.subr.bf16.mxu0 0
      %1693 = vmatpush1.bf16.msra.mxu0 0
      %1694 = vmatprep.subr.bf16.mxu0 0
      %1695 = vmatpush1.bf16.msra.mxu0 0
      %1696 = vmatprep.subr.bf16.mxu0 0
      %1697 = vmatpush1.bf16.msra.mxu0 0
      %1698 = vmatprep.subr.bf16.mxu0 0
      %1699 = vmatpush1.bf16.msra.mxu0 0
      %1700 = vmatprep.subr.bf16.mxu0 0
      %1701 = vmatpush1.bf16.msra.mxu0 0
      %1702 = vmatprep.subr.bf16.mxu0 0
      %1703 = vmatpush1.bf16.msra.mxu0 0
      %1704 = vmatprep.subr.bf16.mxu0 0
      %1705 = vmatpush1.bf16.msra.mxu0 0
      %1706 = vmatprep.subr.bf16.mxu0 0
      %1707 = vmatpush1.bf16.msra.mxu0 0
      %1708 = vmatprep.subr.bf16.mxu0 0
      %1709 = vmatpush1.bf16.msra.mxu0 0
      %1710 = vmatprep.subr.bf16.mxu0 0
      %1711 = vmatpush1.bf16.msra.mxu0 0
      %1712 = vmatprep.subr.bf16.mxu0 0
      %1713 = vmatpush1.bf16.msra.mxu0 0
      %1714 = vmatprep.subr.bf16.mxu0 0
      %1715 = vmatpush1.bf16.msra.mxu0 0
      %1716 = vmatprep.subr.bf16.mxu0 0
      %1717 = vmatpush1.bf16.msra.mxu0 0
      %1718 = vmatprep.subr.bf16.mxu0 0
      %1719 = vmatpush1.bf16.msra.mxu0 0
      %1720 = vmatprep.mubr.bf16.mxu0 0
      %1721 = vmatmul.mubr.bf16.gmra.mrb[0].mxu0 %v1686
      %v1722 = vpop.f32.mrb[0].mxu0
      %v1723 = vadd.f32 %v1672, %v1722
      %v1724 = vpop.f32.mrb[0].mxu0
      %v1725 = vpop.f32.mrb[0].mxu0
      %v1726 = vpop.f32.mrb[0].mxu0
      %1727 = vdwg.mxu0
      %v1728 = vadd.f32 %v1076, %v1723
      %v1729 = vsel %vm482, %v1728, 0.0
      %1730 = vadd.xlane.f32.xlu0 %v1729
      %v1731 = vpop.xlane.xlu0 %1730
      %v1732 = vmul.f32 %v1731, %v1056
      %v1733 = vsub.f32 %v1728, %v1732
      %v1734 = vmul.f32 %v1733, %v1733
      %v1735 = vsel %vm482, %v1734, 0.0
      %1736 = vadd.xlane.f32.xlu0 %v1735
      %v1737 = vpop.xlane.xlu0 %1736
      %v1738 = vmul.f32 %v1737, %v1056
      %v1739 = vadd.f32 %v1738, 1e-05
      %v1740 = vrsqrt.pop %v1739
      %v1741 = vmul.f32 %v1733, %v1740
      %v1742 = vlaneseq
      %v1743 = vshrl.u32 %v1742, 7
      %v1744 = vsub.s32 5, %v1743
      %v1745 = vrot.slane %v457, %v1744
      %v1746 = vmul.f32 %v1741, %v1745
      %v1747 = vlaneseq
      %v1748 = vshrl.u32 %v1747, 7
      %v1749 = vsub.s32 6, %v1748
      %v1750 = vrot.slane %v457, %v1749
      %v1751 = vadd.f32 %v1746, %v1750
      %v1752 = vpack.c.bf16 %v1751, %v1751
      %v1753 = vld [vmem:[%s9] sm:$0xf]
      %v1754 = vld [vmem:[%s9 + $0x4] sm:$0xf]
      %v1755 = vld [vmem:[%s9 + $0x8] sm:$0xf]
      %v1756 = vld [vmem:[%s9 + $0xc] sm:$0xf]
      %v1757 = vld [vmem:[%s10] sm:$0x1]
      %v1759 = vlaneseq
      %v1760 = vshrl.u32 %v1759, 7
      %v1761 = vsub.s32 0, %v1760
      %v1762 = vrot.slane %v1757, %v1761
      %v1768 = vunpack.c.l.b16 %v1753
      %v1769 = vunpack.c.l.b16 %v1754
      %v1770 = vunpack.c.l.b16 %v1755
      %v1771 = vunpack.c.l.b16 %v1756
      %v1772 = vpack.c.b16 %v1769, %v1768
      %v1773 = vpack.c.b16 %v1771, %v1770
      %v1777 = vsel %vm482, %v1752, 0
      %1779 = vmatprep.subr.bf16.mxu0 0
      %1780 = vmatpush1.bf16.msra.mxu0 %v1772
      %1781 = vmatprep.subr.bf16.mxu0 0
      %1782 = vmatpush1.bf16.msra.mxu0 %v1773
      %1783 = vmatprep.subr.bf16.mxu0 0
      %1784 = vmatpush1.bf16.msra.mxu0 0
      %1785 = vmatprep.subr.bf16.mxu0 0
      %1786 = vmatpush1.bf16.msra.mxu0 0
      %1787 = vmatprep.subr.bf16.mxu0 0
      %1788 = vmatpush1.bf16.msra.mxu0 0
      %1789 = vmatprep.subr.bf16.mxu0 0
      %1790 = vmatpush1.bf16.msra.mxu0 0
      %1791 = vmatprep.subr.bf16.mxu0 0
      %1792 = vmatpush1.bf16.msra.mxu0 0
      %1793 = vmatprep.subr.bf16.mxu0 0
      %1794 = vmatpush1.bf16.msra.mxu0 0
      %1795 = vmatprep.subr.bf16.mxu0 0
      %1796 = vmatpush1.bf16.msra.mxu0 0
      %1797 = vmatprep.subr.bf16.mxu0 0
      %1798 = vmatpush1.bf16.msra.mxu0 0
      %1799 = vmatprep.subr.bf16.mxu0 0
      %1800 = vmatpush1.bf16.msra.mxu0 0
      %1801 = vmatprep.subr.bf16.mxu0 0
      %1802 = vmatpush1.bf16.msra.mxu0 0
      %1803 = vmatprep.subr.bf16.mxu0 0
      %1804 = vmatpush1.bf16.msra.mxu0 0
      %1805 = vmatprep.subr.bf16.mxu0 0
      %1806 = vmatpush1.bf16.msra.mxu0 0
      %1807 = vmatprep.subr.bf16.mxu0 0
      %1808 = vmatpush1.bf16.msra.mxu0 0
      %1809 = vmatprep.subr.bf16.mxu0 0
      %1810 = vmatpush1.bf16.msra.mxu0 0
      %1811 = vmatprep.mubr.bf16.mxu0 0
      %1812 = vmatmul.mubr.bf16.gmra.mrb[0].mxu0 %v1777
      %v1813 = vpop.f32.mrb[0].mxu0
      %v1814 = vadd.f32 %v1762, %v1813
      %v1815 = vpop.f32.mrb[0].mxu0
      %v1816 = vpop.f32.mrb[0].mxu0
      %v1817 = vpop.f32.mrb[0].mxu0
      %1818 = vdwg.mxu0
      %v1819 = vmax.f32 %v1814, 0.0
      %v1820 = vpack.c.bf16 %v1819, %v1819
      %v1821 = vld [vmem:[%s11] sm:$0xf]
      %v1822 = vld [vmem:[%s11 + $0x4] sm:$0xf]
      %v1823 = vld [vmem:[%s11 + $0x8] sm:$0xf]
      %v1824 = vld [vmem:[%s11 + $0xc] sm:$0xf]
      %v1825 = vld [vmem:[%s11 + $0x10] sm:$0xf]
      %v1826 = vld [vmem:[%s11 + $0x14] sm:$0xf]
      %v1827 = vld [vmem:[%s11 + $0x18] sm:$0xf]
      %v1828 = vld [vmem:[%s11 + $0x1c] sm:$0xf]
      %v1829 = vlaneseq
      %v1830 = vshrl.u32 %v1829, 7
      %v1831 = vsub.s32 7, %v1830
      %v1832 = vrot.slane %v457, %v1831
      %v1841 = vunpack.c.l.b16 %v1821
      %v1842 = vunpack.c.l.b16 %v1822
      %v1843 = vunpack.c.l.b16 %v1823
      %v1844 = vunpack.c.l.b16 %v1824
      %v1845 = vunpack.c.l.b16 %v1825
      %v1846 = vunpack.c.l.b16 %v1826
      %v1847 = vunpack.c.l.b16 %v1827
      %v1848 = vunpack.c.l.b16 %v1828
      %v1849 = vpack.c.b16 %v1842, %v1841
      %v1850 = vpack.c.b16 %v1844, %v1843
      %v1851 = vpack.c.b16 %v1846, %v1845
      %v1852 = vpack.c.b16 %v1848, %v1847
      %vm1857 = vcmask 523264
      %v1859 = vsel %vm1857, %v1820, 0
      %1861 = vmatprep.subr.bf16.mxu0 0
      %1862 = vmatpush1.bf16.msra.mxu0 %v1849
      %1863 = vmatprep.subr.bf16.mxu0 0
      %1864 = vmatpush1.bf16.msra.mxu0 %v1850
      %1865 = vmatprep.subr.bf16.mxu0 0
      %1866 = vmatpush1.bf16.msra.mxu0 %v1851
      %1867 = vmatprep.subr.bf16.mxu0 0
      %1868 = vmatpush1.bf16.msra.mxu0 %v1852
      %1869 = vmatprep.subr.bf16.mxu0 0
      %1870 = vmatpush1.bf16.msra.mxu0 0
      %1871 = vmatprep.subr.bf16.mxu0 0
      %1872 = vmatpush1.bf16.msra.mxu0 0
      %1873 = vmatprep.subr.bf16.mxu0 0
      %1874 = vmatpush1.bf16.msra.mxu0 0
      %1875 = vmatprep.subr.bf16.mxu0 0
      %1876 = vmatpush1.bf16.msra.mxu0 0
      %1877 = vmatprep.subr.bf16.mxu0 0
      %1878 = vmatpush1.bf16.msra.mxu0 0
      %1879 = vmatprep.subr.bf16.mxu0 0
      %1880 = vmatpush1.bf16.msra.mxu0 0
      %1881 = vmatprep.subr.bf16.mxu0 0
      %1882 = vmatpush1.bf16.msra.mxu0 0
      %1883 = vmatprep.subr.bf16.mxu0 0
      %1884 = vmatpush1.bf16.msra.mxu0 0
      %1885 = vmatprep.subr.bf16.mxu0 0
      %1886 = vmatpush1.bf16.msra.mxu0 0
      %1887 = vmatprep.subr.bf16.mxu0 0
      %1888 = vmatpush1.bf16.msra.mxu0 0
      %1889 = vmatprep.subr.bf16.mxu0 0
      %1890 = vmatpush1.bf16.msra.mxu0 0
      %1891 = vmatprep.subr.bf16.mxu0 0
      %1892 = vmatpush1.bf16.msra.mxu0 0
      %1893 = vmatprep.mubr.bf16.mxu0 0
      %1894 = vmatmul.mubr.bf16.gmra.mrb[0].mxu0 %v1859
      %v1895 = vpop.f32.mrb[0].mxu0
      %v1896 = vadd.f32 %v1832, %v1895
      %v1897 = vpop.f32.mrb[0].mxu0
      %v1898 = vpop.f32.mrb[0].mxu0
      %v1899 = vpop.f32.mrb[0].mxu0
      %1900 = vdwg.mxu0
      %v1901 = vadd.f32 %v1751, %v1896
      %v1902 = vsel %vm482, %v1901, 0.0
      %1903 = vadd.xlane.f32.xlu0 %v1902
      %v1904 = vpop.xlane.xlu0 %1903
      %v1905 = vmul.f32 %v1904, %v1056
      %v1906 = vsub.f32 %v1901, %v1905
      %v1907 = vmul.f32 %v1906, %v1906
      %v1908 = vsel %vm482, %v1907, 0.0
      %1909 = vadd.xlane.f32.xlu0 %v1908
      %v1910 = vpop.xlane.xlu0 %1909
      %v1911 = vmul.f32 %v1910, %v1056
      %v1912 = vadd.f32 %v1911, 1e-05
      %v1913 = vrsqrt.pop %v1912
      %v1914 = vmul.f32 %v1906, %v1913
      %v1915 = vlaneseq
      %v1916 = vshrl.u32 %v1915, 7
      %v1917 = vsub.s32 0, %v1916
      %v1918 = vrot.slane %v458, %v1917
      %v1919 = vmul.f32 %v1914, %v1918
      %v1920 = vlaneseq
      %v1921 = vshrl.u32 %v1920, 7
      %v1922 = vsub.s32 1, %v1921
      %v1923 = vrot.slane %v458, %v1922
      %v1924 = vadd.f32 %v1919, %v1923
      %v1925 = vpack.c.bf16 %v1924, %v1924
      %vm1926 = vcmask 257024
      %1927 = vst.msk [vmem:[%s452] sm:$0xf] %vm1926, %v1925
      %p1928 = scmp.lt.s32.totalorder %s24, 1
      %s1929 = scalar_select %p1928, %s24, 1
      %s1930 = smul.addr %s1929, 4
      %s1931 = scalar_lea.vmem %s13, %s1930
      // Predicated region
      $region73: #{top_former_forward.7} parent=71 // pred_check
        %p1932 = pneg %p325
      $region74: #{top_former_forward.7} parent=71 // pred_check_branch
        %1934 = sbr.rel (%p1932) target = $region76
      $region75: #{top_former_forward.7} parent=71 // pred_region
        _
      $region76: #{top_former_forward.7} parent=71 // pred_fallthru
        _
    $region72: #{top_former_forward.7} parent=5 // pred_fallthru
      _
    %p1935 = scmp.le.s32.totalorder 2, %s19
    // Predicated region
    $region77: #{top_former_forward.7} parent=5 // pred_check
      %p1936 = pneg %p1935
    $region78: #{top_former_forward.7} parent=5 // pred_check_branch
      %1938 = sbr.rel (%p1936) target = $region80
    $region79: #{top_former_forward.7} parent=5 // pred_region
      %s1939 = ssub.s32 %s19, 2
      // Predicated region
      $region81: #{top_former_forward.7} parent=79 // pred_check
        %p1940 = pneg %p331
      $region82: #{top_former_forward.7} parent=79 // pred_check_branch
        %1942 = sbr.rel (%p1940) target = $region84
      $region83: #{top_former_forward.7} parent=79 // pred_region
        %p1943 = scmp.lt.s32.totalorder %s25, 1
        %s1944 = scalar_select %p1943, %s25, 1
        %s1945 = smul.addr %s1944, 4
        %s1946 = scalar_lea.vmem %s13, %s1945
      $region84: #{top_former_forward.7} parent=79 // pred_fallthru
        _
    $region80: #{top_former_forward.7} parent=5 // pred_fallthru
      _
  $region6: #{top_former_forward.7} parent=0 // loop_footer
    %s23 = sadd.s32 1, %s19
  $region7: #{top_former_forward.7} parent=0 // loop_footer_branch
    %18 = sbr.rel target = $region3
  $region8: #{top_former_forward.7} parent=0 // loop_exit
    _

</llo_original>
